<compile_context>
chip_gen: v7x
topology: tpu7x:2x2x1
jax: 0.10.0
libtpu: 0.0.40
codegen_flags: <defaults>
</compile_context>

<pallas_src>
import jax
import jax.numpy as jnp
from jax import lax
from jax.experimental import pallas as pl
from jax.experimental.pallas import tpu as pltpu


def _round_up(x, m):
    return ((x + m - 1) // m) * m


def _default_tile_rows():
    # 128-wide MXU generations (<= v5) -> 128-row tiles; 256-wide (v6e / v7x) -> 256.
    try:
        kind = jax.devices()[0].device_kind.lower()
    except Exception:
        return 128
    return 128 if any(v in kind for v in ("v2", "v3", "v4", "v5")) else 256


def esm_embed_kernel(ids_ref, pos_ref, mask_ref, table_ref, out_ref):
    # ids_ref  : (TM, 1) int32  token ids           (rows [0, V)     of table)
    # pos_ref  : (TM, 1) int32  V + position index  (rows [V, V + P) of table)
    # mask_ref : (TM, 1) f32    attention mask per row
    # table_ref: (Kp, D) f32    concat([wte, wpe], axis=0), zero-padded to Kp rows
    # out_ref  : (TM, D) f32
    tm = out_ref.shape[0]
    kp = table_ref.shape[0]

    ids = ids_ref[...]                                  # (TM, 1)
    pos = pos_ref[...]                                  # (TM, 1)

    col = lax.broadcasted_iota(jnp.int32, (tm, kp), 1)  # (TM, Kp)
    # "Two-hot" row selecting both the token row and the position row; the
    # attention mask is folded in so:
    #   weights @ table == mask * (wte[id] + wpe[pos])
    two_hot = jnp.logical_or(col == ids, col == pos)
    weights = two_hot.astype(table_ref.dtype) * mask_ref[...]

    out_ref[...] = jnp.dot(
        weights, table_ref[...], preferred_element_type=jnp.float32
    ).astype(out_ref.dtype)


def esm_embeddings(ids, wte, wpe, attention_mask=None, *, tile_rows=None):
    """Pallas equivalent of ESMEmbeddings.forward(x, attention_mask)."""
    B, T = ids.shape
    V, D = wte.shape
    P = wpe.shape[0]  # block_size
    if T > P:
        raise ValueError(f"sequence length {T} exceeds block_size {P}")
    dtype = wte.dtype
    if attention_mask is None:
        attention_mask = jnp.ones((B, T), dtype=dtype)
    if tile_rows is None:
        tile_rows = _default_tile_rows()

    rows = B * T
    TM = min(tile_rows, _round_up(rows, 8))
    n_tiles = pl.cdiv(rows, TM)
    rows_pad = n_tiles * TM

    # Combined gather table: rows [0, V) = word embeddings,
    # rows [V, V+P) = position embeddings; rows padded to an MXU-friendly 256x.
    Kp = _round_up(V + P, 256)
    table = jnp.concatenate([wte, wpe.astype(dtype)], axis=0)
    table = jnp.pad(table, ((0, Kp - (V + P)), (0, 0)))

    # Layout plumbing (done once per call, outside the kernel).
    ids_flat = ids.astype(jnp.int32).reshape(rows)
    pos_flat = V + jnp.tile(jnp.arange(T, dtype=jnp.int32), B)
    mask_flat = attention_mask.astype(dtype).reshape(rows)

    pad = rows_pad - rows
    ids_flat = jnp.pad(ids_flat, (0, pad))                     # padding: any valid id
    pos_flat = jnp.pad(pos_flat, (0, pad), constant_values=V)  # padding: valid row
    mask_flat = jnp.pad(mask_flat, (0, pad))                   # padded rows discarded

    def call(single_buffer_table):
        if single_buffer_table:
            # Constant block index across the grid -> single-buffered resident.
            table_spec = pl.BlockSpec((Kp, D), lambda i: (0, 0),
                                      pipeline_mode=pl.Buffered(1))
        else:
            table_spec = pl.BlockSpec((Kp, D), lambda i: (0, 0))
        return pl.pallas_call(
            esm_embed_kernel,
            out_shape=jax.ShapeDtypeStruct((rows_pad, D), dtype),
            grid=(n_tiles,),
            in_specs=[
                pl.BlockSpec((TM, 1), lambda i: (i, 0)),   # ids
                pl.BlockSpec((TM, 1), lambda i: (i, 0)),   # pos (offset by V)
                pl.BlockSpec((TM, 1), lambda i: (i, 0)),   # mask
                table_spec,                                # combined wte|wpe table
            ],
            out_specs=pl.BlockSpec((TM, D), lambda i: (i, 0)),
            compiler_params=pltpu.CompilerParams(
                dimension_semantics=("parallel",),
                vmem_limit_bytes=32 * 1024 * 1024,
            ),
        )(ids_flat[:, None], pos_flat[:, None], mask_flat[:, None], table)

    try:
        out = call(single_buffer_table=True)
    except Exception:
        # pipeline_mode not honored on this jax/backend combo; the constant
        # index_map still avoids re-DMA, only the table VMEM footprint doubles.
        out = call(single_buffer_table=False)

    return out[:rows].reshape(B, T, D)


if __name__ == "__main__":
    # Shapes consistent with the module: vocab_size = PFGPT_VOCAB_SIZE = 384,
    # block_size = 128, n_embd = 128; batch = 4, seq = 128.
    VOCAB_SIZE = 384
    BLOCK_SIZE = 128
    N_EMBD = 128
    B, T = 4, 128

    key = jax.random.PRNGKey(0)
    k_wte, k_wpe, k_ids, k_mask = jax.random.split(key, 4)

    # Deterministic parameter init (nn.Embedding-style gaussian weights).
    wte = (0.02 * jax.random.normal(k_wte, (VOCAB_SIZE, N_EMBD))).astype(jnp.float32)
    wpe = (0.02 * jax.random.normal(k_wpe, (BLOCK_SIZE, N_EMBD))).astype(jnp.float32)

    ids = jax.random.randint(k_ids, (B, T), 0, VOCAB_SIZE, dtype=jnp.int32)
    attention_mask = jax.random.bernoulli(k_mask, 0.8, (B, T)).astype(jnp.float32)

    out = esm_embeddings(ids, wte, wpe, attention_mask)
    out = jax.block_until_ready(out)

    # Pure-JAX reference of the torch forward.
    ref = wte[ids] + wpe[:T][None, :, :]
    ref = ref * attention_mask[:, :, None]

    assert out.shape == (B, T, N_EMBD)
    assert jnp.allclose(out, ref, rtol=1e-5, atol=1e-5), "mismatch vs reference"

    print("KERNEL_OK")
</pallas_src>

<mosaic_0001>
module attributes {stable_mosaic.version = 11 : i64} {
  func.func @esm_embed_kernel(%arg0: i32, %arg1: memref<256x1xi32, #tpu.memory_space<vmem>>, %arg2: memref<256x1xi32, #tpu.memory_space<vmem>>, %arg3: memref<256x1xf32, #tpu.memory_space<vmem>>, %arg4: memref<512x128xf32, #tpu.memory_space<vmem>>, %arg5: memref<256x128xf32, #tpu.memory_space<vmem>>) attributes {dimension_semantics = [#tpu.dimension_semantics<parallel>], iteration_bounds = array<i64: 2>, scalar_prefetch = 0 : i64, scratch_operands = 0 : i64, tpu.core_type = #tpu.core_type<tc>, window_params = [{transform_indices = @transform_0, window_bounds = array<i64: 256, 1>}, {transform_indices = @transform_1, window_bounds = array<i64: 256, 1>}, {transform_indices = @transform_2, window_bounds = array<i64: 256, 1>}, {pipeline_mode = #tpu.pipeline_mode<synchronous>, transform_indices = @transform_3, window_bounds = array<i64: 512, 128>}, {transform_indices = @transform_4, window_bounds = array<i64: 256, 128>}]} {
    %c0 = arith.constant 0 : index
    %c0_0 = arith.constant 0 : index
    %0 = vector.load %arg1[%c0, %c0_0] : memref<256x1xi32, #tpu.memory_space<vmem>>, vector<256x1xi32>
    %c0_1 = arith.constant 0 : index
    %c0_2 = arith.constant 0 : index
    %1 = vector.load %arg2[%c0_1, %c0_2] : memref<256x1xi32, #tpu.memory_space<vmem>>, vector<256x1xi32>
    %2 = tpu.iota {dimensions = array<i32: 1>} : vector<256x512xi32>
    %3 = vector.broadcast %0 : vector<256x1xi32> to vector<256x512xi32>
    %4 = arith.cmpi eq, %2, %3 : vector<256x512xi32>
    %5 = vector.broadcast %1 : vector<256x1xi32> to vector<256x512xi32>
    %6 = arith.cmpi eq, %2, %5 : vector<256x512xi32>
    %7 = arith.ori %4, %6 : vector<256x512xi1>
    %8 = arith.extui %7 : vector<256x512xi1> to vector<256x512xi32>
    %9 = arith.sitofp %8 : vector<256x512xi32> to vector<256x512xf32>
    %c0_3 = arith.constant 0 : index
    %c0_4 = arith.constant 0 : index
    %10 = vector.load %arg3[%c0_3, %c0_4] : memref<256x1xf32, #tpu.memory_space<vmem>>, vector<256x1xf32>
    %11 = vector.broadcast %10 : vector<256x1xf32> to vector<256x512xf32>
    %12 = arith.mulf %9, %11 : vector<256x512xf32>
    %c0_5 = arith.constant 0 : index
    %c0_6 = arith.constant 0 : index
    %13 = vector.load %arg4[%c0_5, %c0_6] : memref<512x128xf32, #tpu.memory_space<vmem>>, vector<512x128xf32>
    %cst = arith.constant dense<0.000000e+00> : vector<256x128xf32>
    %14 = tpu.matmul %12, %13, %cst {dimension_numbers = #tpu.dot_dimension_numbers<[1], [0], [0], [1], [0, 0, 1, 1], [], []>} : vector<256x512xf32>, vector<512x128xf32>, vector<256x128xf32> -> vector<256x128xf32>
    %c0_7 = arith.constant 0 : index
    %c0_8 = arith.constant 0 : index
    %15 = vector.load %arg5[%c0_7, %c0_8] : memref<256x128xf32, #tpu.memory_space<vmem>>, vector<256x128xf32>
    tpu.vector_store %arg5[%c0_7, %c0_8], %14 {strides = array<i32>} : memref<256x128xf32, #tpu.memory_space<vmem>>, vector<256x128xf32>,
    return
  }
  func.func @transform_0(%arg0: i32) -> (i32, i32) {
    %c0_i32 = arith.constant 0 : i32
    %c0_i32_0 = arith.constant 0 : i32
    return %arg0, %c0_i32 : i32, i32
  }
  func.func @transform_1(%arg0: i32) -> (i32, i32) {
    %c0_i32 = arith.constant 0 : i32
    %c0_i32_0 = arith.constant 0 : i32
    return %arg0, %c0_i32 : i32, i32
  }
  func.func @transform_2(%arg0: i32) -> (i32, i32) {
    %c0_i32 = arith.constant 0 : i32
    %c0_i32_0 = arith.constant 0 : i32
    return %arg0, %c0_i32 : i32, i32
  }
  func.func @transform_3(%arg0: i32) -> (i32, i32) {
    %c0_i32 = arith.constant 0 : i32
    %c0_i32_0 = arith.constant 0 : i32
    %c0_i32_1 = arith.constant 0 : i32
    return %c0_i32, %c0_i32_0 : i32, i32
  }
  func.func @transform_4(%arg0: i32) -> (i32, i32) {
    %c0_i32 = arith.constant 0 : i32
    %c0_i32_0 = arith.constant 0 : i32
    return %arg0, %c0_i32 : i32, i32
  }
}

module attributes {stable_mosaic.version = 11 : i64} {
  func.func @esm_embed_kernel(%arg0: i32, %arg1: memref<256x1xi32, #tpu.memory_space<vmem>>, %arg2: memref<256x1xi32, #tpu.memory_space<vmem>>, %arg3: memref<256x1xf32, #tpu.memory_space<vmem>>, %arg4: memref<512x128xf32, #tpu.memory_space<vmem>>, %arg5: memref<256x128xf32, #tpu.memory_space<vmem>>) attributes {dimension_semantics = [#tpu.dimension_semantics<parallel>], iteration_bounds = array<i64: 2>, scalar_prefetch = 0 : i64, scratch_operands = 0 : i64, tpu.core_type = #tpu.core_type<tc>, window_params = [{transform_indices = @transform_0, window_bounds = array<i64: 256, 1>}, {transform_indices = @transform_1, window_bounds = array<i64: 256, 1>}, {transform_indices = @transform_2, window_bounds = array<i64: 256, 1>}, {pipeline_mode = #tpu.pipeline_mode<synchronous>, transform_indices = @transform_3, window_bounds = array<i64: 512, 128>}, {transform_indices = @transform_4, window_bounds = array<i64: 256, 128>}]} {
    %c0 = arith.constant 0 : index
    %c0_0 = arith.constant 0 : index
    %0 = vector.load %arg1[%c0, %c0_0] : memref<256x1xi32, #tpu.memory_space<vmem>>, vector<256x1xi32>
    %c0_1 = arith.constant 0 : index
    %c0_2 = arith.constant 0 : index
    %1 = vector.load %arg2[%c0_1, %c0_2] : memref<256x1xi32, #tpu.memory_space<vmem>>, vector<256x1xi32>
    %2 = tpu.iota {dimensions = array<i32: 1>} : vector<256x512xi32>
    %3 = vector.broadcast %0 : vector<256x1xi32> to vector<256x512xi32>
    %4 = arith.cmpi eq, %2, %3 : vector<256x512xi32>
    %5 = vector.broadcast %1 : vector<256x1xi32> to vector<256x512xi32>
    %6 = arith.cmpi eq, %2, %5 : vector<256x512xi32>
    %7 = arith.ori %4, %6 : vector<256x512xi1>
    %8 = arith.extui %7 : vector<256x512xi1> to vector<256x512xi32>
    %9 = arith.sitofp %8 : vector<256x512xi32> to vector<256x512xf32>
    %c0_3 = arith.constant 0 : index
    %c0_4 = arith.constant 0 : index
    %10 = vector.load %arg3[%c0_3, %c0_4] : memref<256x1xf32, #tpu.memory_space<vmem>>, vector<256x1xf32>
    %11 = vector.broadcast %10 : vector<256x1xf32> to vector<256x512xf32>
    %12 = arith.mulf %9, %11 : vector<256x512xf32>
    %c0_5 = arith.constant 0 : index
    %c0_6 = arith.constant 0 : index
    %13 = vector.load %arg4[%c0_5, %c0_6] : memref<512x128xf32, #tpu.memory_space<vmem>>, vector<512x128xf32>
    %cst = arith.constant dense<0.000000e+00> : vector<256x128xf32>
    %14 = tpu.matmul %12, %13, %cst {dimension_numbers = #tpu.dot_dimension_numbers<[1], [0], [0], [1], [0, 0, 1, 1], [], []>} : vector<256x512xf32>, vector<512x128xf32>, vector<256x128xf32> -> vector<256x128xf32>
    %c0_7 = arith.constant 0 : index
    %c0_8 = arith.constant 0 : index
    %15 = vector.load %arg5[%c0_7, %c0_8] : memref<256x128xf32, #tpu.memory_space<vmem>>, vector<256x128xf32>
    tpu.vector_store %arg5[%c0_7, %c0_8], %14 {strides = array<i32>} : memref<256x128xf32, #tpu.memory_space<vmem>>, vector<256x128xf32>,
    return
  }
  func.func @transform_0(%arg0: i32) -> (i32, i32) {
    %c0_i32 = arith.constant 0 : i32
    %c0_i32_0 = arith.constant 0 : i32
    return %arg0, %c0_i32 : i32, i32
  }
  func.func @transform_1(%arg0: i32) -> (i32, i32) {
    %c0_i32 = arith.constant 0 : i32
    %c0_i32_0 = arith.constant 0 : i32
    return %arg0, %c0_i32 : i32, i32
  }
  func.func @transform_2(%arg0: i32) -> (i32, i32) {
    %c0_i32 = arith.constant 0 : i32
    %c0_i32_0 = arith.constant 0 : i32
    return %arg0, %c0_i32 : i32, i32
  }
  func.func @transform_3(%arg0: i32) -> (i32, i32) {
    %c0_i32 = arith.constant 0 : i32
    %c0_i32_0 = arith.constant 0 : i32
    %c0_i32_1 = arith.constant 0 : i32
    return %c0_i32, %c0_i32_0 : i32, i32
  }
  func.func @transform_4(%arg0: i32) -> (i32, i32) {
    %c0_i32 = arith.constant 0 : i32
    %c0_i32_0 = arith.constant 0 : i32
    return %arg0, %c0_i32 : i32, i32
  }
}

</mosaic_0001>

<llo_original>
// kernel: tpu_custom_call.1
$region0: #{tpu_custom_call.1}
  #allocation0 [shape = 'u32[]', space=smem, size = 0x4, offset = 0x4, fixed_abs, tag = 'smem constant byte address 0x4 - core index']
  #allocation1 [shape = 'u32[144,128]{1,0:T(1,128)}', space=vmem, size = 0x12000, scoped, tag = 'internal scratch']
  %s0 = inlined_call_operand.vmem [shape: s32[512,1], index: 0, kind: input, shape index: {}]
  %s1 = inlined_call_operand.vmem [shape: s32[512,1], index: 1, kind: input, shape index: {}]
  %s2 = inlined_call_operand.vmem [shape: f32[512,1], index: 2, kind: input, shape index: {}]
  %s3 = inlined_call_operand.vmem [shape: f32[512,128], index: 3, kind: input, shape index: {}]
  %s4 = inlined_call_operand.hbm [shape: f32[512,128], index: 4, kind: output, shape index: {}]
  %s5 = sld [smem:[#allocation0]]
  $region49: #{tpu_custom_call.1} parent=0
    _
  %s7 = ssub.s32 1, %s5
  %s8 = scalar_select 0, %s7, %s5
  $region1: #{tpu_custom_call.1} parent=0
    #allocation2 [shape = 'u8[262144]{0}', space=vmem, size = 0x40000, scoped, tag = 'output window, operand 0']
    #allocation3 [shape = 's32[2]{0}', space=sflag, size = 0x8, scoped, tag = 'scoped memory for tpu_custom_call.1']
    %9 = vsyncpa [#allocation3], 0
    %s10 = scalar_lea.sflag [#allocation3], 1
    %11 = vsyncpa %s10, 0
    loop: start=0, step=1, limit=4
    $region2: #{tpu_custom_call.1} parent=1 // loop_pre_header
      _
    $region3: #{tpu_custom_call.1} parent=1 // loop_header
      %s13 = sphi 0, %s17
      %p14 = scmp.ge.s32.totalorder %s13, 4
      %s23 = sphi 0, %s25
      %s26 = sphi 0, %s23
      %s27 = sphi 0, %s26
      %s43 = sphi 0, %s27
      %s49 = sphi 0, %s51
      %s52 = sphi 0, %s49
      %s53 = sphi 0, %s52
      %s69 = sphi 0, %s53
      %s75 = sphi 0, %s77
      %s78 = sphi 0, %s75
      %s79 = sphi 0, %s78
      %s95 = sphi 0, %s79
      %s99 = sphi 0, %s99
      %s101 = sphi 0, %s99
      %s102 = sphi 0, %s101
      %s116 = sphi 0, %s102
      %s122 = sphi 0, %s124
      %s125 = sphi 0, %s122
      %s126 = sphi 0, %s125
      %s142 = sphi 0, %s126
    $region4: #{tpu_custom_call.1} parent=1 // loop_header_branch
      %16 = sbr.rel (%p14) target = $region8
    $region5: #{tpu_custom_call.1} parent=1 // loop_body
      %s18 = ssub.s32 %s13, 1
      %s19 = ssub.s32 %s13, 2
      %s20 = sadd.s32 %s13, 1
      %s21 = ssub.s32 %s13, %s20
      %p22 = scmp.eq.s32.totalorder %s21, 0
      %s24 = sadd.s32 %s23, 1
      %s25 = scalar_select %p22, %s23, %s24
      %p28 = pneg %p22
      %p29 = scmp.eq.s32.totalorder %s13, 1
      %p30 = por %p28, %p29
      %p31 = scmp.ne.s32.totalorder %s23, %s26
      %p32 = scmp.eq.s32.totalorder %s13, 0
      %p33 = por %p31, %p32
      %p34 = scmp.ne.s32.totalorder %s23, %s26
      %p35 = scmp.eq.s32.totalorder %s18, 1
      %p36 = por %p34, %p35
      %p37 = scmp.ne.s32.totalorder %s26, %s27
      %p38 = scmp.eq.s32.totalorder %s18, 0
      %p39 = por %p37, %p38
      %p40 = scmp.ne.s32.totalorder %s26, %s27
      %p41 = scmp.eq.s32.totalorder %s19, 1
      %p42 = por %p40, %p41
      %p44 = scmp.ne.s32.totalorder %s27, %s43
      %p45 = scmp.eq.s32.totalorder %s19, 0
      %p46 = por %p44, %p45
      %s47 = ssub.s32 %s13, %s20
      %p48 = scmp.eq.s32.totalorder %s47, 0
      %s50 = sadd.s32 %s49, 1
      %s51 = scalar_select %p48, %s49, %s50
      %p54 = pneg %p48
      %p55 = scmp.eq.s32.totalorder %s13, 1
      %p56 = por %p54, %p55
      %p57 = scmp.ne.s32.totalorder %s49, %s52
      %p58 = scmp.eq.s32.totalorder %s13, 0
      %p59 = por %p57, %p58
      %p60 = scmp.ne.s32.totalorder %s49, %s52
      %p61 = scmp.eq.s32.totalorder %s18, 1
      %p62 = por %p60, %p61
      %p63 = scmp.ne.s32.totalorder %s52, %s53
      %p64 = scmp.eq.s32.totalorder %s18, 0
      %p65 = por %p63, %p64
      %p66 = scmp.ne.s32.totalorder %s52, %s53
      %p67 = scmp.eq.s32.totalorder %s19, 1
      %p68 = por %p66, %p67
      %p70 = scmp.ne.s32.totalorder %s53, %s69
      %p71 = scmp.eq.s32.totalorder %s19, 0
      %p72 = por %p70, %p71
      %s73 = ssub.s32 %s13, %s20
      %p74 = scmp.eq.s32.totalorder %s73, 0
      %s76 = sadd.s32 %s75, 1
      %s77 = scalar_select %p74, %s75, %s76
      %p80 = pneg %p74
      %p81 = scmp.eq.s32.totalorder %s13, 1
      %p82 = por %p80, %p81
      %p83 = scmp.ne.s32.totalorder %s75, %s78
      %p84 = scmp.eq.s32.totalorder %s13, 0
      %p85 = por %p83, %p84
      %p86 = scmp.ne.s32.totalorder %s75, %s78
      %p87 = scmp.eq.s32.totalorder %s18, 1
      %p88 = por %p86, %p87
      %p89 = scmp.ne.s32.totalorder %s78, %s79
      %p90 = scmp.eq.s32.totalorder %s18, 0
      %p91 = por %p89, %p90
      %p92 = scmp.ne.s32.totalorder %s78, %s79
      %p93 = scmp.eq.s32.totalorder %s19, 1
      %p94 = por %p92, %p93
      %p96 = scmp.ne.s32.totalorder %s79, %s95
      %p97 = scmp.eq.s32.totalorder %s19, 0
      %p98 = por %p96, %p97
      %s100 = sadd.s32 %s99, 1
      %p103 = scmp.eq.s32.totalorder %s13, 1
      %p104 = scmp.ne.s32.totalorder %s99, %s101
      %p105 = scmp.eq.s32.totalorder %s13, 0
      %p106 = por %p104, %p105
      %p107 = scmp.ne.s32.totalorder %s99, %s101
      %p108 = scmp.eq.s32.totalorder %s18, 1
      %p109 = por %p107, %p108
      %p110 = scmp.ne.s32.totalorder %s101, %s102
      %p111 = scmp.eq.s32.totalorder %s18, 0
      %p112 = por %p110, %p111
      %p113 = scmp.ne.s32.totalorder %s101, %s102
      %p114 = scmp.eq.s32.totalorder %s19, 1
      %p115 = por %p113, %p114
      %p117 = scmp.ne.s32.totalorder %s102, %s116
      %p118 = scmp.eq.s32.totalorder %s19, 0
      %p119 = por %p117, %p118
      %s120 = ssub.s32 %s13, %s20
      %p121 = scmp.eq.s32.totalorder %s120, 0
      %s123 = sadd.s32 %s122, 1
      %s124 = scalar_select %p121, %s122, %s123
      %p127 = pneg %p121
      %p128 = scmp.eq.s32.totalorder %s13, 1
      %p129 = por %p127, %p128
      %p130 = scmp.ne.s32.totalorder %s122, %s125
      %p131 = scmp.eq.s32.totalorder %s13, 0
      %p132 = por %p130, %p131
      %p133 = scmp.ne.s32.totalorder %s122, %s125
      %p134 = scmp.eq.s32.totalorder %s18, 1
      %p135 = por %p133, %p134
      %p136 = scmp.ne.s32.totalorder %s125, %s126
      %p137 = scmp.eq.s32.totalorder %s18, 0
      %p138 = por %p136, %p137
      %p139 = scmp.ne.s32.totalorder %s125, %s126
      %p140 = scmp.eq.s32.totalorder %s19, 1
      %p141 = por %p139, %p140
      %p143 = scmp.ne.s32.totalorder %s126, %s142
      %p144 = scmp.eq.s32.totalorder %s19, 0
      %p145 = por %p143, %p144
      %p146 = scmp.le.s32.totalorder 1, %s13
      %p147 = scmp.lt.s32.totalorder %s13, 3
      %p148 = pnand %p146, %p147
      %p149 = pneg %p148
      // Predicated region
      $region9: #{tpu_custom_call.1} parent=5 // pred_check
        _
      $region10: #{tpu_custom_call.1} parent=5 // pred_check_branch
        %151 = sbr.rel (%p148) target = $region12
      $region11: #{tpu_custom_call.1} parent=5 // pred_region
        %s152 = ssub.s32 %s13, 1
        // Predicated region
        $region13: #{tpu_custom_call.1} parent=11 // pred_check
          %p153 = pneg %p112
        $region14: #{tpu_custom_call.1} parent=11 // pred_check_branch
          %155 = sbr.rel (%p153) target = $region16
        $region15: #{tpu_custom_call.1} parent=11 // pred_region
          _
        $region16: #{tpu_custom_call.1} parent=11 // pred_fallthru
          _
      $region12: #{tpu_custom_call.1} parent=5 // pred_fallthru
        _
      %p156 = scmp.lt.s32.totalorder %s13, 2
      // Predicated region
      $region17: #{tpu_custom_call.1} parent=5 // pred_check
        %p157 = pneg %p156
      $region18: #{tpu_custom_call.1} parent=5 // pred_check_branch
        %159 = sbr.rel (%p157) target = $region20
      $region19: #{tpu_custom_call.1} parent=5 // pred_region
        // Predicated region
        $region21: #{tpu_custom_call.1} parent=19 // pred_check
          %p160 = pneg %p33
        $region22: #{tpu_custom_call.1} parent=19 // pred_check_branch
          %162 = sbr.rel (%p160) target = $region24
        $region23: #{tpu_custom_call.1} parent=19 // pred_region
          %s163 = smul.u32 32, %s13
          %p164 = scmp.lt.s32.totalorder %s163, 63
          %s165 = scalar_select %p164, %s163, 63
          %s166 = smul.addr %s165, 8
          %s167 = scalar_lea.vmem %s0, %s166
          %s168 = smul.u32 32, %s13
        $region24: #{tpu_custom_call.1} parent=19 // pred_fallthru
          _
        // Predicated region
        $region25: #{tpu_custom_call.1} parent=19 // pred_check
          %p169 = pneg %p59
        $region26: #{tpu_custom_call.1} parent=19 // pred_check_branch
          %171 = sbr.rel (%p169) target = $region28
        $region27: #{tpu_custom_call.1} parent=19 // pred_region
          %s172 = smul.u32 32, %s13
          %p173 = scmp.lt.s32.totalorder %s172, 63
          %s174 = scalar_select %p173, %s172, 63
          %s175 = smul.addr %s174, 8
          %s176 = scalar_lea.vmem %s1, %s175
          %s177 = smul.u32 32, %s13
        $region28: #{tpu_custom_call.1} parent=19 // pred_fallthru
          _
        // Predicated region
        $region29: #{tpu_custom_call.1} parent=19 // pred_check
          %p178 = pneg %p85
        $region30: #{tpu_custom_call.1} parent=19 // pred_check_branch
          %180 = sbr.rel (%p178) target = $region32
        $region31: #{tpu_custom_call.1} parent=19 // pred_region
          %s181 = smul.u32 32, %s13
          %p182 = scmp.lt.s32.totalorder %s181, 63
          %s183 = scalar_select %p182, %s181, 63
          %s184 = smul.addr %s183, 8
          %s185 = scalar_lea.vmem %s2, %s184
          %s186 = smul.u32 32, %s13
        $region32: #{tpu_custom_call.1} parent=19 // pred_fallthru
          _
      $region20: #{tpu_custom_call.1} parent=5 // pred_fallthru
        _
      %p187 = scmp.le.s32.totalorder 1, %s13
      %p188 = scmp.lt.s32.totalorder %s13, 3
      %p189 = pnand %p187, %p188
      %p190 = pneg %p189
      // Predicated region
      $region33: #{tpu_custom_call.1} parent=5 // pred_check
        _
      $region34: #{tpu_custom_call.1} parent=5 // pred_check_branch
        %192 = sbr.rel (%p189) target = $region36
      $region35: #{tpu_custom_call.1} parent=5 // pred_region
        %s193 = ssub.s32 %s13, 1
        %s194 = smul.u32 32, %s18
        %p195 = scmp.lt.s32.totalorder %s194, 63
        %s196 = scalar_select %p195, %s194, 63
        %s197 = smul.addr %s196, 8
        %s198 = scalar_lea.vmem %s0, %s197
        %p199 = pneg %p39
        %p200 = pneg %p36
        %s201 = smul.u32 32, %s18
        %p202 = scmp.lt.s32.totalorder %s201, 63
        %s203 = scalar_select %p202, %s201, 63
        %s204 = smul.addr %s203, 8
        %s205 = scalar_lea.vmem %s1, %s204
        %p206 = pneg %p65
        %p207 = pneg %p62
        %s208 = smul.u32 32, %s18
        %p209 = scmp.lt.s32.totalorder %s208, 63
        %s210 = scalar_select %p209, %s208, 63
        %s211 = smul.addr %s210, 8
        %s212 = scalar_lea.vmem %s2, %s211
        %p213 = pneg %p91
        %p214 = pneg %p88
        %p215 = pneg %p112
        %p216 = pneg %p109
        %p217 = pneg %p138
        %p218 = pneg %p135
        %s219 = sand.u32 %s125, 1
        %s220 = scalar_lea.sflag [#allocation3], %s219
        %s221 = sand.u32 %s125, 1
        %s222 = smul.addr %s221, 256
        %s223 = scalar_lea.vmem [#allocation2], %s222
        %s224 = smul.u32 32, %s18
        %p225 = scmp.lt.s32.totalorder %s224, 63
        %s226 = scalar_select %p225, %s224, 63
        %s227 = smul.addr %s226, 8
        %s228 = scalar_lea.vmem %s0, %s227
        %s229 = smul.u32 32, %s18
        %s230 = smul.u32 32, %s18
        %p231 = scmp.lt.s32.totalorder %s230, 63
        %s232 = scalar_select %p231, %s230, 63
        %s233 = smul.addr %s232, 8
        %s234 = scalar_lea.vmem %s1, %s233
        %s235 = smul.u32 32, %s18
        %s236 = smul.u32 32, %s18
        %p237 = scmp.lt.s32.totalorder %s236, 63
        %s238 = scalar_select %p237, %s236, 63
        %s239 = smul.addr %s238, 8
        %s240 = scalar_lea.vmem %s2, %s239
        %s241 = smul.u32 32, %s18
        %s242 = smul.u32 32, %s18
        %v243 = vld [vmem:[%s228] sm:$0xff]
        %v244 = vld [vmem:[%s228 + $0x8] sm:$0xff]
        %v245 = vld [vmem:[%s228 + $0x10] sm:$0xff]
        %v246 = vld [vmem:[%s228 + $0x18] sm:$0xff]
        %v247 = vld [vmem:[%s228 + $0x20] sm:$0xff]
        %v248 = vld [vmem:[%s228 + $0x28] sm:$0xff]
        %v249 = vld [vmem:[%s228 + $0x30] sm:$0xff]
        %v250 = vld [vmem:[%s228 + $0x38] sm:$0xff]
        %v251 = vld [vmem:[%s228 + $0x40] sm:$0xff]
        %v252 = vld [vmem:[%s228 + $0x48] sm:$0xff]
        %v253 = vld [vmem:[%s228 + $0x50] sm:$0xff]
        %v254 = vld [vmem:[%s228 + $0x58] sm:$0xff]
        %v255 = vld [vmem:[%s228 + $0x60] sm:$0xff]
        %v256 = vld [vmem:[%s228 + $0x68] sm:$0xff]
        %v257 = vld [vmem:[%s228 + $0x70] sm:$0xff]
        %v258 = vld [vmem:[%s228 + $0x78] sm:$0xff]
        %v259 = vld [vmem:[%s228 + $0x80] sm:$0xff]
        %v260 = vld [vmem:[%s228 + $0x88] sm:$0xff]
        %v261 = vld [vmem:[%s228 + $0x90] sm:$0xff]
        %v262 = vld [vmem:[%s228 + $0x98] sm:$0xff]
        %v263 = vld [vmem:[%s228 + $0xa0] sm:$0xff]
        %v264 = vld [vmem:[%s228 + $0xa8] sm:$0xff]
        %v265 = vld [vmem:[%s228 + $0xb0] sm:$0xff]
        %v266 = vld [vmem:[%s228 + $0xb8] sm:$0xff]
        %v267 = vld [vmem:[%s228 + $0xc0] sm:$0xff]
        %v268 = vld [vmem:[%s228 + $0xc8] sm:$0xff]
        %v269 = vld [vmem:[%s228 + $0xd0] sm:$0xff]
        %v270 = vld [vmem:[%s228 + $0xd8] sm:$0xff]
        %v271 = vld [vmem:[%s228 + $0xe0] sm:$0xff]
        %v272 = vld [vmem:[%s228 + $0xe8] sm:$0xff]
        %v273 = vld [vmem:[%s228 + $0xf0] sm:$0xff]
        %v274 = vld [vmem:[%s228 + $0xf8] sm:$0xff]
        %v275 = vld [vmem:[%s234] sm:$0xff]
        %v276 = vld [vmem:[%s234 + $0x8] sm:$0xff]
        %v277 = vld [vmem:[%s234 + $0x10] sm:$0xff]
        %v278 = vld [vmem:[%s234 + $0x18] sm:$0xff]
        %v279 = vld [vmem:[%s234 + $0x20] sm:$0xff]
        %v280 = vld [vmem:[%s234 + $0x28] sm:$0xff]
        %v281 = vld [vmem:[%s234 + $0x30] sm:$0xff]
        %v282 = vld [vmem:[%s234 + $0x38] sm:$0xff]
        %v283 = vld [vmem:[%s234 + $0x40] sm:$0xff]
        %v284 = vld [vmem:[%s234 + $0x48] sm:$0xff]
        %v285 = vld [vmem:[%s234 + $0x50] sm:$0xff]
        %v286 = vld [vmem:[%s234 + $0x58] sm:$0xff]
        %v287 = vld [vmem:[%s234 + $0x60] sm:$0xff]
        %v288 = vld [vmem:[%s234 + $0x68] sm:$0xff]
        %v289 = vld [vmem:[%s234 + $0x70] sm:$0xff]
        %v290 = vld [vmem:[%s234 + $0x78] sm:$0xff]
        %v291 = vld [vmem:[%s234 + $0x80] sm:$0xff]
        %v292 = vld [vmem:[%s234 + $0x88] sm:$0xff]
        %v293 = vld [vmem:[%s234 + $0x90] sm:$0xff]
        %v294 = vld [vmem:[%s234 + $0x98] sm:$0xff]
        %v295 = vld [vmem:[%s234 + $0xa0] sm:$0xff]
        %v296 = vld [vmem:[%s234 + $0xa8] sm:$0xff]
        %v297 = vld [vmem:[%s234 + $0xb0] sm:$0xff]
        %v298 = vld [vmem:[%s234 + $0xb8] sm:$0xff]
        %v299 = vld [vmem:[%s234 + $0xc0] sm:$0xff]
        %v300 = vld [vmem:[%s234 + $0xc8] sm:$0xff]
        %v301 = vld [vmem:[%s234 + $0xd0] sm:$0xff]
        %v302 = vld [vmem:[%s234 + $0xd8] sm:$0xff]
        %v303 = vld [vmem:[%s234 + $0xe0] sm:$0xff]
        %v304 = vld [vmem:[%s234 + $0xe8] sm:$0xff]
        %v305 = vld [vmem:[%s234 + $0xf0] sm:$0xff]
        %v306 = vld [vmem:[%s234 + $0xf8] sm:$0xff]
        %v307 = vlaneseq
        %v308 = vand.u32 %v307, 127
        %v309 = vadd.s32 %v308, 128
        %v310 = vadd.s32 %v308, 256
        %v311 = vadd.s32 %v308, 384
        %312 = vset.pattern.permute.xlu0 0
        %313 = vperm.xlu0 %312, %v243
        %v314 = vpop.permute.xlu0 %313
        %315 = vset.pattern.permute.xlu0 0
        %316 = vperm.xlu0 %315, %v244
        %v317 = vpop.permute.xlu0 %316
        %318 = vset.pattern.permute.xlu0 0
        %319 = vperm.xlu0 %318, %v245
        %v320 = vpop.permute.xlu0 %319
        %321 = vset.pattern.permute.xlu0 0
        %322 = vperm.xlu0 %321, %v246
        %v323 = vpop.permute.xlu0 %322
        %324 = vset.pattern.permute.xlu0 0
        %325 = vperm.xlu0 %324, %v247
        %v326 = vpop.permute.xlu0 %325
        %327 = vset.pattern.permute.xlu0 0
        %328 = vperm.xlu0 %327, %v248
        %v329 = vpop.permute.xlu0 %328
        %330 = vset.pattern.permute.xlu0 0
        %331 = vperm.xlu0 %330, %v249
        %v332 = vpop.permute.xlu0 %331
        %333 = vset.pattern.permute.xlu0 0
        %334 = vperm.xlu0 %333, %v250
        %v335 = vpop.permute.xlu0 %334
        %336 = vset.pattern.permute.xlu0 0
        %337 = vperm.xlu0 %336, %v251
        %v338 = vpop.permute.xlu0 %337
        %339 = vset.pattern.permute.xlu0 0
        %340 = vperm.xlu0 %339, %v252
        %v341 = vpop.permute.xlu0 %340
        %342 = vset.pattern.permute.xlu0 0
        %343 = vperm.xlu0 %342, %v253
        %v344 = vpop.permute.xlu0 %343
        %345 = vset.pattern.permute.xlu0 0
        %346 = vperm.xlu0 %345, %v254
        %v347 = vpop.permute.xlu0 %346
        %348 = vset.pattern.permute.xlu0 0
        %349 = vperm.xlu0 %348, %v255
        %v350 = vpop.permute.xlu0 %349
        %351 = vset.pattern.permute.xlu0 0
        %352 = vperm.xlu0 %351, %v256
        %v353 = vpop.permute.xlu0 %352
        %354 = vset.pattern.permute.xlu0 0
        %355 = vperm.xlu0 %354, %v257
        %v356 = vpop.permute.xlu0 %355
        %357 = vset.pattern.permute.xlu0 0
        %358 = vperm.xlu0 %357, %v258
        %v359 = vpop.permute.xlu0 %358
        %360 = vset.pattern.permute.xlu0 0
        %361 = vperm.xlu0 %360, %v259
        %v362 = vpop.permute.xlu0 %361
        %363 = vset.pattern.permute.xlu0 0
        %364 = vperm.xlu0 %363, %v260
        %v365 = vpop.permute.xlu0 %364
        %366 = vset.pattern.permute.xlu0 0
        %367 = vperm.xlu0 %366, %v261
        %v368 = vpop.permute.xlu0 %367
        %369 = vset.pattern.permute.xlu0 0
        %370 = vperm.xlu0 %369, %v262
        %v371 = vpop.permute.xlu0 %370
        %372 = vset.pattern.permute.xlu0 0
        %373 = vperm.xlu0 %372, %v263
        %v374 = vpop.permute.xlu0 %373
        %375 = vset.pattern.permute.xlu0 0
        %376 = vperm.xlu0 %375, %v264
        %v377 = vpop.permute.xlu0 %376
        %378 = vset.pattern.permute.xlu0 0
        %379 = vperm.xlu0 %378, %v265
        %v380 = vpop.permute.xlu0 %379
        %381 = vset.pattern.permute.xlu0 0
        %382 = vperm.xlu0 %381, %v266
        %v383 = vpop.permute.xlu0 %382
        %384 = vset.pattern.permute.xlu0 0
        %385 = vperm.xlu0 %384, %v267
        %v386 = vpop.permute.xlu0 %385
        %387 = vset.pattern.permute.xlu0 0
        %388 = vperm.xlu0 %387, %v268
        %v389 = vpop.permute.xlu0 %388
        %390 = vset.pattern.permute.xlu0 0
        %391 = vperm.xlu0 %390, %v269
        %v392 = vpop.permute.xlu0 %391
        %393 = vset.pattern.permute.xlu0 0
        %394 = vperm.xlu0 %393, %v270
        %v395 = vpop.permute.xlu0 %394
        %396 = vset.pattern.permute.xlu0 0
        %397 = vperm.xlu0 %396, %v271
        %v398 = vpop.permute.xlu0 %397
        %399 = vset.pattern.permute.xlu0 0
        %400 = vperm.xlu0 %399, %v272
        %v401 = vpop.permute.xlu0 %400
        %402 = vset.pattern.permute.xlu0 0
        %403 = vperm.xlu0 %402, %v273
        %v404 = vpop.permute.xlu0 %403
        %405 = vset.pattern.permute.xlu0 0
        %406 = vperm.xlu0 %405, %v274
        %v407 = vpop.permute.xlu0 %406
        %vm408 = vcmp.eq.s32.totalorder %v308, %v314
        %vm409 = vcmp.eq.s32.totalorder %v309, %v314
        %vm410 = vcmp.eq.s32.totalorder %v310, %v314
        %vm411 = vcmp.eq.s32.totalorder %v311, %v314
        %vm412 = vcmp.eq.s32.totalorder %v308, %v317
        %vm413 = vcmp.eq.s32.totalorder %v309, %v317
        %vm414 = vcmp.eq.s32.totalorder %v310, %v317
        %vm415 = vcmp.eq.s32.totalorder %v311, %v317
        %vm416 = vcmp.eq.s32.totalorder %v308, %v320
        %vm417 = vcmp.eq.s32.totalorder %v309, %v320
        %vm418 = vcmp.eq.s32.totalorder %v310, %v320
        %vm419 = vcmp.eq.s32.totalorder %v311, %v320
        %vm420 = vcmp.eq.s32.totalorder %v308, %v323
        %vm421 = vcmp.eq.s32.totalorder %v309, %v323
        %vm422 = vcmp.eq.s32.totalorder %v310, %v323
        %vm423 = vcmp.eq.s32.totalorder %v311, %v323
        %vm424 = vcmp.eq.s32.totalorder %v308, %v326
        %vm425 = vcmp.eq.s32.totalorder %v309, %v326
        %vm426 = vcmp.eq.s32.totalorder %v310, %v326
        %vm427 = vcmp.eq.s32.totalorder %v311, %v326
        %vm428 = vcmp.eq.s32.totalorder %v308, %v329
        %vm429 = vcmp.eq.s32.totalorder %v309, %v329
        %vm430 = vcmp.eq.s32.totalorder %v310, %v329
        %vm431 = vcmp.eq.s32.totalorder %v311, %v329
        %vm432 = vcmp.eq.s32.totalorder %v308, %v332
        %vm433 = vcmp.eq.s32.totalorder %v309, %v332
        %vm434 = vcmp.eq.s32.totalorder %v310, %v332
        %vm435 = vcmp.eq.s32.totalorder %v311, %v332
        %vm436 = vcmp.eq.s32.totalorder %v308, %v335
        %vm437 = vcmp.eq.s32.totalorder %v309, %v335
        %vm438 = vcmp.eq.s32.totalorder %v310, %v335
        %vm439 = vcmp.eq.s32.totalorder %v311, %v335
        %vm440 = vcmp.eq.s32.totalorder %v308, %v338
        %vm441 = vcmp.eq.s32.totalorder %v309, %v338
        %vm442 = vcmp.eq.s32.totalorder %v310, %v338
        %vm443 = vcmp.eq.s32.totalorder %v311, %v338
        %vm444 = vcmp.eq.s32.totalorder %v308, %v341
        %vm445 = vcmp.eq.s32.totalorder %v309, %v341
        %vm446 = vcmp.eq.s32.totalorder %v310, %v341
        %vm447 = vcmp.eq.s32.totalorder %v311, %v341
        %vm448 = vcmp.eq.s32.totalorder %v308, %v344
        %vm449 = vcmp.eq.s32.totalorder %v309, %v344
        %vm450 = vcmp.eq.s32.totalorder %v310, %v344
        %vm451 = vcmp.eq.s32.totalorder %v311, %v344
        %vm452 = vcmp.eq.s32.totalorder %v308, %v347
        %vm453 = vcmp.eq.s32.totalorder %v309, %v347
        %vm454 = vcmp.eq.s32.totalorder %v310, %v347
        %vm455 = vcmp.eq.s32.totalorder %v311, %v347
        %vm456 = vcmp.eq.s32.totalorder %v308, %v350
        %vm457 = vcmp.eq.s32.totalorder %v309, %v350
        %vm458 = vcmp.eq.s32.totalorder %v310, %v350
        %vm459 = vcmp.eq.s32.totalorder %v311, %v350
        %vm460 = vcmp.eq.s32.totalorder %v308, %v353
        %vm461 = vcmp.eq.s32.totalorder %v309, %v353
        %vm462 = vcmp.eq.s32.totalorder %v310, %v353
        %vm463 = vcmp.eq.s32.totalorder %v311, %v353
        %vm464 = vcmp.eq.s32.totalorder %v308, %v356
        %vm465 = vcmp.eq.s32.totalorder %v309, %v356
        %vm466 = vcmp.eq.s32.totalorder %v310, %v356
        %vm467 = vcmp.eq.s32.totalorder %v311, %v356
        %vm468 = vcmp.eq.s32.totalorder %v308, %v359
        %vm469 = vcmp.eq.s32.totalorder %v309, %v359
        %vm470 = vcmp.eq.s32.totalorder %v310, %v359
        %vm471 = vcmp.eq.s32.totalorder %v311, %v359
        %vm472 = vcmp.eq.s32.totalorder %v308, %v362
        %vm473 = vcmp.eq.s32.totalorder %v309, %v362
        %vm474 = vcmp.eq.s32.totalorder %v310, %v362
        %vm475 = vcmp.eq.s32.totalorder %v311, %v362
        %vm476 = vcmp.eq.s32.totalorder %v308, %v365
        %vm477 = vcmp.eq.s32.totalorder %v309, %v365
        %vm478 = vcmp.eq.s32.totalorder %v310, %v365
        %vm479 = vcmp.eq.s32.totalorder %v311, %v365
        %vm480 = vcmp.eq.s32.totalorder %v308, %v368
        %vm481 = vcmp.eq.s32.totalorder %v309, %v368
        %vm482 = vcmp.eq.s32.totalorder %v310, %v368
        %vm483 = vcmp.eq.s32.totalorder %v311, %v368
        %vm484 = vcmp.eq.s32.totalorder %v308, %v371
        %vm485 = vcmp.eq.s32.totalorder %v309, %v371
        %vm486 = vcmp.eq.s32.totalorder %v310, %v371
        %vm487 = vcmp.eq.s32.totalorder %v311, %v371
        %vm488 = vcmp.eq.s32.totalorder %v308, %v374
        %vm489 = vcmp.eq.s32.totalorder %v309, %v374
        %vm490 = vcmp.eq.s32.totalorder %v310, %v374
        %vm491 = vcmp.eq.s32.totalorder %v311, %v374
        %vm492 = vcmp.eq.s32.totalorder %v308, %v377
        %vm493 = vcmp.eq.s32.totalorder %v309, %v377
        %vm494 = vcmp.eq.s32.totalorder %v310, %v377
        %vm495 = vcmp.eq.s32.totalorder %v311, %v377
        %vm496 = vcmp.eq.s32.totalorder %v308, %v380
        %vm497 = vcmp.eq.s32.totalorder %v309, %v380
        %vm498 = vcmp.eq.s32.totalorder %v310, %v380
        %vm499 = vcmp.eq.s32.totalorder %v311, %v380
        %vm500 = vcmp.eq.s32.totalorder %v308, %v383
        %vm501 = vcmp.eq.s32.totalorder %v309, %v383
        %vm502 = vcmp.eq.s32.totalorder %v310, %v383
        %vm503 = vcmp.eq.s32.totalorder %v311, %v383
        %vm504 = vcmp.eq.s32.totalorder %v308, %v386
        %vm505 = vcmp.eq.s32.totalorder %v309, %v386
        %vm506 = vcmp.eq.s32.totalorder %v310, %v386
        %vm507 = vcmp.eq.s32.totalorder %v311, %v386
        %vm508 = vcmp.eq.s32.totalorder %v308, %v389
        %vm509 = vcmp.eq.s32.totalorder %v309, %v389
        %vm510 = vcmp.eq.s32.totalorder %v310, %v389
        %vm511 = vcmp.eq.s32.totalorder %v311, %v389
        %vm512 = vcmp.eq.s32.totalorder %v308, %v392
        %vm513 = vcmp.eq.s32.totalorder %v309, %v392
        %vm514 = vcmp.eq.s32.totalorder %v310, %v392
        %vm515 = vcmp.eq.s32.totalorder %v311, %v392
        %vm516 = vcmp.eq.s32.totalorder %v308, %v395
        %vm517 = vcmp.eq.s32.totalorder %v309, %v395
        %vm518 = vcmp.eq.s32.totalorder %v310, %v395
        %vm519 = vcmp.eq.s32.totalorder %v311, %v395
        %vm520 = vcmp.eq.s32.totalorder %v308, %v398
        %vm521 = vcmp.eq.s32.totalorder %v309, %v398
        %vm522 = vcmp.eq.s32.totalorder %v310, %v398
        %vm523 = vcmp.eq.s32.totalorder %v311, %v398
        %vm524 = vcmp.eq.s32.totalorder %v308, %v401
        %vm525 = vcmp.eq.s32.totalorder %v309, %v401
        %vm526 = vcmp.eq.s32.totalorder %v310, %v401
        %vm527 = vcmp.eq.s32.totalorder %v311, %v401
        %vm528 = vcmp.eq.s32.totalorder %v308, %v404
        %vm529 = vcmp.eq.s32.totalorder %v309, %v404
        %vm530 = vcmp.eq.s32.totalorder %v310, %v404
        %vm531 = vcmp.eq.s32.totalorder %v311, %v404
        %vm532 = vcmp.eq.s32.totalorder %v308, %v407
        %vm533 = vcmp.eq.s32.totalorder %v309, %v407
        %vm534 = vcmp.eq.s32.totalorder %v310, %v407
        %vm535 = vcmp.eq.s32.totalorder %v311, %v407
        %536 = vset.pattern.permute.xlu0 0
        %537 = vperm.xlu0 %536, %v275
        %v538 = vpop.permute.xlu0 %537
        %539 = vset.pattern.permute.xlu0 0
        %540 = vperm.xlu0 %539, %v276
        %v541 = vpop.permute.xlu0 %540
        %542 = vset.pattern.permute.xlu0 0
        %543 = vperm.xlu0 %542, %v277
        %v544 = vpop.permute.xlu0 %543
        %545 = vset.pattern.permute.xlu0 0
        %546 = vperm.xlu0 %545, %v278
        %v547 = vpop.permute.xlu0 %546
        %548 = vset.pattern.permute.xlu0 0
        %549 = vperm.xlu0 %548, %v279
        %v550 = vpop.permute.xlu0 %549
        %551 = vset.pattern.permute.xlu0 0
        %552 = vperm.xlu0 %551, %v280
        %v553 = vpop.permute.xlu0 %552
        %554 = vset.pattern.permute.xlu0 0
        %555 = vperm.xlu0 %554, %v281
        %v556 = vpop.permute.xlu0 %555
        %557 = vset.pattern.permute.xlu0 0
        %558 = vperm.xlu0 %557, %v282
        %v559 = vpop.permute.xlu0 %558
        %560 = vset.pattern.permute.xlu0 0
        %561 = vperm.xlu0 %560, %v283
        %v562 = vpop.permute.xlu0 %561
        %563 = vset.pattern.permute.xlu0 0
        %564 = vperm.xlu0 %563, %v284
        %v565 = vpop.permute.xlu0 %564
        %566 = vset.pattern.permute.xlu0 0
        %567 = vperm.xlu0 %566, %v285
        %v568 = vpop.permute.xlu0 %567
        %569 = vset.pattern.permute.xlu0 0
        %570 = vperm.xlu0 %569, %v286
        %v571 = vpop.permute.xlu0 %570
        %572 = vset.pattern.permute.xlu0 0
        %573 = vperm.xlu0 %572, %v287
        %v574 = vpop.permute.xlu0 %573
        %575 = vset.pattern.permute.xlu0 0
        %576 = vperm.xlu0 %575, %v288
        %v577 = vpop.permute.xlu0 %576
        %578 = vset.pattern.permute.xlu0 0
        %579 = vperm.xlu0 %578, %v289
        %v580 = vpop.permute.xlu0 %579
        %581 = vset.pattern.permute.xlu0 0
        %582 = vperm.xlu0 %581, %v290
        %v583 = vpop.permute.xlu0 %582
        %584 = vset.pattern.permute.xlu0 0
        %585 = vperm.xlu0 %584, %v291
        %v586 = vpop.permute.xlu0 %585
        %587 = vset.pattern.permute.xlu0 0
        %588 = vperm.xlu0 %587, %v292
        %v589 = vpop.permute.xlu0 %588
        %590 = vset.pattern.permute.xlu0 0
        %591 = vperm.xlu0 %590, %v293
        %v592 = vpop.permute.xlu0 %591
        %593 = vset.pattern.permute.xlu0 0
        %594 = vperm.xlu0 %593, %v294
        %v595 = vpop.permute.xlu0 %594
        %596 = vset.pattern.permute.xlu0 0
        %597 = vperm.xlu0 %596, %v295
        %v598 = vpop.permute.xlu0 %597
        %599 = vset.pattern.permute.xlu0 0
        %600 = vperm.xlu0 %599, %v296
        %v601 = vpop.permute.xlu0 %600
        %602 = vset.pattern.permute.xlu0 0
        %603 = vperm.xlu0 %602, %v297
        %v604 = vpop.permute.xlu0 %603
        %605 = vset.pattern.permute.xlu0 0
        %606 = vperm.xlu0 %605, %v298
        %v607 = vpop.permute.xlu0 %606
        %608 = vset.pattern.permute.xlu0 0
        %609 = vperm.xlu0 %608, %v299
        %v610 = vpop.permute.xlu0 %609
        %611 = vset.pattern.permute.xlu0 0
        %612 = vperm.xlu0 %611, %v300
        %v613 = vpop.permute.xlu0 %612
        %614 = vset.pattern.permute.xlu0 0
        %615 = vperm.xlu0 %614, %v301
        %v616 = vpop.permute.xlu0 %615
        %617 = vset.pattern.permute.xlu0 0
        %618 = vperm.xlu0 %617, %v302
        %v619 = vpop.permute.xlu0 %618
        %620 = vset.pattern.permute.xlu0 0
        %621 = vperm.xlu0 %620, %v303
        %v622 = vpop.permute.xlu0 %621
        %623 = vset.pattern.permute.xlu0 0
        %624 = vperm.xlu0 %623, %v304
        %v625 = vpop.permute.xlu0 %624
        %626 = vset.pattern.permute.xlu0 0
        %627 = vperm.xlu0 %626, %v305
        %v628 = vpop.permute.xlu0 %627
        %629 = vset.pattern.permute.xlu0 0
        %630 = vperm.xlu0 %629, %v306
        %v631 = vpop.permute.xlu0 %630
        %vm632 = vcmp.eq.s32.totalorder %v308, %v538
        %vm633 = vcmp.eq.s32.totalorder %v309, %v538
        %vm634 = vcmp.eq.s32.totalorder %v310, %v538
        %vm635 = vcmp.eq.s32.totalorder %v311, %v538
        %vm636 = vcmp.eq.s32.totalorder %v308, %v541
        %vm637 = vcmp.eq.s32.totalorder %v309, %v541
        %vm638 = vcmp.eq.s32.totalorder %v310, %v541
        %vm639 = vcmp.eq.s32.totalorder %v311, %v541
        %vm640 = vcmp.eq.s32.totalorder %v308, %v544
        %vm641 = vcmp.eq.s32.totalorder %v309, %v544
        %vm642 = vcmp.eq.s32.totalorder %v310, %v544
        %vm643 = vcmp.eq.s32.totalorder %v311, %v544
        %vm644 = vcmp.eq.s32.totalorder %v308, %v547
        %vm645 = vcmp.eq.s32.totalorder %v309, %v547
        %vm646 = vcmp.eq.s32.totalorder %v310, %v547
        %vm647 = vcmp.eq.s32.totalorder %v311, %v547
        %vm648 = vcmp.eq.s32.totalorder %v308, %v550
        %vm649 = vcmp.eq.s32.totalorder %v309, %v550
        %vm650 = vcmp.eq.s32.totalorder %v310, %v550
        %vm651 = vcmp.eq.s32.totalorder %v311, %v550
        %vm652 = vcmp.eq.s32.totalorder %v308, %v553
        %vm653 = vcmp.eq.s32.totalorder %v309, %v553
        %vm654 = vcmp.eq.s32.totalorder %v310, %v553
        %vm655 = vcmp.eq.s32.totalorder %v311, %v553
        %vm656 = vcmp.eq.s32.totalorder %v308, %v556
        %vm657 = vcmp.eq.s32.totalorder %v309, %v556
        %vm658 = vcmp.eq.s32.totalorder %v310, %v556
        %vm659 = vcmp.eq.s32.totalorder %v311, %v556
        %vm660 = vcmp.eq.s32.totalorder %v308, %v559
        %vm661 = vcmp.eq.s32.totalorder %v309, %v559
        %vm662 = vcmp.eq.s32.totalorder %v310, %v559
        %vm663 = vcmp.eq.s32.totalorder %v311, %v559
        %vm664 = vcmp.eq.s32.totalorder %v308, %v562
        %vm665 = vcmp.eq.s32.totalorder %v309, %v562
        %vm666 = vcmp.eq.s32.totalorder %v310, %v562
        %vm667 = vcmp.eq.s32.totalorder %v311, %v562
        %vm668 = vcmp.eq.s32.totalorder %v308, %v565
        %vm669 = vcmp.eq.s32.totalorder %v309, %v565
        %vm670 = vcmp.eq.s32.totalorder %v310, %v565
        %vm671 = vcmp.eq.s32.totalorder %v311, %v565
        %vm672 = vcmp.eq.s32.totalorder %v308, %v568
        %vm673 = vcmp.eq.s32.totalorder %v309, %v568
        %vm674 = vcmp.eq.s32.totalorder %v310, %v568
        %vm675 = vcmp.eq.s32.totalorder %v311, %v568
        %vm676 = vcmp.eq.s32.totalorder %v308, %v571
        %vm677 = vcmp.eq.s32.totalorder %v309, %v571
        %vm678 = vcmp.eq.s32.totalorder %v310, %v571
        %vm679 = vcmp.eq.s32.totalorder %v311, %v571
        %vm680 = vcmp.eq.s32.totalorder %v308, %v574
        %vm681 = vcmp.eq.s32.totalorder %v309, %v574
        %vm682 = vcmp.eq.s32.totalorder %v310, %v574
        %vm683 = vcmp.eq.s32.totalorder %v311, %v574
        %vm684 = vcmp.eq.s32.totalorder %v308, %v577
        %vm685 = vcmp.eq.s32.totalorder %v309, %v577
        %vm686 = vcmp.eq.s32.totalorder %v310, %v577
        %vm687 = vcmp.eq.s32.totalorder %v311, %v577
        %vm688 = vcmp.eq.s32.totalorder %v308, %v580
        %vm689 = vcmp.eq.s32.totalorder %v309, %v580
        %vm690 = vcmp.eq.s32.totalorder %v310, %v580
        %vm691 = vcmp.eq.s32.totalorder %v311, %v580
        %vm692 = vcmp.eq.s32.totalorder %v308, %v583
        %vm693 = vcmp.eq.s32.totalorder %v309, %v583
        %vm694 = vcmp.eq.s32.totalorder %v310, %v583
        %vm695 = vcmp.eq.s32.totalorder %v311, %v583
        %vm696 = vcmp.eq.s32.totalorder %v308, %v586
        %vm697 = vcmp.eq.s32.totalorder %v309, %v586
        %vm698 = vcmp.eq.s32.totalorder %v310, %v586
        %vm699 = vcmp.eq.s32.totalorder %v311, %v586
        %vm700 = vcmp.eq.s32.totalorder %v308, %v589
        %vm701 = vcmp.eq.s32.totalorder %v309, %v589
        %vm702 = vcmp.eq.s32.totalorder %v310, %v589
        %vm703 = vcmp.eq.s32.totalorder %v311, %v589
        %vm704 = vcmp.eq.s32.totalorder %v308, %v592
        %vm705 = vcmp.eq.s32.totalorder %v309, %v592
        %vm706 = vcmp.eq.s32.totalorder %v310, %v592
        %vm707 = vcmp.eq.s32.totalorder %v311, %v592
        %vm708 = vcmp.eq.s32.totalorder %v308, %v595
        %vm709 = vcmp.eq.s32.totalorder %v309, %v595
        %vm710 = vcmp.eq.s32.totalorder %v310, %v595
        %vm711 = vcmp.eq.s32.totalorder %v311, %v595
        %vm712 = vcmp.eq.s32.totalorder %v308, %v598
        %vm713 = vcmp.eq.s32.totalorder %v309, %v598
        %vm714 = vcmp.eq.s32.totalorder %v310, %v598
        %vm715 = vcmp.eq.s32.totalorder %v311, %v598
        %vm716 = vcmp.eq.s32.totalorder %v308, %v601
        %vm717 = vcmp.eq.s32.totalorder %v309, %v601
        %vm718 = vcmp.eq.s32.totalorder %v310, %v601
        %vm719 = vcmp.eq.s32.totalorder %v311, %v601
        %vm720 = vcmp.eq.s32.totalorder %v308, %v604
        %vm721 = vcmp.eq.s32.totalorder %v309, %v604
        %vm722 = vcmp.eq.s32.totalorder %v310, %v604
        %vm723 = vcmp.eq.s32.totalorder %v311, %v604
        %vm724 = vcmp.eq.s32.totalorder %v308, %v607
        %vm725 = vcmp.eq.s32.totalorder %v309, %v607
        %vm726 = vcmp.eq.s32.totalorder %v310, %v607
        %vm727 = vcmp.eq.s32.totalorder %v311, %v607
        %vm728 = vcmp.eq.s32.totalorder %v308, %v610
        %vm729 = vcmp.eq.s32.totalorder %v309, %v610
        %vm730 = vcmp.eq.s32.totalorder %v310, %v610
        %vm731 = vcmp.eq.s32.totalorder %v311, %v610
        %vm732 = vcmp.eq.s32.totalorder %v308, %v613
        %vm733 = vcmp.eq.s32.totalorder %v309, %v613
        %vm734 = vcmp.eq.s32.totalorder %v310, %v613
        %vm735 = vcmp.eq.s32.totalorder %v311, %v613
        %vm736 = vcmp.eq.s32.totalorder %v308, %v616
        %vm737 = vcmp.eq.s32.totalorder %v309, %v616
        %vm738 = vcmp.eq.s32.totalorder %v310, %v616
        %vm739 = vcmp.eq.s32.totalorder %v311, %v616
        %vm740 = vcmp.eq.s32.totalorder %v308, %v619
        %vm741 = vcmp.eq.s32.totalorder %v309, %v619
        %vm742 = vcmp.eq.s32.totalorder %v310, %v619
        %vm743 = vcmp.eq.s32.totalorder %v311, %v619
        %vm744 = vcmp.eq.s32.totalorder %v308, %v622
        %vm745 = vcmp.eq.s32.totalorder %v309, %v622
        %vm746 = vcmp.eq.s32.totalorder %v310, %v622
        %vm747 = vcmp.eq.s32.totalorder %v311, %v622
        %vm748 = vcmp.eq.s32.totalorder %v308, %v625
        %vm749 = vcmp.eq.s32.totalorder %v309, %v625
        %vm750 = vcmp.eq.s32.totalorder %v310, %v625
        %vm751 = vcmp.eq.s32.totalorder %v311, %v625
        %vm752 = vcmp.eq.s32.totalorder %v308, %v628
        %vm753 = vcmp.eq.s32.totalorder %v309, %v628
        %vm754 = vcmp.eq.s32.totalorder %v310, %v628
        %vm755 = vcmp.eq.s32.totalorder %v311, %v628
        %vm756 = vcmp.eq.s32.totalorder %v308, %v631
        %vm757 = vcmp.eq.s32.totalorder %v309, %v631
        %vm758 = vcmp.eq.s32.totalorder %v310, %v631
        %vm759 = vcmp.eq.s32.totalorder %v311, %v631
        %vm760 = vmor %vm408, %vm632
        %vm761 = vmor %vm409, %vm633
        %vm762 = vmor %vm410, %vm634
        %vm763 = vmor %vm411, %vm635
        %vm764 = vmor %vm412, %vm636
        %vm765 = vmor %vm413, %vm637
        %vm766 = vmor %vm414, %vm638
        %vm767 = vmor %vm415, %vm639
        %vm768 = vmor %vm416, %vm640
        %vm769 = vmor %vm417, %vm641
        %vm770 = vmor %vm418, %vm642
        %vm771 = vmor %vm419, %vm643
        %vm772 = vmor %vm420, %vm644
        %vm773 = vmor %vm421, %vm645
        %vm774 = vmor %vm422, %vm646
        %vm775 = vmor %vm423, %vm647
        %vm776 = vmor %vm424, %vm648
        %vm777 = vmor %vm425, %vm649
        %vm778 = vmor %vm426, %vm650
        %vm779 = vmor %vm427, %vm651
        %vm780 = vmor %vm428, %vm652
        %vm781 = vmor %vm429, %vm653
        %vm782 = vmor %vm430, %vm654
        %vm783 = vmor %vm431, %vm655
        %vm784 = vmor %vm432, %vm656
        %vm785 = vmor %vm433, %vm657
        %vm786 = vmor %vm434, %vm658
        %vm787 = vmor %vm435, %vm659
        %vm788 = vmor %vm436, %vm660
        %vm789 = vmor %vm437, %vm661
        %vm790 = vmor %vm438, %vm662
        %vm791 = vmor %vm439, %vm663
        %vm792 = vmor %vm440, %vm664
        %vm793 = vmor %vm441, %vm665
        %vm794 = vmor %vm442, %vm666
        %vm795 = vmor %vm443, %vm667
        %vm796 = vmor %vm444, %vm668
        %vm797 = vmor %vm445, %vm669
        %vm798 = vmor %vm446, %vm670
        %vm799 = vmor %vm447, %vm671
        %vm800 = vmor %vm448, %vm672
        %vm801 = vmor %vm449, %vm673
        %vm802 = vmor %vm450, %vm674
        %vm803 = vmor %vm451, %vm675
        %vm804 = vmor %vm452, %vm676
        %vm805 = vmor %vm453, %vm677
        %vm806 = vmor %vm454, %vm678
        %vm807 = vmor %vm455, %vm679
        %vm808 = vmor %vm456, %vm680
        %vm809 = vmor %vm457, %vm681
        %vm810 = vmor %vm458, %vm682
        %vm811 = vmor %vm459, %vm683
        %vm812 = vmor %vm460, %vm684
        %vm813 = vmor %vm461, %vm685
        %vm814 = vmor %vm462, %vm686
        %vm815 = vmor %vm463, %vm687
        %vm816 = vmor %vm464, %vm688
        %vm817 = vmor %vm465, %vm689
        %vm818 = vmor %vm466, %vm690
        %vm819 = vmor %vm467, %vm691
        %vm820 = vmor %vm468, %vm692
        %vm821 = vmor %vm469, %vm693
        %vm822 = vmor %vm470, %vm694
        %vm823 = vmor %vm471, %vm695
        %vm824 = vmor %vm472, %vm696
        %vm825 = vmor %vm473, %vm697
        %vm826 = vmor %vm474, %vm698
        %vm827 = vmor %vm475, %vm699
        %vm828 = vmor %vm476, %vm700
        %vm829 = vmor %vm477, %vm701
        %vm830 = vmor %vm478, %vm702
        %vm831 = vmor %vm479, %vm703
        %vm832 = vmor %vm480, %vm704
        %vm833 = vmor %vm481, %vm705
        %vm834 = vmor %vm482, %vm706
        %vm835 = vmor %vm483, %vm707
        %vm836 = vmor %vm484, %vm708
        %vm837 = vmor %vm485, %vm709
        %vm838 = vmor %vm486, %vm710
        %vm839 = vmor %vm487, %vm711
        %vm840 = vmor %vm488, %vm712
        %vm841 = vmor %vm489, %vm713
        %vm842 = vmor %vm490, %vm714
        %vm843 = vmor %vm491, %vm715
        %vm844 = vmor %vm492, %vm716
        %vm845 = vmor %vm493, %vm717
        %vm846 = vmor %vm494, %vm718
        %vm847 = vmor %vm495, %vm719
        %vm848 = vmor %vm496, %vm720
        %vm849 = vmor %vm497, %vm721
        %vm850 = vmor %vm498, %vm722
        %vm851 = vmor %vm499, %vm723
        %vm852 = vmor %vm500, %vm724
        %vm853 = vmor %vm501, %vm725
        %vm854 = vmor %vm502, %vm726
        %vm855 = vmor %vm503, %vm727
        %vm856 = vmor %vm504, %vm728
        %vm857 = vmor %vm505, %vm729
        %vm858 = vmor %vm506, %vm730
        %vm859 = vmor %vm507, %vm731
        %vm860 = vmor %vm508, %vm732
        %vm861 = vmor %vm509, %vm733
        %vm862 = vmor %vm510, %vm734
        %vm863 = vmor %vm511, %vm735
        %vm864 = vmor %vm512, %vm736
        %vm865 = vmor %vm513, %vm737
        %vm866 = vmor %vm514, %vm738
        %vm867 = vmor %vm515, %vm739
        %vm868 = vmor %vm516, %vm740
        %vm869 = vmor %vm517, %vm741
        %vm870 = vmor %vm518, %vm742
        %vm871 = vmor %vm519, %vm743
        %vm872 = vmor %vm520, %vm744
        %vm873 = vmor %vm521, %vm745
        %vm874 = vmor %vm522, %vm746
        %vm875 = vmor %vm523, %vm747
        %vm876 = vmor %vm524, %vm748
        %vm877 = vmor %vm525, %vm749
        %vm878 = vmor %vm526, %vm750
        %vm879 = vmor %vm527, %vm751
        %vm880 = vmor %vm528, %vm752
        %vm881 = vmor %vm529, %vm753
        %vm882 = vmor %vm530, %vm754
        %vm883 = vmor %vm531, %vm755
        %vm884 = vmor %vm532, %vm756
        %vm885 = vmor %vm533, %vm757
        %vm886 = vmor %vm534, %vm758
        %vm887 = vmor %vm535, %vm759
        %v888 = vsel %vm760, 1, 0
        %v889 = vsel %vm761, 1, 0
        %v890 = vsel %vm762, 1, 0
        %v891 = vsel %vm763, 1, 0
        %v892 = vsel %vm764, 1, 0
        %v893 = vsel %vm765, 1, 0
        %v894 = vsel %vm766, 1, 0
        %v895 = vsel %vm767, 1, 0
        %v896 = vsel %vm768, 1, 0
        %v897 = vsel %vm769, 1, 0
        %v898 = vsel %vm770, 1, 0
        %v899 = vsel %vm771, 1, 0
        %v900 = vsel %vm772, 1, 0
        %v901 = vsel %vm773, 1, 0
        %v902 = vsel %vm774, 1, 0
        %v903 = vsel %vm775, 1, 0
        %v904 = vsel %vm776, 1, 0
        %v905 = vsel %vm777, 1, 0
        %v906 = vsel %vm778, 1, 0
        %v907 = vsel %vm779, 1, 0
        %v908 = vsel %vm780, 1, 0
        %v909 = vsel %vm781, 1, 0
        %v910 = vsel %vm782, 1, 0
        %v911 = vsel %vm783, 1, 0
        %v912 = vsel %vm784, 1, 0
        %v913 = vsel %vm785, 1, 0
        %v914 = vsel %vm786, 1, 0
        %v915 = vsel %vm787, 1, 0
        %v916 = vsel %vm788, 1, 0
        %v917 = vsel %vm789, 1, 0
        %v918 = vsel %vm790, 1, 0
        %v919 = vsel %vm791, 1, 0
        %v920 = vsel %vm792, 1, 0
        %v921 = vsel %vm793, 1, 0
        %v922 = vsel %vm794, 1, 0
        %v923 = vsel %vm795, 1, 0
        %v924 = vsel %vm796, 1, 0
        %v925 = vsel %vm797, 1, 0
        %v926 = vsel %vm798, 1, 0
        %v927 = vsel %vm799, 1, 0
        %v928 = vsel %vm800, 1, 0
        %v929 = vsel %vm801, 1, 0
        %v930 = vsel %vm802, 1, 0
        %v931 = vsel %vm803, 1, 0
        %v932 = vsel %vm804, 1, 0
        %v933 = vsel %vm805, 1, 0
        %v934 = vsel %vm806, 1, 0
        %v935 = vsel %vm807, 1, 0
        %v936 = vsel %vm808, 1, 0
        %v937 = vsel %vm809, 1, 0
        %v938 = vsel %vm810, 1, 0
        %v939 = vsel %vm811, 1, 0
        %v940 = vsel %vm812, 1, 0
        %v941 = vsel %vm813, 1, 0
        %v942 = vsel %vm814, 1, 0
        %v943 = vsel %vm815, 1, 0
        %v944 = vsel %vm816, 1, 0
        %v945 = vsel %vm817, 1, 0
        %v946 = vsel %vm818, 1, 0
        %v947 = vsel %vm819, 1, 0
        %v948 = vsel %vm820, 1, 0
        %v949 = vsel %vm821, 1, 0
        %v950 = vsel %vm822, 1, 0
        %v951 = vsel %vm823, 1, 0
        %v952 = vsel %vm824, 1, 0
        %v953 = vsel %vm825, 1, 0
        %v954 = vsel %vm826, 1, 0
        %v955 = vsel %vm827, 1, 0
        %v956 = vsel %vm828, 1, 0
        %v957 = vsel %vm829, 1, 0
        %v958 = vsel %vm830, 1, 0
        %v959 = vsel %vm831, 1, 0
        %v960 = vsel %vm832, 1, 0
        %v961 = vsel %vm833, 1, 0
        %v962 = vsel %vm834, 1, 0
        %v963 = vsel %vm835, 1, 0
        %v964 = vsel %vm836, 1, 0
        %v965 = vsel %vm837, 1, 0
        %v966 = vsel %vm838, 1, 0
        %v967 = vsel %vm839, 1, 0
        %v968 = vsel %vm840, 1, 0
        %v969 = vsel %vm841, 1, 0
        %v970 = vsel %vm842, 1, 0
        %v971 = vsel %vm843, 1, 0
        %v972 = vsel %vm844, 1, 0
        %v973 = vsel %vm845, 1, 0
        %v974 = vsel %vm846, 1, 0
        %v975 = vsel %vm847, 1, 0
        %v976 = vsel %vm848, 1, 0
        %v977 = vsel %vm849, 1, 0
        %v978 = vsel %vm850, 1, 0
        %v979 = vsel %vm851, 1, 0
        %v980 = vsel %vm852, 1, 0
        %v981 = vsel %vm853, 1, 0
        %v982 = vsel %vm854, 1, 0
        %v983 = vsel %vm855, 1, 0
        %v984 = vsel %vm856, 1, 0
        %v985 = vsel %vm857, 1, 0
        %v986 = vsel %vm858, 1, 0
        %v987 = vsel %vm859, 1, 0
        %v988 = vsel %vm860, 1, 0
        %v989 = vsel %vm861, 1, 0
        %v990 = vsel %vm862, 1, 0
        %v991 = vsel %vm863, 1, 0
        %v992 = vsel %vm864, 1, 0
        %v993 = vsel %vm865, 1, 0
        %v994 = vsel %vm866, 1, 0
        %v995 = vsel %vm867, 1, 0
        %v996 = vsel %vm868, 1, 0
        %v997 = vsel %vm869, 1, 0
        %v998 = vsel %vm870, 1, 0
        %v999 = vsel %vm871, 1, 0
        %v1000 = vsel %vm872, 1, 0
        %v1001 = vsel %vm873, 1, 0
        %v1002 = vsel %vm874, 1, 0
        %v1003 = vsel %vm875, 1, 0
        %v1004 = vsel %vm876, 1, 0
        %v1005 = vsel %vm877, 1, 0
        %v1006 = vsel %vm878, 1, 0
        %v1007 = vsel %vm879, 1, 0
        %v1008 = vsel %vm880, 1, 0
        %v1009 = vsel %vm881, 1, 0
        %v1010 = vsel %vm882, 1, 0
        %v1011 = vsel %vm883, 1, 0
        %v1012 = vsel %vm884, 1, 0
        %v1013 = vsel %vm885, 1, 0
        %v1014 = vsel %vm886, 1, 0
        %v1015 = vsel %vm887, 1, 0
        %v1016 = vcvt.s32.f32 %v888
        %v1017 = vcvt.s32.f32 %v889
        %v1018 = vcvt.s32.f32 %v890
        %v1019 = vcvt.s32.f32 %v891
        %v1020 = vcvt.s32.f32 %v892
        %v1021 = vcvt.s32.f32 %v893
        %v1022 = vcvt.s32.f32 %v894
        %v1023 = vcvt.s32.f32 %v895
        %v1024 = vcvt.s32.f32 %v896
        %v1025 = vcvt.s32.f32 %v897
        %v1026 = vcvt.s32.f32 %v898
        %v1027 = vcvt.s32.f32 %v899
        %v1028 = vcvt.s32.f32 %v900
        %v1029 = vcvt.s32.f32 %v901
        %v1030 = vcvt.s32.f32 %v902
        %v1031 = vcvt.s32.f32 %v903
        %v1032 = vcvt.s32.f32 %v904
        %v1033 = vcvt.s32.f32 %v905
        %v1034 = vcvt.s32.f32 %v906
        %v1035 = vcvt.s32.f32 %v907
        %v1036 = vcvt.s32.f32 %v908
        %v1037 = vcvt.s32.f32 %v909
        %v1038 = vcvt.s32.f32 %v910
        %v1039 = vcvt.s32.f32 %v911
        %v1040 = vcvt.s32.f32 %v912
        %v1041 = vcvt.s32.f32 %v913
        %v1042 = vcvt.s32.f32 %v914
        %v1043 = vcvt.s32.f32 %v915
        %v1044 = vcvt.s32.f32 %v916
        %v1045 = vcvt.s32.f32 %v917
        %v1046 = vcvt.s32.f32 %v918
        %v1047 = vcvt.s32.f32 %v919
        %v1048 = vcvt.s32.f32 %v920
        %v1049 = vcvt.s32.f32 %v921
        %v1050 = vcvt.s32.f32 %v922
        %v1051 = vcvt.s32.f32 %v923
        %v1052 = vcvt.s32.f32 %v924
        %v1053 = vcvt.s32.f32 %v925
        %v1054 = vcvt.s32.f32 %v926
        %v1055 = vcvt.s32.f32 %v927
        %v1056 = vcvt.s32.f32 %v928
        %v1057 = vcvt.s32.f32 %v929
        %v1058 = vcvt.s32.f32 %v930
        %v1059 = vcvt.s32.f32 %v931
        %v1060 = vcvt.s32.f32 %v932
        %v1061 = vcvt.s32.f32 %v933
        %v1062 = vcvt.s32.f32 %v934
        %v1063 = vcvt.s32.f32 %v935
        %v1064 = vcvt.s32.f32 %v936
        %v1065 = vcvt.s32.f32 %v937
        %v1066 = vcvt.s32.f32 %v938
        %v1067 = vcvt.s32.f32 %v939
        %v1068 = vcvt.s32.f32 %v940
        %v1069 = vcvt.s32.f32 %v941
        %v1070 = vcvt.s32.f32 %v942
        %v1071 = vcvt.s32.f32 %v943
        %v1072 = vcvt.s32.f32 %v944
        %v1073 = vcvt.s32.f32 %v945
        %v1074 = vcvt.s32.f32 %v946
        %v1075 = vcvt.s32.f32 %v947
        %v1076 = vcvt.s32.f32 %v948
        %v1077 = vcvt.s32.f32 %v949
        %v1078 = vcvt.s32.f32 %v950
        %v1079 = vcvt.s32.f32 %v951
        %v1080 = vcvt.s32.f32 %v952
        %v1081 = vcvt.s32.f32 %v953
        %v1082 = vcvt.s32.f32 %v954
        %v1083 = vcvt.s32.f32 %v955
        %v1084 = vcvt.s32.f32 %v956
        %v1085 = vcvt.s32.f32 %v957
        %v1086 = vcvt.s32.f32 %v958
        %v1087 = vcvt.s32.f32 %v959
        %v1088 = vcvt.s32.f32 %v960
        %v1089 = vcvt.s32.f32 %v961
        %v1090 = vcvt.s32.f32 %v962
        %v1091 = vcvt.s32.f32 %v963
        %v1092 = vcvt.s32.f32 %v964
        %v1093 = vcvt.s32.f32 %v965
        %v1094 = vcvt.s32.f32 %v966
        %v1095 = vcvt.s32.f32 %v967
        %v1096 = vcvt.s32.f32 %v968
        %v1097 = vcvt.s32.f32 %v969
        %v1098 = vcvt.s32.f32 %v970
        %v1099 = vcvt.s32.f32 %v971
        %v1100 = vcvt.s32.f32 %v972
        %v1101 = vcvt.s32.f32 %v973
        %v1102 = vcvt.s32.f32 %v974
        %v1103 = vcvt.s32.f32 %v975
        %v1104 = vcvt.s32.f32 %v976
        %v1105 = vcvt.s32.f32 %v977
        %v1106 = vcvt.s32.f32 %v978
        %v1107 = vcvt.s32.f32 %v979
        %v1108 = vcvt.s32.f32 %v980
        %v1109 = vcvt.s32.f32 %v981
        %v1110 = vcvt.s32.f32 %v982
        %v1111 = vcvt.s32.f32 %v983
        %v1112 = vcvt.s32.f32 %v984
        %v1113 = vcvt.s32.f32 %v985
        %v1114 = vcvt.s32.f32 %v986
        %v1115 = vcvt.s32.f32 %v987
        %v1116 = vcvt.s32.f32 %v988
        %v1117 = vcvt.s32.f32 %v989
        %v1118 = vcvt.s32.f32 %v990
        %v1119 = vcvt.s32.f32 %v991
        %v1120 = vcvt.s32.f32 %v992
        %v1121 = vcvt.s32.f32 %v993
        %v1122 = vcvt.s32.f32 %v994
        %v1123 = vcvt.s32.f32 %v995
        %v1124 = vcvt.s32.f32 %v996
        %v1125 = vcvt.s32.f32 %v997
        %v1126 = vcvt.s32.f32 %v998
        %v1127 = vcvt.s32.f32 %v999
        %v1128 = vcvt.s32.f32 %v1000
        %v1129 = vcvt.s32.f32 %v1001
        %v1130 = vcvt.s32.f32 %v1002
        %v1131 = vcvt.s32.f32 %v1003
        %v1132 = vcvt.s32.f32 %v1004
        %v1133 = vcvt.s32.f32 %v1005
        %v1134 = vcvt.s32.f32 %v1006
        %v1135 = vcvt.s32.f32 %v1007
        %v1136 = vcvt.s32.f32 %v1008
        %v1137 = vcvt.s32.f32 %v1009
        %v1138 = vcvt.s32.f32 %v1010
        %v1139 = vcvt.s32.f32 %v1011
        %v1140 = vcvt.s32.f32 %v1012
        %v1141 = vcvt.s32.f32 %v1013
        %v1142 = vcvt.s32.f32 %v1014
        %v1143 = vcvt.s32.f32 %v1015
        %v1144 = vld [vmem:[%s240] sm:$0xff]
        %v1145 = vld [vmem:[%s240 + $0x8] sm:$0xff]
        %v1146 = vld [vmem:[%s240 + $0x10] sm:$0xff]
        %v1147 = vld [vmem:[%s240 + $0x18] sm:$0xff]
        %v1148 = vld [vmem:[%s240 + $0x20] sm:$0xff]
        %v1149 = vld [vmem:[%s240 + $0x28] sm:$0xff]
        %v1150 = vld [vmem:[%s240 + $0x30] sm:$0xff]
        %v1151 = vld [vmem:[%s240 + $0x38] sm:$0xff]
        %v1152 = vld [vmem:[%s240 + $0x40] sm:$0xff]
        %v1153 = vld [vmem:[%s240 + $0x48] sm:$0xff]
        %v1154 = vld [vmem:[%s240 + $0x50] sm:$0xff]
        %v1155 = vld [vmem:[%s240 + $0x58] sm:$0xff]
        %v1156 = vld [vmem:[%s240 + $0x60] sm:$0xff]
        %v1157 = vld [vmem:[%s240 + $0x68] sm:$0xff]
        %v1158 = vld [vmem:[%s240 + $0x70] sm:$0xff]
        %v1159 = vld [vmem:[%s240 + $0x78] sm:$0xff]
        %v1160 = vld [vmem:[%s240 + $0x80] sm:$0xff]
        %v1161 = vld [vmem:[%s240 + $0x88] sm:$0xff]
        %v1162 = vld [vmem:[%s240 + $0x90] sm:$0xff]
        %v1163 = vld [vmem:[%s240 + $0x98] sm:$0xff]
        %v1164 = vld [vmem:[%s240 + $0xa0] sm:$0xff]
        %v1165 = vld [vmem:[%s240 + $0xa8] sm:$0xff]
        %v1166 = vld [vmem:[%s240 + $0xb0] sm:$0xff]
        %v1167 = vld [vmem:[%s240 + $0xb8] sm:$0xff]
        %v1168 = vld [vmem:[%s240 + $0xc0] sm:$0xff]
        %v1169 = vld [vmem:[%s240 + $0xc8] sm:$0xff]
        %v1170 = vld [vmem:[%s240 + $0xd0] sm:$0xff]
        %v1171 = vld [vmem:[%s240 + $0xd8] sm:$0xff]
        %v1172 = vld [vmem:[%s240 + $0xe0] sm:$0xff]
        %v1173 = vld [vmem:[%s240 + $0xe8] sm:$0xff]
        %v1174 = vld [vmem:[%s240 + $0xf0] sm:$0xff]
        %v1175 = vld [vmem:[%s240 + $0xf8] sm:$0xff]
        %1177 = vset.pattern.permute.xlu0 0
        %1178 = vperm.xlu0 %1177, %v1144
        %v1179 = vpop.permute.xlu0 %1178
        %1182 = vset.pattern.permute.xlu0 0
        %1183 = vperm.xlu0 %1182, %v1145
        %v1184 = vpop.permute.xlu0 %1183
        %1187 = vset.pattern.permute.xlu0 0
        %1188 = vperm.xlu0 %1187, %v1146
        %v1189 = vpop.permute.xlu0 %1188
        %1192 = vset.pattern.permute.xlu0 0
        %1193 = vperm.xlu0 %1192, %v1147
        %v1194 = vpop.permute.xlu0 %1193
        %1197 = vset.pattern.permute.xlu0 0
        %1198 = vperm.xlu0 %1197, %v1148
        %v1199 = vpop.permute.xlu0 %1198
        %1202 = vset.pattern.permute.xlu0 0
        %1203 = vperm.xlu0 %1202, %v1149
        %v1204 = vpop.permute.xlu0 %1203
        %1207 = vset.pattern.permute.xlu0 0
        %1208 = vperm.xlu0 %1207, %v1150
        %v1209 = vpop.permute.xlu0 %1208
        %1212 = vset.pattern.permute.xlu0 0
        %1213 = vperm.xlu0 %1212, %v1151
        %v1214 = vpop.permute.xlu0 %1213
        %1217 = vset.pattern.permute.xlu0 0
        %1218 = vperm.xlu0 %1217, %v1152
        %v1219 = vpop.permute.xlu0 %1218
        %1222 = vset.pattern.permute.xlu0 0
        %1223 = vperm.xlu0 %1222, %v1153
        %v1224 = vpop.permute.xlu0 %1223
        %1227 = vset.pattern.permute.xlu0 0
        %1228 = vperm.xlu0 %1227, %v1154
        %v1229 = vpop.permute.xlu0 %1228
        %1232 = vset.pattern.permute.xlu0 0
        %1233 = vperm.xlu0 %1232, %v1155
        %v1234 = vpop.permute.xlu0 %1233
        %1237 = vset.pattern.permute.xlu0 0
        %1238 = vperm.xlu0 %1237, %v1156
        %v1239 = vpop.permute.xlu0 %1238
        %1242 = vset.pattern.permute.xlu0 0
        %1243 = vperm.xlu0 %1242, %v1157
        %v1244 = vpop.permute.xlu0 %1243
        %1247 = vset.pattern.permute.xlu0 0
        %1248 = vperm.xlu0 %1247, %v1158
        %v1249 = vpop.permute.xlu0 %1248
        %1252 = vset.pattern.permute.xlu0 0
        %1253 = vperm.xlu0 %1252, %v1159
        %v1254 = vpop.permute.xlu0 %1253
        %1257 = vset.pattern.permute.xlu0 0
        %1258 = vperm.xlu0 %1257, %v1160
        %v1259 = vpop.permute.xlu0 %1258
        %1262 = vset.pattern.permute.xlu0 0
        %1263 = vperm.xlu0 %1262, %v1161
        %v1264 = vpop.permute.xlu0 %1263
        %1267 = vset.pattern.permute.xlu0 0
        %1268 = vperm.xlu0 %1267, %v1162
        %v1269 = vpop.permute.xlu0 %1268
        %1272 = vset.pattern.permute.xlu0 0
        %1273 = vperm.xlu0 %1272, %v1163
        %v1274 = vpop.permute.xlu0 %1273
        %1277 = vset.pattern.permute.xlu0 0
        %1278 = vperm.xlu0 %1277, %v1164
        %v1279 = vpop.permute.xlu0 %1278
        %1282 = vset.pattern.permute.xlu0 0
        %1283 = vperm.xlu0 %1282, %v1165
        %v1284 = vpop.permute.xlu0 %1283
        %1287 = vset.pattern.permute.xlu0 0
        %1288 = vperm.xlu0 %1287, %v1166
        %v1289 = vpop.permute.xlu0 %1288
        %1292 = vset.pattern.permute.xlu0 0
        %1293 = vperm.xlu0 %1292, %v1167
        %v1294 = vpop.permute.xlu0 %1293
        %1297 = vset.pattern.permute.xlu0 0
        %1298 = vperm.xlu0 %1297, %v1168
        %v1299 = vpop.permute.xlu0 %1298
        %1302 = vset.pattern.permute.xlu0 0
        %1303 = vperm.xlu0 %1302, %v1169
        %v1304 = vpop.permute.xlu0 %1303
        %1307 = vset.pattern.permute.xlu0 0
        %1308 = vperm.xlu0 %1307, %v1170
        %v1309 = vpop.permute.xlu0 %1308
        %1312 = vset.pattern.permute.xlu0 0
        %1313 = vperm.xlu0 %1312, %v1171
        %v1314 = vpop.permute.xlu0 %1313
        %1317 = vset.pattern.permute.xlu0 0
        %1318 = vperm.xlu0 %1317, %v1172
        %v1319 = vpop.permute.xlu0 %1318
        %1322 = vset.pattern.permute.xlu0 0
        %1323 = vperm.xlu0 %1322, %v1173
        %v1324 = vpop.permute.xlu0 %1323
        %1327 = vset.pattern.permute.xlu0 0
        %1328 = vperm.xlu0 %1327, %v1174
        %v1329 = vpop.permute.xlu0 %1328
        %1332 = vset.pattern.permute.xlu0 0
        %1333 = vperm.xlu0 %1332, %v1175
        %v1334 = vpop.permute.xlu0 %1333
        %v1336 = vmul.f32 %v1016, %v1179
        %v1337 = vmul.f32 %v1017, %v1179
        %v1338 = vmul.f32 %v1018, %v1179
        %v1339 = vmul.f32 %v1019, %v1179
        %v1340 = vmul.f32 %v1020, %v1184
        %v1341 = vmul.f32 %v1021, %v1184
        %v1342 = vmul.f32 %v1022, %v1184
        %v1343 = vmul.f32 %v1023, %v1184
        %v1344 = vmul.f32 %v1024, %v1189
        %v1345 = vmul.f32 %v1025, %v1189
        %v1346 = vmul.f32 %v1026, %v1189
        %v1347 = vmul.f32 %v1027, %v1189
        %v1348 = vmul.f32 %v1028, %v1194
        %v1349 = vmul.f32 %v1029, %v1194
        %v1350 = vmul.f32 %v1030, %v1194
        %v1351 = vmul.f32 %v1031, %v1194
        %v1352 = vmul.f32 %v1032, %v1199
        %v1353 = vmul.f32 %v1033, %v1199
        %v1354 = vmul.f32 %v1034, %v1199
        %v1355 = vmul.f32 %v1035, %v1199
        %v1356 = vmul.f32 %v1036, %v1204
        %v1357 = vmul.f32 %v1037, %v1204
        %v1358 = vmul.f32 %v1038, %v1204
        %v1359 = vmul.f32 %v1039, %v1204
        %v1360 = vmul.f32 %v1040, %v1209
        %v1361 = vmul.f32 %v1041, %v1209
        %v1362 = vmul.f32 %v1042, %v1209
        %v1363 = vmul.f32 %v1043, %v1209
        %v1364 = vmul.f32 %v1044, %v1214
        %v1365 = vmul.f32 %v1045, %v1214
        %v1366 = vmul.f32 %v1046, %v1214
        %v1367 = vmul.f32 %v1047, %v1214
        %v1368 = vmul.f32 %v1048, %v1219
        %v1369 = vmul.f32 %v1049, %v1219
        %v1370 = vmul.f32 %v1050, %v1219
        %v1371 = vmul.f32 %v1051, %v1219
        %v1372 = vmul.f32 %v1052, %v1224
        %v1373 = vmul.f32 %v1053, %v1224
        %v1374 = vmul.f32 %v1054, %v1224
        %v1375 = vmul.f32 %v1055, %v1224
        %v1376 = vmul.f32 %v1056, %v1229
        %v1377 = vmul.f32 %v1057, %v1229
        %v1378 = vmul.f32 %v1058, %v1229
        %v1379 = vmul.f32 %v1059, %v1229
        %v1380 = vmul.f32 %v1060, %v1234
        %v1381 = vmul.f32 %v1061, %v1234
        %v1382 = vmul.f32 %v1062, %v1234
        %v1383 = vmul.f32 %v1063, %v1234
        %v1384 = vmul.f32 %v1064, %v1239
        %v1385 = vmul.f32 %v1065, %v1239
        %v1386 = vmul.f32 %v1066, %v1239
        %v1387 = vmul.f32 %v1067, %v1239
        %v1388 = vmul.f32 %v1068, %v1244
        %v1389 = vmul.f32 %v1069, %v1244
        %v1390 = vmul.f32 %v1070, %v1244
        %v1391 = vmul.f32 %v1071, %v1244
        %v1392 = vmul.f32 %v1072, %v1249
        %v1393 = vmul.f32 %v1073, %v1249
        %v1394 = vmul.f32 %v1074, %v1249
        %v1395 = vmul.f32 %v1075, %v1249
        %v1396 = vmul.f32 %v1076, %v1254
        %v1397 = vmul.f32 %v1077, %v1254
        %v1398 = vmul.f32 %v1078, %v1254
        %v1399 = vmul.f32 %v1079, %v1254
        %v1400 = vmul.f32 %v1080, %v1259
        %v1401 = vmul.f32 %v1081, %v1259
        %v1402 = vmul.f32 %v1082, %v1259
        %v1403 = vmul.f32 %v1083, %v1259
        %v1404 = vmul.f32 %v1084, %v1264
        %v1405 = vmul.f32 %v1085, %v1264
        %v1406 = vmul.f32 %v1086, %v1264
        %v1407 = vmul.f32 %v1087, %v1264
        %v1408 = vmul.f32 %v1088, %v1269
        %v1409 = vmul.f32 %v1089, %v1269
        %v1410 = vmul.f32 %v1090, %v1269
        %v1411 = vmul.f32 %v1091, %v1269
        %v1412 = vmul.f32 %v1092, %v1274
        %v1413 = vmul.f32 %v1093, %v1274
        %v1414 = vmul.f32 %v1094, %v1274
        %v1415 = vmul.f32 %v1095, %v1274
        %v1416 = vmul.f32 %v1096, %v1279
        %v1417 = vmul.f32 %v1097, %v1279
        %v1418 = vmul.f32 %v1098, %v1279
        %v1419 = vmul.f32 %v1099, %v1279
        %v1420 = vmul.f32 %v1100, %v1284
        %v1421 = vmul.f32 %v1101, %v1284
        %v1422 = vmul.f32 %v1102, %v1284
        %v1423 = vmul.f32 %v1103, %v1284
        %v1424 = vmul.f32 %v1104, %v1289
        %v1425 = vmul.f32 %v1105, %v1289
        %v1426 = vmul.f32 %v1106, %v1289
        %v1427 = vmul.f32 %v1107, %v1289
        %v1428 = vmul.f32 %v1108, %v1294
        %v1429 = vmul.f32 %v1109, %v1294
        %v1430 = vmul.f32 %v1110, %v1294
        %v1431 = vmul.f32 %v1111, %v1294
        %v1432 = vmul.f32 %v1112, %v1299
        %v1433 = vmul.f32 %v1113, %v1299
        %v1434 = vmul.f32 %v1114, %v1299
        %v1435 = vmul.f32 %v1115, %v1299
        %v1436 = vmul.f32 %v1116, %v1304
        %v1437 = vmul.f32 %v1117, %v1304
        %v1438 = vmul.f32 %v1118, %v1304
        %v1439 = vmul.f32 %v1119, %v1304
        %v1440 = vmul.f32 %v1120, %v1309
        %v1441 = vmul.f32 %v1121, %v1309
        %v1442 = vmul.f32 %v1122, %v1309
        %v1443 = vmul.f32 %v1123, %v1309
        %v1444 = vmul.f32 %v1124, %v1314
        %v1445 = vmul.f32 %v1125, %v1314
        %v1446 = vmul.f32 %v1126, %v1314
        %v1447 = vmul.f32 %v1127, %v1314
        %v1448 = vmul.f32 %v1128, %v1319
        %v1449 = vmul.f32 %v1129, %v1319
        %v1450 = vmul.f32 %v1130, %v1319
        %v1451 = vmul.f32 %v1131, %v1319
        %v1452 = vmul.f32 %v1132, %v1324
        %v1453 = vmul.f32 %v1133, %v1324
        %v1454 = vmul.f32 %v1134, %v1324
        %v1455 = vmul.f32 %v1135, %v1324
        %v1456 = vmul.f32 %v1136, %v1329
        %v1457 = vmul.f32 %v1137, %v1329
        %v1458 = vmul.f32 %v1138, %v1329
        %v1459 = vmul.f32 %v1139, %v1329
        %v1460 = vmul.f32 %v1140, %v1334
        %v1461 = vmul.f32 %v1141, %v1334
        %v1462 = vmul.f32 %v1142, %v1334
        %v1463 = vmul.f32 %v1143, %v1334
        %v1464 = vld [vmem:[%s3] sm:$0xff]
        %v1465 = vld [vmem:[%s3 + $0x8] sm:$0xff]
        %v1466 = vld [vmem:[%s3 + $0x10] sm:$0xff]
        %v1467 = vld [vmem:[%s3 + $0x18] sm:$0xff]
        %v1468 = vld [vmem:[%s3 + $0x20] sm:$0xff]
        %v1469 = vld [vmem:[%s3 + $0x28] sm:$0xff]
        %v1470 = vld [vmem:[%s3 + $0x30] sm:$0xff]
        %v1471 = vld [vmem:[%s3 + $0x38] sm:$0xff]
        %v1472 = vld [vmem:[%s3 + $0x40] sm:$0xff]
        %v1473 = vld [vmem:[%s3 + $0x48] sm:$0xff]
        %v1474 = vld [vmem:[%s3 + $0x50] sm:$0xff]
        %v1475 = vld [vmem:[%s3 + $0x58] sm:$0xff]
        %v1476 = vld [vmem:[%s3 + $0x60] sm:$0xff]
        %v1477 = vld [vmem:[%s3 + $0x68] sm:$0xff]
        %v1478 = vld [vmem:[%s3 + $0x70] sm:$0xff]
        %v1479 = vld [vmem:[%s3 + $0x78] sm:$0xff]
        %v1480 = vld [vmem:[%s3 + $0x80] sm:$0xff]
        %v1481 = vld [vmem:[%s3 + $0x88] sm:$0xff]
        %v1482 = vld [vmem:[%s3 + $0x90] sm:$0xff]
        %v1483 = vld [vmem:[%s3 + $0x98] sm:$0xff]
        %v1484 = vld [vmem:[%s3 + $0xa0] sm:$0xff]
        %v1485 = vld [vmem:[%s3 + $0xa8] sm:$0xff]
        %v1486 = vld [vmem:[%s3 + $0xb0] sm:$0xff]
        %v1487 = vld [vmem:[%s3 + $0xb8] sm:$0xff]
        %v1488 = vld [vmem:[%s3 + $0xc0] sm:$0xff]
        %v1489 = vld [vmem:[%s3 + $0xc8] sm:$0xff]
        %v1490 = vld [vmem:[%s3 + $0xd0] sm:$0xff]
        %v1491 = vld [vmem:[%s3 + $0xd8] sm:$0xff]
        %v1492 = vld [vmem:[%s3 + $0xe0] sm:$0xff]
        %v1493 = vld [vmem:[%s3 + $0xe8] sm:$0xff]
        %v1494 = vld [vmem:[%s3 + $0xf0] sm:$0xff]
        %v1495 = vld [vmem:[%s3 + $0xf8] sm:$0xff]
        %v1496 = vld [vmem:[%s3 + $0x100] sm:$0xff]
        %v1497 = vld [vmem:[%s3 + $0x108] sm:$0xff]
        %v1498 = vld [vmem:[%s3 + $0x110] sm:$0xff]
        %v1499 = vld [vmem:[%s3 + $0x118] sm:$0xff]
        %v1500 = vld [vmem:[%s3 + $0x120] sm:$0xff]
        %v1501 = vld [vmem:[%s3 + $0x128] sm:$0xff]
        %v1502 = vld [vmem:[%s3 + $0x130] sm:$0xff]
        %v1503 = vld [vmem:[%s3 + $0x138] sm:$0xff]
        %v1504 = vld [vmem:[%s3 + $0x140] sm:$0xff]
        %v1505 = vld [vmem:[%s3 + $0x148] sm:$0xff]
        %v1506 = vld [vmem:[%s3 + $0x150] sm:$0xff]
        %v1507 = vld [vmem:[%s3 + $0x158] sm:$0xff]
        %v1508 = vld [vmem:[%s3 + $0x160] sm:$0xff]
        %v1509 = vld [vmem:[%s3 + $0x168] sm:$0xff]
        %v1510 = vld [vmem:[%s3 + $0x170] sm:$0xff]
        %v1511 = vld [vmem:[%s3 + $0x178] sm:$0xff]
        %v1512 = vld [vmem:[%s3 + $0x180] sm:$0xff]
        %v1513 = vld [vmem:[%s3 + $0x188] sm:$0xff]
        %v1514 = vld [vmem:[%s3 + $0x190] sm:$0xff]
        %v1515 = vld [vmem:[%s3 + $0x198] sm:$0xff]
        %v1516 = vld [vmem:[%s3 + $0x1a0] sm:$0xff]
        %v1517 = vld [vmem:[%s3 + $0x1a8] sm:$0xff]
        %v1518 = vld [vmem:[%s3 + $0x1b0] sm:$0xff]
        %v1519 = vld [vmem:[%s3 + $0x1b8] sm:$0xff]
        %v1520 = vld [vmem:[%s3 + $0x1c0] sm:$0xff]
        %v1521 = vld [vmem:[%s3 + $0x1c8] sm:$0xff]
        %v1522 = vld [vmem:[%s3 + $0x1d0] sm:$0xff]
        %v1523 = vld [vmem:[%s3 + $0x1d8] sm:$0xff]
        %v1524 = vld [vmem:[%s3 + $0x1e0] sm:$0xff]
        %v1525 = vld [vmem:[%s3 + $0x1e8] sm:$0xff]
        %v1526 = vld [vmem:[%s3 + $0x1f0] sm:$0xff]
        %v1527 = vld [vmem:[%s3 + $0x1f8] sm:$0xff]
        %1528 = vmatprep.subr.mxu0 0.0
        %1529 = vmatpush1.msra.mxu0 %v1464
        %1530 = vmatprep.subr.mxu0 0.0
        %1531 = vmatpush1.msra.mxu0 %v1465
        %1532 = vmatprep.subr.mxu0 0.0
        %1533 = vmatpush1.msra.mxu0 %v1466
        %1534 = vmatprep.subr.mxu0 0.0
        %1535 = vmatpush1.msra.mxu0 %v1467
        %1536 = vmatprep.subr.mxu0 0.0
        %1537 = vmatpush1.msra.mxu0 %v1468
        %1538 = vmatprep.subr.mxu0 0.0
        %1539 = vmatpush1.msra.mxu0 %v1469
        %1540 = vmatprep.subr.mxu0 0.0
        %1541 = vmatpush1.msra.mxu0 %v1470
        %1542 = vmatprep.subr.mxu0 0.0
        %1543 = vmatpush1.msra.mxu0 %v1471
        %1544 = vmatprep.subr.mxu0 0.0
        %1545 = vmatpush1.msra.mxu0 %v1472
        %1546 = vmatprep.subr.mxu0 0.0
        %1547 = vmatpush1.msra.mxu0 %v1473
        %1548 = vmatprep.subr.mxu0 0.0
        %1549 = vmatpush1.msra.mxu0 %v1474
        %1550 = vmatprep.subr.mxu0 0.0
        %1551 = vmatpush1.msra.mxu0 %v1475
        %1552 = vmatprep.subr.mxu0 0.0
        %1553 = vmatpush1.msra.mxu0 %v1476
        %1554 = vmatprep.subr.mxu0 0.0
        %1555 = vmatpush1.msra.mxu0 %v1477
        %1556 = vmatprep.subr.mxu0 0.0
        %1557 = vmatpush1.msra.mxu0 %v1478
        %1558 = vmatprep.subr.mxu0 0.0
        %1559 = vmatpush1.msra.mxu0 %v1479
        %1560 = vmatprep.subr.mxu0 0.0
        %1561 = vmatpush1.msra.mxu0 %v1480
        %1562 = vmatprep.subr.mxu0 0.0
        %1563 = vmatpush1.msra.mxu0 %v1481
        %1564 = vmatprep.subr.mxu0 0.0
        %1565 = vmatpush1.msra.mxu0 %v1482
        %1566 = vmatprep.subr.mxu0 0.0
        %1567 = vmatpush1.msra.mxu0 %v1483
        %1568 = vmatprep.subr.mxu0 0.0
        %1569 = vmatpush1.msra.mxu0 %v1484
        %1570 = vmatprep.subr.mxu0 0.0
        %1571 = vmatpush1.msra.mxu0 %v1485
        %1572 = vmatprep.subr.mxu0 0.0
        %1573 = vmatpush1.msra.mxu0 %v1486
        %1574 = vmatprep.subr.mxu0 0.0
        %1575 = vmatpush1.msra.mxu0 %v1487
        %1576 = vmatprep.subr.mxu0 0.0
        %1577 = vmatpush1.msra.mxu0 %v1488
        %1578 = vmatprep.subr.mxu0 0.0
        %1579 = vmatpush1.msra.mxu0 %v1489
        %1580 = vmatprep.subr.mxu0 0.0
        %1581 = vmatpush1.msra.mxu0 %v1490
        %1582 = vmatprep.subr.mxu0 0.0
        %1583 = vmatpush1.msra.mxu0 %v1491
        %1584 = vmatprep.subr.mxu0 0.0
        %1585 = vmatpush1.msra.mxu0 %v1492
        %1586 = vmatprep.subr.mxu0 0.0
        %1587 = vmatpush1.msra.mxu0 %v1493
        %1588 = vmatprep.subr.mxu0 0.0
        %1589 = vmatpush1.msra.mxu0 %v1494
        %1590 = vmatprep.subr.mxu0 0.0
        %1591 = vmatpush1.msra.mxu0 %v1495
        %1592 = vmatprep.mubr.f32.mxu0 %v1337
        %1593 = vmatmul.mubr.f32.gmra.mrb[0].mxu0 %v1336
        %v1594 = vpop.f32.mrb[0].mxu0
        %v1595 = vadd.f32 0.0, %v1594
        %v1596 = vpop.f32.mrb[0].mxu0
        %1597 = vmatprep.mubr.f32.mxu0 %v1341
        %1598 = vmatmul.mubr.f32.gmra.mrb[0].mxu0 %v1340
        %v1599 = vpop.f32.mrb[0].mxu0
        %v1600 = vadd.f32 0.0, %v1599
        %v1601 = vpop.f32.mrb[0].mxu0
        %1602 = vmatprep.mubr.f32.mxu0 %v1345
        %1603 = vmatmul.mubr.f32.gmra.mrb[0].mxu0 %v1344
        %v1604 = vpop.f32.mrb[0].mxu0
        %v1605 = vadd.f32 0.0, %v1604
        %v1606 = vpop.f32.mrb[0].mxu0
        %1607 = vmatprep.mubr.f32.mxu0 %v1349
        %1608 = vmatmul.mubr.f32.gmra.mrb[0].mxu0 %v1348
        %v1609 = vpop.f32.mrb[0].mxu0
        %v1610 = vadd.f32 0.0, %v1609
        %v1611 = vpop.f32.mrb[0].mxu0
        %1612 = vmatprep.mubr.f32.mxu0 %v1353
        %1613 = vmatmul.mubr.f32.gmra.mrb[0].mxu0 %v1352
        %v1614 = vpop.f32.mrb[0].mxu0
        %v1615 = vadd.f32 0.0, %v1614
        %v1616 = vpop.f32.mrb[0].mxu0
        %1617 = vmatprep.mubr.f32.mxu0 %v1357
        %1618 = vmatmul.mubr.f32.gmra.mrb[0].mxu0 %v1356
        %v1619 = vpop.f32.mrb[0].mxu0
        %v1620 = vadd.f32 0.0, %v1619
        %v1621 = vpop.f32.mrb[0].mxu0
        %1622 = vmatprep.mubr.f32.mxu0 %v1361
        %1623 = vmatmul.mubr.f32.gmra.mrb[0].mxu0 %v1360
        %v1624 = vpop.f32.mrb[0].mxu0
        %v1625 = vadd.f32 0.0, %v1624
        %v1626 = vpop.f32.mrb[0].mxu0
        %1627 = vmatprep.mubr.f32.mxu0 %v1365
        %1628 = vmatmul.mubr.f32.gmra.mrb[0].mxu0 %v1364
        %v1629 = vpop.f32.mrb[0].mxu0
        %v1630 = vadd.f32 0.0, %v1629
        %v1631 = vpop.f32.mrb[0].mxu0
        %1632 = vmatprep.mubr.f32.mxu0 %v1369
        %1633 = vmatmul.mubr.f32.gmra.mrb[0].mxu0 %v1368
        %v1634 = vpop.f32.mrb[0].mxu0
        %v1635 = vadd.f32 0.0, %v1634
        %v1636 = vpop.f32.mrb[0].mxu0
        %1637 = vmatprep.mubr.f32.mxu0 %v1373
        %1638 = vmatmul.mubr.f32.gmra.mrb[0].mxu0 %v1372
        %v1639 = vpop.f32.mrb[0].mxu0
        %v1640 = vadd.f32 0.0, %v1639
        %v1641 = vpop.f32.mrb[0].mxu0
        %1642 = vmatprep.mubr.f32.mxu0 %v1377
        %1643 = vmatmul.mubr.f32.gmra.mrb[0].mxu0 %v1376
        %v1644 = vpop.f32.mrb[0].mxu0
        %v1645 = vadd.f32 0.0, %v1644
        %v1646 = vpop.f32.mrb[0].mxu0
        %1647 = vmatprep.mubr.f32.mxu0 %v1381
        %1648 = vmatmul.mubr.f32.gmra.mrb[0].mxu0 %v1380
        %v1649 = vpop.f32.mrb[0].mxu0
        %v1650 = vadd.f32 0.0, %v1649
        %v1651 = vpop.f32.mrb[0].mxu0
        %1652 = vmatprep.mubr.f32.mxu0 %v1385
        %1653 = vmatmul.mubr.f32.gmra.mrb[0].mxu0 %v1384
        %v1654 = vpop.f32.mrb[0].mxu0
        %v1655 = vadd.f32 0.0, %v1654
        %v1656 = vpop.f32.mrb[0].mxu0
        %1657 = vmatprep.mubr.f32.mxu0 %v1389
        %1658 = vmatmul.mubr.f32.gmra.mrb[0].mxu0 %v1388
        %v1659 = vpop.f32.mrb[0].mxu0
        %v1660 = vadd.f32 0.0, %v1659
        %v1661 = vpop.f32.mrb[0].mxu0
        %1662 = vmatprep.mubr.f32.mxu0 %v1393
        %1663 = vmatmul.mubr.f32.gmra.mrb[0].mxu0 %v1392
        %v1664 = vpop.f32.mrb[0].mxu0
        %v1665 = vadd.f32 0.0, %v1664
        %v1666 = vpop.f32.mrb[0].mxu0
        %1667 = vmatprep.mubr.f32.mxu0 %v1397
        %1668 = vmatmul.mubr.f32.gmra.mrb[0].mxu0 %v1396
        %v1669 = vpop.f32.mrb[0].mxu0
        %v1670 = vadd.f32 0.0, %v1669
        %v1671 = vpop.f32.mrb[0].mxu0
        %1672 = vmatprep.mubr.f32.mxu0 %v1401
        %1673 = vmatmul.mubr.f32.gmra.mrb[0].mxu0 %v1400
        %v1674 = vpop.f32.mrb[0].mxu0
        %v1675 = vadd.f32 0.0, %v1674
        %v1676 = vpop.f32.mrb[0].mxu0
        %1677 = vmatprep.mubr.f32.mxu0 %v1405
        %1678 = vmatmul.mubr.f32.gmra.mrb[0].mxu0 %v1404
        %v1679 = vpop.f32.mrb[0].mxu0
        %v1680 = vadd.f32 0.0, %v1679
        %v1681 = vpop.f32.mrb[0].mxu0
        %1682 = vmatprep.mubr.f32.mxu0 %v1409
        %1683 = vmatmul.mubr.f32.gmra.mrb[0].mxu0 %v1408
        %v1684 = vpop.f32.mrb[0].mxu0
        %v1685 = vadd.f32 0.0, %v1684
        %v1686 = vpop.f32.mrb[0].mxu0
        %1687 = vmatprep.mubr.f32.mxu0 %v1413
        %1688 = vmatmul.mubr.f32.gmra.mrb[0].mxu0 %v1412
        %v1689 = vpop.f32.mrb[0].mxu0
        %v1690 = vadd.f32 0.0, %v1689
        %v1691 = vpop.f32.mrb[0].mxu0
        %1692 = vmatprep.mubr.f32.mxu0 %v1417
        %1693 = vmatmul.mubr.f32.gmra.mrb[0].mxu0 %v1416
        %v1694 = vpop.f32.mrb[0].mxu0
        %v1695 = vadd.f32 0.0, %v1694
        %v1696 = vpop.f32.mrb[0].mxu0
        %1697 = vmatprep.mubr.f32.mxu0 %v1421
        %1698 = vmatmul.mubr.f32.gmra.mrb[0].mxu0 %v1420
        %v1699 = vpop.f32.mrb[0].mxu0
        %v1700 = vadd.f32 0.0, %v1699
        %v1701 = vpop.f32.mrb[0].mxu0
        %1702 = vmatprep.mubr.f32.mxu0 %v1425
        %1703 = vmatmul.mubr.f32.gmra.mrb[0].mxu0 %v1424
        %v1704 = vpop.f32.mrb[0].mxu0
        %v1705 = vadd.f32 0.0, %v1704
        %v1706 = vpop.f32.mrb[0].mxu0
        %1707 = vmatprep.mubr.f32.mxu0 %v1429
        %1708 = vmatmul.mubr.f32.gmra.mrb[0].mxu0 %v1428
        %v1709 = vpop.f32.mrb[0].mxu0
        %v1710 = vadd.f32 0.0, %v1709
        %v1711 = vpop.f32.mrb[0].mxu0
        %1712 = vmatprep.mubr.f32.mxu0 %v1433
        %1713 = vmatmul.mubr.f32.gmra.mrb[0].mxu0 %v1432
        %v1714 = vpop.f32.mrb[0].mxu0
        %v1715 = vadd.f32 0.0, %v1714
        %v1716 = vpop.f32.mrb[0].mxu0
        %1717 = vmatprep.mubr.f32.mxu0 %v1437
        %1718 = vmatmul.mubr.f32.gmra.mrb[0].mxu0 %v1436
        %v1719 = vpop.f32.mrb[0].mxu0
        %v1720 = vadd.f32 0.0, %v1719
        %v1721 = vpop.f32.mrb[0].mxu0
        %1722 = vmatprep.mubr.f32.mxu0 %v1441
        %1723 = vmatmul.mubr.f32.gmra.mrb[0].mxu0 %v1440
        %v1724 = vpop.f32.mrb[0].mxu0
        %v1725 = vadd.f32 0.0, %v1724
        %v1726 = vpop.f32.mrb[0].mxu0
        %1727 = vmatprep.mubr.f32.mxu0 %v1445
        %1728 = vmatmul.mubr.f32.gmra.mrb[0].mxu0 %v1444
        %v1729 = vpop.f32.mrb[0].mxu0
        %v1730 = vadd.f32 0.0, %v1729
        %v1731 = vpop.f32.mrb[0].mxu0
        %1732 = vmatprep.mubr.f32.mxu0 %v1449
        %1733 = vmatmul.mubr.f32.gmra.mrb[0].mxu0 %v1448
        %v1734 = vpop.f32.mrb[0].mxu0
        %v1735 = vadd.f32 0.0, %v1734
        %v1736 = vpop.f32.mrb[0].mxu0
        %1737 = vmatprep.mubr.f32.mxu0 %v1453
        %1738 = vmatmul.mubr.f32.gmra.mrb[0].mxu0 %v1452
        %v1739 = vpop.f32.mrb[0].mxu0
        %v1740 = vadd.f32 0.0, %v1739
        %v1741 = vpop.f32.mrb[0].mxu0
        %1742 = vmatprep.mubr.f32.mxu0 %v1457
        %1743 = vmatmul.mubr.f32.gmra.mrb[0].mxu0 %v1456
        %v1744 = vpop.f32.mrb[0].mxu0
        %v1745 = vadd.f32 0.0, %v1744
        %v1746 = vpop.f32.mrb[0].mxu0
        %1747 = vmatprep.mubr.f32.mxu0 %v1461
        %1748 = vmatmul.mubr.f32.gmra.mrb[0].mxu0 %v1460
        %v1749 = vpop.f32.mrb[0].mxu0
        %v1750 = vadd.f32 0.0, %v1749
        %v1751 = vpop.f32.mrb[0].mxu0
        %1752 = vdwg.mxu0
        %1753 = vmatprep.subr.mxu0 0.0
        %1754 = vmatpush1.msra.mxu0 %v1496
        %1755 = vmatprep.subr.mxu0 0.0
        %1756 = vmatpush1.msra.mxu0 %v1497
        %1757 = vmatprep.subr.mxu0 0.0
        %1758 = vmatpush1.msra.mxu0 %v1498
        %1759 = vmatprep.subr.mxu0 0.0
        %1760 = vmatpush1.msra.mxu0 %v1499
        %1761 = vmatprep.subr.mxu0 0.0
        %1762 = vmatpush1.msra.mxu0 %v1500
        %1763 = vmatprep.subr.mxu0 0.0
        %1764 = vmatpush1.msra.mxu0 %v1501
        %1765 = vmatprep.subr.mxu0 0.0
        %1766 = vmatpush1.msra.mxu0 %v1502
        %1767 = vmatprep.subr.mxu0 0.0
        %1768 = vmatpush1.msra.mxu0 %v1503
        %1769 = vmatprep.subr.mxu0 0.0
        %1770 = vmatpush1.msra.mxu0 %v1504
        %1771 = vmatprep.subr.mxu0 0.0
        %1772 = vmatpush1.msra.mxu0 %v1505
        %1773 = vmatprep.subr.mxu0 0.0
        %1774 = vmatpush1.msra.mxu0 %v1506
        %1775 = vmatprep.subr.mxu0 0.0
        %1776 = vmatpush1.msra.mxu0 %v1507
        %1777 = vmatprep.subr.mxu0 0.0
        %1778 = vmatpush1.msra.mxu0 %v1508
        %1779 = vmatprep.subr.mxu0 0.0
        %1780 = vmatpush1.msra.mxu0 %v1509
        %1781 = vmatprep.subr.mxu0 0.0
        %1782 = vmatpush1.msra.mxu0 %v1510
        %1783 = vmatprep.subr.mxu0 0.0
        %1784 = vmatpush1.msra.mxu0 %v1511
        %1785 = vmatprep.subr.mxu0 0.0
        %1786 = vmatpush1.msra.mxu0 %v1512
        %1787 = vmatprep.subr.mxu0 0.0
        %1788 = vmatpush1.msra.mxu0 %v1513
        %1789 = vmatprep.subr.mxu0 0.0
        %1790 = vmatpush1.msra.mxu0 %v1514
        %1791 = vmatprep.subr.mxu0 0.0
        %1792 = vmatpush1.msra.mxu0 %v1515
        %1793 = vmatprep.subr.mxu0 0.0
        %1794 = vmatpush1.msra.mxu0 %v1516
        %1795 = vmatprep.subr.mxu0 0.0
        %1796 = vmatpush1.msra.mxu0 %v1517
        %1797 = vmatprep.subr.mxu0 0.0
        %1798 = vmatpush1.msra.mxu0 %v1518
        %1799 = vmatprep.subr.mxu0 0.0
        %1800 = vmatpush1.msra.mxu0 %v1519
        %1801 = vmatprep.subr.mxu0 0.0
        %1802 = vmatpush1.msra.mxu0 %v1520
        %1803 = vmatprep.subr.mxu0 0.0
        %1804 = vmatpush1.msra.mxu0 %v1521
        %1805 = vmatprep.subr.mxu0 0.0
        %1806 = vmatpush1.msra.mxu0 %v1522
        %1807 = vmatprep.subr.mxu0 0.0
        %1808 = vmatpush1.msra.mxu0 %v1523
        %1809 = vmatprep.subr.mxu0 0.0
        %1810 = vmatpush1.msra.mxu0 %v1524
        %1811 = vmatprep.subr.mxu0 0.0
        %1812 = vmatpush1.msra.mxu0 %v1525
        %1813 = vmatprep.subr.mxu0 0.0
        %1814 = vmatpush1.msra.mxu0 %v1526
        %1815 = vmatprep.subr.mxu0 0.0
        %1816 = vmatpush1.msra.mxu0 %v1527
        %1817 = vmatprep.mubr.f32.mxu0 %v1339
        %1818 = vmatmul.mubr.f32.gmra.mrb[0].mxu0 %v1338
        %v1819 = vpop.f32.mrb[0].mxu0
        %v1820 = vadd.f32 %v1595, %v1819
        %v1821 = vpop.f32.mrb[0].mxu0
        %1822 = vmatprep.mubr.f32.mxu0 %v1343
        %1823 = vmatmul.mubr.f32.gmra.mrb[0].mxu0 %v1342
        %v1824 = vpop.f32.mrb[0].mxu0
        %v1825 = vadd.f32 %v1600, %v1824
        %v1826 = vpop.f32.mrb[0].mxu0
        %1827 = vmatprep.mubr.f32.mxu0 %v1347
        %1828 = vmatmul.mubr.f32.gmra.mrb[0].mxu0 %v1346
        %v1829 = vpop.f32.mrb[0].mxu0
        %v1830 = vadd.f32 %v1605, %v1829
        %v1831 = vpop.f32.mrb[0].mxu0
        %1832 = vmatprep.mubr.f32.mxu0 %v1351
        %1833 = vmatmul.mubr.f32.gmra.mrb[0].mxu0 %v1350
        %v1834 = vpop.f32.mrb[0].mxu0
        %v1835 = vadd.f32 %v1610, %v1834
        %v1836 = vpop.f32.mrb[0].mxu0
        %1837 = vmatprep.mubr.f32.mxu0 %v1355
        %1838 = vmatmul.mubr.f32.gmra.mrb[0].mxu0 %v1354
        %v1839 = vpop.f32.mrb[0].mxu0
        %v1840 = vadd.f32 %v1615, %v1839
        %v1841 = vpop.f32.mrb[0].mxu0
        %1842 = vmatprep.mubr.f32.mxu0 %v1359
        %1843 = vmatmul.mubr.f32.gmra.mrb[0].mxu0 %v1358
        %v1844 = vpop.f32.mrb[0].mxu0
        %v1845 = vadd.f32 %v1620, %v1844
        %v1846 = vpop.f32.mrb[0].mxu0
        %1847 = vmatprep.mubr.f32.mxu0 %v1363
        %1848 = vmatmul.mubr.f32.gmra.mrb[0].mxu0 %v1362
        %v1849 = vpop.f32.mrb[0].mxu0
        %v1850 = vadd.f32 %v1625, %v1849
        %v1851 = vpop.f32.mrb[0].mxu0
        %1852 = vmatprep.mubr.f32.mxu0 %v1367
        %1853 = vmatmul.mubr.f32.gmra.mrb[0].mxu0 %v1366
        %v1854 = vpop.f32.mrb[0].mxu0
        %v1855 = vadd.f32 %v1630, %v1854
        %v1856 = vpop.f32.mrb[0].mxu0
        %1857 = vmatprep.mubr.f32.mxu0 %v1371
        %1858 = vmatmul.mubr.f32.gmra.mrb[0].mxu0 %v1370
        %v1859 = vpop.f32.mrb[0].mxu0
        %v1860 = vadd.f32 %v1635, %v1859
        %v1861 = vpop.f32.mrb[0].mxu0
        %1862 = vmatprep.mubr.f32.mxu0 %v1375
        %1863 = vmatmul.mubr.f32.gmra.mrb[0].mxu0 %v1374
        %v1864 = vpop.f32.mrb[0].mxu0
        %v1865 = vadd.f32 %v1640, %v1864
        %v1866 = vpop.f32.mrb[0].mxu0
        %1867 = vmatprep.mubr.f32.mxu0 %v1379
        %1868 = vmatmul.mubr.f32.gmra.mrb[0].mxu0 %v1378
        %v1869 = vpop.f32.mrb[0].mxu0
        %v1870 = vadd.f32 %v1645, %v1869
        %v1871 = vpop.f32.mrb[0].mxu0
        %1872 = vmatprep.mubr.f32.mxu0 %v1383
        %1873 = vmatmul.mubr.f32.gmra.mrb[0].mxu0 %v1382
        %v1874 = vpop.f32.mrb[0].mxu0
        %v1875 = vadd.f32 %v1650, %v1874
        %v1876 = vpop.f32.mrb[0].mxu0
        %1877 = vmatprep.mubr.f32.mxu0 %v1387
        %1878 = vmatmul.mubr.f32.gmra.mrb[0].mxu0 %v1386
        %v1879 = vpop.f32.mrb[0].mxu0
        %v1880 = vadd.f32 %v1655, %v1879
        %v1881 = vpop.f32.mrb[0].mxu0
        %1882 = vmatprep.mubr.f32.mxu0 %v1391
        %1883 = vmatmul.mubr.f32.gmra.mrb[0].mxu0 %v1390
        %v1884 = vpop.f32.mrb[0].mxu0
        %v1885 = vadd.f32 %v1660, %v1884
        %v1886 = vpop.f32.mrb[0].mxu0
        %1887 = vmatprep.mubr.f32.mxu0 %v1395
        %1888 = vmatmul.mubr.f32.gmra.mrb[0].mxu0 %v1394
        %v1889 = vpop.f32.mrb[0].mxu0
        %v1890 = vadd.f32 %v1665, %v1889
        %v1891 = vpop.f32.mrb[0].mxu0
        %1892 = vmatprep.mubr.f32.mxu0 %v1399
        %1893 = vmatmul.mubr.f32.gmra.mrb[0].mxu0 %v1398
        %v1894 = vpop.f32.mrb[0].mxu0
        %v1895 = vadd.f32 %v1670, %v1894
        %v1896 = vpop.f32.mrb[0].mxu0
        %1897 = vmatprep.mubr.f32.mxu0 %v1403
        %1898 = vmatmul.mubr.f32.gmra.mrb[0].mxu0 %v1402
        %v1899 = vpop.f32.mrb[0].mxu0
        %v1900 = vadd.f32 %v1675, %v1899
        %v1901 = vpop.f32.mrb[0].mxu0
        %1902 = vmatprep.mubr.f32.mxu0 %v1407
        %1903 = vmatmul.mubr.f32.gmra.mrb[0].mxu0 %v1406
        %v1904 = vpop.f32.mrb[0].mxu0
        %v1905 = vadd.f32 %v1680, %v1904
        %v1906 = vpop.f32.mrb[0].mxu0
        %1907 = vmatprep.mubr.f32.mxu0 %v1411
        %1908 = vmatmul.mubr.f32.gmra.mrb[0].mxu0 %v1410
        %v1909 = vpop.f32.mrb[0].mxu0
        %v1910 = vadd.f32 %v1685, %v1909
        %v1911 = vpop.f32.mrb[0].mxu0
        %1912 = vmatprep.mubr.f32.mxu0 %v1415
        %1913 = vmatmul.mubr.f32.gmra.mrb[0].mxu0 %v1414
        %v1914 = vpop.f32.mrb[0].mxu0
        %v1915 = vadd.f32 %v1690, %v1914
        %v1916 = vpop.f32.mrb[0].mxu0
        %1917 = vmatprep.mubr.f32.mxu0 %v1419
        %1918 = vmatmul.mubr.f32.gmra.mrb[0].mxu0 %v1418
        %v1919 = vpop.f32.mrb[0].mxu0
        %v1920 = vadd.f32 %v1695, %v1919
        %v1921 = vpop.f32.mrb[0].mxu0
        %1922 = vmatprep.mubr.f32.mxu0 %v1423
        %1923 = vmatmul.mubr.f32.gmra.mrb[0].mxu0 %v1422
        %v1924 = vpop.f32.mrb[0].mxu0
        %v1925 = vadd.f32 %v1700, %v1924
        %v1926 = vpop.f32.mrb[0].mxu0
        %1927 = vmatprep.mubr.f32.mxu0 %v1427
        %1928 = vmatmul.mubr.f32.gmra.mrb[0].mxu0 %v1426
        %v1929 = vpop.f32.mrb[0].mxu0
        %v1930 = vadd.f32 %v1705, %v1929
        %v1931 = vpop.f32.mrb[0].mxu0
        %1932 = vmatprep.mubr.f32.mxu0 %v1431
        %1933 = vmatmul.mubr.f32.gmra.mrb[0].mxu0 %v1430
        %v1934 = vpop.f32.mrb[0].mxu0
        %v1935 = vadd.f32 %v1710, %v1934
        %v1936 = vpop.f32.mrb[0].mxu0
        %1937 = vmatprep.mubr.f32.mxu0 %v1435
        %1938 = vmatmul.mubr.f32.gmra.mrb[0].mxu0 %v1434
        %v1939 = vpop.f32.mrb[0].mxu0
        %v1940 = vadd.f32 %v1715, %v1939
        %v1941 = vpop.f32.mrb[0].mxu0
        %1942 = vmatprep.mubr.f32.mxu0 %v1439
        %1943 = vmatmul.mubr.f32.gmra.mrb[0].mxu0 %v1438
        %v1944 = vpop.f32.mrb[0].mxu0
        %v1945 = vadd.f32 %v1720, %v1944
        %v1946 = vpop.f32.mrb[0].mxu0
        %1947 = vmatprep.mubr.f32.mxu0 %v1443
        %1948 = vmatmul.mubr.f32.gmra.mrb[0].mxu0 %v1442
        %v1949 = vpop.f32.mrb[0].mxu0
        %v1950 = vadd.f32 %v1725, %v1949
        %v1951 = vpop.f32.mrb[0].mxu0
        %1952 = vmatprep.mubr.f32.mxu0 %v1447
        %1953 = vmatmul.mubr.f32.gmra.mrb[0].mxu0 %v1446
        %v1954 = vpop.f32.mrb[0].mxu0
        %v1955 = vadd.f32 %v1730, %v1954
        %v1956 = vpop.f32.mrb[0].mxu0
        %1957 = vmatprep.mubr.f32.mxu0 %v1451
        %1958 = vmatmul.mubr.f32.gmra.mrb[0].mxu0 %v1450
        %v1959 = vpop.f32.mrb[0].mxu0
        %v1960 = vadd.f32 %v1735, %v1959
        %v1961 = vpop.f32.mrb[0].mxu0
        %1962 = vmatprep.mubr.f32.mxu0 %v1455
        %1963 = vmatmul.mubr.f32.gmra.mrb[0].mxu0 %v1454
        %v1964 = vpop.f32.mrb[0].mxu0
        %v1965 = vadd.f32 %v1740, %v1964
        %v1966 = vpop.f32.mrb[0].mxu0
        %1967 = vmatprep.mubr.f32.mxu0 %v1459
        %1968 = vmatmul.mubr.f32.gmra.mrb[0].mxu0 %v1458
        %v1969 = vpop.f32.mrb[0].mxu0
        %v1970 = vadd.f32 %v1745, %v1969
        %v1971 = vpop.f32.mrb[0].mxu0
        %1972 = vmatprep.mubr.f32.mxu0 %v1463
        %1973 = vmatmul.mubr.f32.gmra.mrb[0].mxu0 %v1462
        %v1974 = vpop.f32.mrb[0].mxu0
        %v1975 = vadd.f32 %v1750, %v1974
        %v1976 = vpop.f32.mrb[0].mxu0
        %1977 = vdwg.mxu0
        %1978 = vst [vmem:[%s223] sm:$0xff] %v1820
        %1979 = vst [vmem:[%s223 + $0x8] sm:$0xff] %v1825
        %1980 = vst [vmem:[%s223 + $0x10] sm:$0xff] %v1830
        %1981 = vst [vmem:[%s223 + $0x18] sm:$0xff] %v1835
        %1982 = vst [vmem:[%s223 + $0x20] sm:$0xff] %v1840
        %1983 = vst [vmem:[%s223 + $0x28] sm:$0xff] %v1845
        %1984 = vst [vmem:[%s223 + $0x30] sm:$0xff] %v1850
        %1985 = vst [vmem:[%s223 + $0x38] sm:$0xff] %v1855
        %1986 = vst [vmem:[%s223 + $0x40] sm:$0xff] %v1860
        %1987 = vst [vmem:[%s223 + $0x48] sm:$0xff] %v1865
        %1988 = vst [vmem:[%s223 + $0x50] sm:$0xff] %v1870
        %1989 = vst [vmem:[%s223 + $0x58] sm:$0xff] %v1875
        %1990 = vst [vmem:[%s223 + $0x60] sm:$0xff] %v1880
        %1991 = vst [vmem:[%s223 + $0x68] sm:$0xff] %v1885
        %1992 = vst [vmem:[%s223 + $0x70] sm:$0xff] %v1890
        %1993 = vst [vmem:[%s223 + $0x78] sm:$0xff] %v1895
        %1994 = vst [vmem:[%s223 + $0x80] sm:$0xff] %v1900
        %1995 = vst [vmem:[%s223 + $0x88] sm:$0xff] %v1905
        %1996 = vst [vmem:[%s223 + $0x90] sm:$0xff] %v1910
        %1997 = vst [vmem:[%s223 + $0x98] sm:$0xff] %v1915
        %1998 = vst [vmem:[%s223 + $0xa0] sm:$0xff] %v1920
        %1999 = vst [vmem:[%s223 + $0xa8] sm:$0xff] %v1925
        %2000 = vst [vmem:[%s223 + $0xb0] sm:$0xff] %v1930
        %2001 = vst [vmem:[%s223 + $0xb8] sm:$0xff] %v1935
        %2002 = vst [vmem:[%s223 + $0xc0] sm:$0xff] %v1940
        %2003 = vst [vmem:[%s223 + $0xc8] sm:$0xff] %v1945
        %2004 = vst [vmem:[%s223 + $0xd0] sm:$0xff] %v1950
        %2005 = vst [vmem:[%s223 + $0xd8] sm:$0xff] %v1955
        %2006 = vst [vmem:[%s223 + $0xe0] sm:$0xff] %v1960
        %2007 = vst [vmem:[%s223 + $0xe8] sm:$0xff] %v1965
        %2008 = vst [vmem:[%s223 + $0xf0] sm:$0xff] %v1970
        %2009 = vst [vmem:[%s223 + $0xf8] sm:$0xff] %v1975
        %s2010 = sand.u32 %s125, 1
        %s2011 = scalar_lea.sflag [#allocation3], %s2010
        %s2012 = sand.u32 %s125, 1
        %s2013 = smul.addr %s2012, 256
        %s2014 = scalar_lea.vmem [#allocation2], %s2013
        // Predicated region
        $region37: #{tpu_custom_call.1} parent=35 // pred_check
          %p2015 = pneg %p135
        $region38: #{tpu_custom_call.1} parent=35 // pred_check_branch
          %2017 = sbr.rel (%p2015) target = $region40
        $region39: #{tpu_custom_call.1} parent=35 // pred_region
          %s2018 = smul.u32 32, %s18
          %s2020 = ssub.s32 4096, 4096
          %2021 = vsyncadd %s2011, %s2020
          %s2022 = smul.addr %s2018, 128
          %s2023 = scalar_lea.hbm %s4, %s2022
          %s2024 = sshll.u32 %s2014, 4
          %s2025 = int_to_ptr.vmem [resolvable:$true] %s2024
          %2030 = dma.vmem_to_hbm [thread:$0]  %s2025, 4096, %s2023, %s2011, 128, 128, 8
        $region40: #{tpu_custom_call.1} parent=35 // pred_fallthru
          _
      $region36: #{tpu_custom_call.1} parent=5 // pred_fallthru
        _
      %p2031 = scmp.le.s32.totalorder 2, %s13
      // Predicated region
      $region41: #{tpu_custom_call.1} parent=5 // pred_check
        %p2032 = pneg %p2031
      $region42: #{tpu_custom_call.1} parent=5 // pred_check_branch
        %2034 = sbr.rel (%p2032) target = $region44
      $region43: #{tpu_custom_call.1} parent=5 // pred_region
        %s2035 = ssub.s32 %s13, 2
        // Predicated region
        $region45: #{tpu_custom_call.1} parent=43 // pred_check
          %p2036 = pneg %p141
        $region46: #{tpu_custom_call.1} parent=43 // pred_check_branch
          %2038 = sbr.rel (%p2036) target = $region48
        $region47: #{tpu_custom_call.1} parent=43 // pred_region
          %s2039 = sand.u32 %s126, 1
          %s2040 = scalar_lea.sflag [#allocation3], %s2039
          %s2041 = sand.u32 %s126, 1
          %s2042 = smul.addr %s2041, 256
          %s2043 = scalar_lea.vmem [#allocation2], %s2042
          %2044 = dma.done %s2040, 4096
        $region48: #{tpu_custom_call.1} parent=43 // pred_fallthru
          _
      $region44: #{tpu_custom_call.1} parent=5 // pred_fallthru
        _
    $region6: #{tpu_custom_call.1} parent=1 // loop_footer
      %s17 = sadd.s32 1, %s13
    $region7: #{tpu_custom_call.1} parent=1 // loop_footer_branch
      %12 = sbr.rel target = $region3
    $region8: #{tpu_custom_call.1} parent=1 // loop_exit
      _
    %2045 = vsyncpa [#allocation3], 1
    %s2046 = scalar_lea.sflag [#allocation3], 1
    %2047 = vsyncpa %s2046, 1

// kernel: tpu_custom_call.1
$region0: #{tpu_custom_call.1}
  #allocation0 [shape = 'u32[]', space=smem, size = 0x4, offset = 0x4, fixed_abs, tag = 'smem constant byte address 0x4 - core index']
  #allocation1 [shape = 'u32[144,128]{1,0:T(1,128)}', space=vmem, size = 0x12000, scoped, tag = 'internal scratch']
  %s0 = inlined_call_operand.vmem [shape: s32[512,1], index: 0, kind: input, shape index: {}]
  %s1 = inlined_call_operand.vmem [shape: s32[512,1], index: 1, kind: input, shape index: {}]
  %s2 = inlined_call_operand.vmem [shape: f32[512,1], index: 2, kind: input, shape index: {}]
  %s3 = inlined_call_operand.vmem [shape: f32[512,128], index: 3, kind: input, shape index: {}]
  %s4 = inlined_call_operand.hbm [shape: f32[512,128], index: 4, kind: output, shape index: {}]
  %s5 = sld [smem:[#allocation0]]
  $region49: #{tpu_custom_call.1} parent=0
    _
  %s7 = ssub.s32 1, %s5
  %s8 = scalar_select 0, %s7, %s5
  $region1: #{tpu_custom_call.1} parent=0
    #allocation2 [shape = 'u8[262144]{0}', space=vmem, size = 0x40000, scoped, tag = 'output window, operand 0']
    #allocation3 [shape = 's32[2]{0}', space=sflag, size = 0x8, scoped, tag = 'scoped memory for tpu_custom_call.1']
    %9 = vsyncpa [#allocation3], 0
    %s10 = scalar_lea.sflag [#allocation3], 1
    %11 = vsyncpa %s10, 0
    loop: start=0, step=1, limit=4
    $region2: #{tpu_custom_call.1} parent=1 // loop_pre_header
      _
    $region3: #{tpu_custom_call.1} parent=1 // loop_header
      %s13 = sphi 0, %s17
      %p14 = scmp.ge.s32.totalorder %s13, 4
      %s23 = sphi 0, %s25
      %s26 = sphi 0, %s23
      %s27 = sphi 0, %s26
      %s43 = sphi 0, %s27
      %s49 = sphi 0, %s51
      %s52 = sphi 0, %s49
      %s53 = sphi 0, %s52
      %s69 = sphi 0, %s53
      %s75 = sphi 0, %s77
      %s78 = sphi 0, %s75
      %s79 = sphi 0, %s78
      %s95 = sphi 0, %s79
      %s99 = sphi 0, %s99
      %s101 = sphi 0, %s99
      %s102 = sphi 0, %s101
      %s116 = sphi 0, %s102
      %s122 = sphi 0, %s124
      %s125 = sphi 0, %s122
      %s126 = sphi 0, %s125
      %s142 = sphi 0, %s126
    $region4: #{tpu_custom_call.1} parent=1 // loop_header_branch
      %16 = sbr.rel (%p14) target = $region8
    $region5: #{tpu_custom_call.1} parent=1 // loop_body
      %s18 = ssub.s32 %s13, 1
      %s19 = ssub.s32 %s13, 2
      %s20 = sadd.s32 %s13, 1
      %s21 = ssub.s32 %s13, %s20
      %p22 = scmp.eq.s32.totalorder %s21, 0
      %s24 = sadd.s32 %s23, 1
      %s25 = scalar_select %p22, %s23, %s24
      %p28 = pneg %p22
      %p29 = scmp.eq.s32.totalorder %s13, 1
      %p30 = por %p28, %p29
      %p31 = scmp.ne.s32.totalorder %s23, %s26
      %p32 = scmp.eq.s32.totalorder %s13, 0
      %p33 = por %p31, %p32
      %p34 = scmp.ne.s32.totalorder %s23, %s26
      %p35 = scmp.eq.s32.totalorder %s18, 1
      %p36 = por %p34, %p35
      %p37 = scmp.ne.s32.totalorder %s26, %s27
      %p38 = scmp.eq.s32.totalorder %s18, 0
      %p39 = por %p37, %p38
      %p40 = scmp.ne.s32.totalorder %s26, %s27
      %p41 = scmp.eq.s32.totalorder %s19, 1
      %p42 = por %p40, %p41
      %p44 = scmp.ne.s32.totalorder %s27, %s43
      %p45 = scmp.eq.s32.totalorder %s19, 0
      %p46 = por %p44, %p45
      %s47 = ssub.s32 %s13, %s20
      %p48 = scmp.eq.s32.totalorder %s47, 0
      %s50 = sadd.s32 %s49, 1
      %s51 = scalar_select %p48, %s49, %s50
      %p54 = pneg %p48
      %p55 = scmp.eq.s32.totalorder %s13, 1
      %p56 = por %p54, %p55
      %p57 = scmp.ne.s32.totalorder %s49, %s52
      %p58 = scmp.eq.s32.totalorder %s13, 0
      %p59 = por %p57, %p58
      %p60 = scmp.ne.s32.totalorder %s49, %s52
      %p61 = scmp.eq.s32.totalorder %s18, 1
      %p62 = por %p60, %p61
      %p63 = scmp.ne.s32.totalorder %s52, %s53
      %p64 = scmp.eq.s32.totalorder %s18, 0
      %p65 = por %p63, %p64
      %p66 = scmp.ne.s32.totalorder %s52, %s53
      %p67 = scmp.eq.s32.totalorder %s19, 1
      %p68 = por %p66, %p67
      %p70 = scmp.ne.s32.totalorder %s53, %s69
      %p71 = scmp.eq.s32.totalorder %s19, 0
      %p72 = por %p70, %p71
      %s73 = ssub.s32 %s13, %s20
      %p74 = scmp.eq.s32.totalorder %s73, 0
      %s76 = sadd.s32 %s75, 1
      %s77 = scalar_select %p74, %s75, %s76
      %p80 = pneg %p74
      %p81 = scmp.eq.s32.totalorder %s13, 1
      %p82 = por %p80, %p81
      %p83 = scmp.ne.s32.totalorder %s75, %s78
      %p84 = scmp.eq.s32.totalorder %s13, 0
      %p85 = por %p83, %p84
      %p86 = scmp.ne.s32.totalorder %s75, %s78
      %p87 = scmp.eq.s32.totalorder %s18, 1
      %p88 = por %p86, %p87
      %p89 = scmp.ne.s32.totalorder %s78, %s79
      %p90 = scmp.eq.s32.totalorder %s18, 0
      %p91 = por %p89, %p90
      %p92 = scmp.ne.s32.totalorder %s78, %s79
      %p93 = scmp.eq.s32.totalorder %s19, 1
      %p94 = por %p92, %p93
      %p96 = scmp.ne.s32.totalorder %s79, %s95
      %p97 = scmp.eq.s32.totalorder %s19, 0
      %p98 = por %p96, %p97
      %s100 = sadd.s32 %s99, 1
      %p103 = scmp.eq.s32.totalorder %s13, 1
      %p104 = scmp.ne.s32.totalorder %s99, %s101
      %p105 = scmp.eq.s32.totalorder %s13, 0
      %p106 = por %p104, %p105
      %p107 = scmp.ne.s32.totalorder %s99, %s101
      %p108 = scmp.eq.s32.totalorder %s18, 1
      %p109 = por %p107, %p108
      %p110 = scmp.ne.s32.totalorder %s101, %s102
      %p111 = scmp.eq.s32.totalorder %s18, 0
      %p112 = por %p110, %p111
      %p113 = scmp.ne.s32.totalorder %s101, %s102
      %p114 = scmp.eq.s32.totalorder %s19, 1
      %p115 = por %p113, %p114
      %p117 = scmp.ne.s32.totalorder %s102, %s116
      %p118 = scmp.eq.s32.totalorder %s19, 0
      %p119 = por %p117, %p118
      %s120 = ssub.s32 %s13, %s20
      %p121 = scmp.eq.s32.totalorder %s120, 0
      %s123 = sadd.s32 %s122, 1
      %s124 = scalar_select %p121, %s122, %s123
      %p127 = pneg %p121
      %p128 = scmp.eq.s32.totalorder %s13, 1
      %p129 = por %p127, %p128
      %p130 = scmp.ne.s32.totalorder %s122, %s125
      %p131 = scmp.eq.s32.totalorder %s13, 0
      %p132 = por %p130, %p131
      %p133 = scmp.ne.s32.totalorder %s122, %s125
      %p134 = scmp.eq.s32.totalorder %s18, 1
      %p135 = por %p133, %p134
      %p136 = scmp.ne.s32.totalorder %s125, %s126
      %p137 = scmp.eq.s32.totalorder %s18, 0
      %p138 = por %p136, %p137
      %p139 = scmp.ne.s32.totalorder %s125, %s126
      %p140 = scmp.eq.s32.totalorder %s19, 1
      %p141 = por %p139, %p140
      %p143 = scmp.ne.s32.totalorder %s126, %s142
      %p144 = scmp.eq.s32.totalorder %s19, 0
      %p145 = por %p143, %p144
      %p146 = scmp.le.s32.totalorder 1, %s13
      %p147 = scmp.lt.s32.totalorder %s13, 3
      %p148 = pnand %p146, %p147
      %p149 = pneg %p148
      // Predicated region
      $region9: #{tpu_custom_call.1} parent=5 // pred_check
        _
      $region10: #{tpu_custom_call.1} parent=5 // pred_check_branch
        %151 = sbr.rel (%p148) target = $region12
      $region11: #{tpu_custom_call.1} parent=5 // pred_region
        %s152 = ssub.s32 %s13, 1
        // Predicated region
        $region13: #{tpu_custom_call.1} parent=11 // pred_check
          %p153 = pneg %p112
        $region14: #{tpu_custom_call.1} parent=11 // pred_check_branch
          %155 = sbr.rel (%p153) target = $region16
        $region15: #{tpu_custom_call.1} parent=11 // pred_region
          _
        $region16: #{tpu_custom_call.1} parent=11 // pred_fallthru
          _
      $region12: #{tpu_custom_call.1} parent=5 // pred_fallthru
        _
      %p156 = scmp.lt.s32.totalorder %s13, 2
      // Predicated region
      $region17: #{tpu_custom_call.1} parent=5 // pred_check
        %p157 = pneg %p156
      $region18: #{tpu_custom_call.1} parent=5 // pred_check_branch
        %159 = sbr.rel (%p157) target = $region20
      $region19: #{tpu_custom_call.1} parent=5 // pred_region
        // Predicated region
        $region21: #{tpu_custom_call.1} parent=19 // pred_check
          %p160 = pneg %p33
        $region22: #{tpu_custom_call.1} parent=19 // pred_check_branch
          %162 = sbr.rel (%p160) target = $region24
        $region23: #{tpu_custom_call.1} parent=19 // pred_region
          %s163 = smul.u32 32, %s13
          %p164 = scmp.lt.s32.totalorder %s163, 63
          %s165 = scalar_select %p164, %s163, 63
          %s166 = smul.addr %s165, 8
          %s167 = scalar_lea.vmem %s0, %s166
          %s168 = smul.u32 32, %s13
        $region24: #{tpu_custom_call.1} parent=19 // pred_fallthru
          _
        // Predicated region
        $region25: #{tpu_custom_call.1} parent=19 // pred_check
          %p169 = pneg %p59
        $region26: #{tpu_custom_call.1} parent=19 // pred_check_branch
          %171 = sbr.rel (%p169) target = $region28
        $region27: #{tpu_custom_call.1} parent=19 // pred_region
          %s172 = smul.u32 32, %s13
          %p173 = scmp.lt.s32.totalorder %s172, 63
          %s174 = scalar_select %p173, %s172, 63
          %s175 = smul.addr %s174, 8
          %s176 = scalar_lea.vmem %s1, %s175
          %s177 = smul.u32 32, %s13
        $region28: #{tpu_custom_call.1} parent=19 // pred_fallthru
          _
        // Predicated region
        $region29: #{tpu_custom_call.1} parent=19 // pred_check
          %p178 = pneg %p85
        $region30: #{tpu_custom_call.1} parent=19 // pred_check_branch
          %180 = sbr.rel (%p178) target = $region32
        $region31: #{tpu_custom_call.1} parent=19 // pred_region
          %s181 = smul.u32 32, %s13
          %p182 = scmp.lt.s32.totalorder %s181, 63
          %s183 = scalar_select %p182, %s181, 63
          %s184 = smul.addr %s183, 8
          %s185 = scalar_lea.vmem %s2, %s184
          %s186 = smul.u32 32, %s13
        $region32: #{tpu_custom_call.1} parent=19 // pred_fallthru
          _
      $region20: #{tpu_custom_call.1} parent=5 // pred_fallthru
        _
      %p187 = scmp.le.s32.totalorder 1, %s13
      %p188 = scmp.lt.s32.totalorder %s13, 3
      %p189 = pnand %p187, %p188
      %p190 = pneg %p189
      // Predicated region
      $region33: #{tpu_custom_call.1} parent=5 // pred_check
        _
      $region34: #{tpu_custom_call.1} parent=5 // pred_check_branch
        %192 = sbr.rel (%p189) target = $region36
      $region35: #{tpu_custom_call.1} parent=5 // pred_region
        %s193 = ssub.s32 %s13, 1
        %s194 = smul.u32 32, %s18
        %p195 = scmp.lt.s32.totalorder %s194, 63
        %s196 = scalar_select %p195, %s194, 63
        %s197 = smul.addr %s196, 8
        %s198 = scalar_lea.vmem %s0, %s197
        %p199 = pneg %p39
        %p200 = pneg %p36
        %s201 = smul.u32 32, %s18
        %p202 = scmp.lt.s32.totalorder %s201, 63
        %s203 = scalar_select %p202, %s201, 63
        %s204 = smul.addr %s203, 8
        %s205 = scalar_lea.vmem %s1, %s204
        %p206 = pneg %p65
        %p207 = pneg %p62
        %s208 = smul.u32 32, %s18
        %p209 = scmp.lt.s32.totalorder %s208, 63
        %s210 = scalar_select %p209, %s208, 63
        %s211 = smul.addr %s210, 8
        %s212 = scalar_lea.vmem %s2, %s211
        %p213 = pneg %p91
        %p214 = pneg %p88
        %p215 = pneg %p112
        %p216 = pneg %p109
        %p217 = pneg %p138
        %p218 = pneg %p135
        %s219 = sand.u32 %s125, 1
        %s220 = scalar_lea.sflag [#allocation3], %s219
        %s221 = sand.u32 %s125, 1
        %s222 = smul.addr %s221, 256
        %s223 = scalar_lea.vmem [#allocation2], %s222
        %s224 = smul.u32 32, %s18
        %p225 = scmp.lt.s32.totalorder %s224, 63
        %s226 = scalar_select %p225, %s224, 63
        %s227 = smul.addr %s226, 8
        %s228 = scalar_lea.vmem %s0, %s227
        %s229 = smul.u32 32, %s18
        %s230 = smul.u32 32, %s18
        %p231 = scmp.lt.s32.totalorder %s230, 63
        %s232 = scalar_select %p231, %s230, 63
        %s233 = smul.addr %s232, 8
        %s234 = scalar_lea.vmem %s1, %s233
        %s235 = smul.u32 32, %s18
        %s236 = smul.u32 32, %s18
        %p237 = scmp.lt.s32.totalorder %s236, 63
        %s238 = scalar_select %p237, %s236, 63
        %s239 = smul.addr %s238, 8
        %s240 = scalar_lea.vmem %s2, %s239
        %s241 = smul.u32 32, %s18
        %s242 = smul.u32 32, %s18
        %v243 = vld [vmem:[%s228] sm:$0xff]
        %v244 = vld [vmem:[%s228 + $0x8] sm:$0xff]
        %v245 = vld [vmem:[%s228 + $0x10] sm:$0xff]
        %v246 = vld [vmem:[%s228 + $0x18] sm:$0xff]
        %v247 = vld [vmem:[%s228 + $0x20] sm:$0xff]
        %v248 = vld [vmem:[%s228 + $0x28] sm:$0xff]
        %v249 = vld [vmem:[%s228 + $0x30] sm:$0xff]
        %v250 = vld [vmem:[%s228 + $0x38] sm:$0xff]
        %v251 = vld [vmem:[%s228 + $0x40] sm:$0xff]
        %v252 = vld [vmem:[%s228 + $0x48] sm:$0xff]
        %v253 = vld [vmem:[%s228 + $0x50] sm:$0xff]
        %v254 = vld [vmem:[%s228 + $0x58] sm:$0xff]
        %v255 = vld [vmem:[%s228 + $0x60] sm:$0xff]
        %v256 = vld [vmem:[%s228 + $0x68] sm:$0xff]
        %v257 = vld [vmem:[%s228 + $0x70] sm:$0xff]
        %v258 = vld [vmem:[%s228 + $0x78] sm:$0xff]
        %v259 = vld [vmem:[%s228 + $0x80] sm:$0xff]
        %v260 = vld [vmem:[%s228 + $0x88] sm:$0xff]
        %v261 = vld [vmem:[%s228 + $0x90] sm:$0xff]
        %v262 = vld [vmem:[%s228 + $0x98] sm:$0xff]
        %v263 = vld [vmem:[%s228 + $0xa0] sm:$0xff]
        %v264 = vld [vmem:[%s228 + $0xa8] sm:$0xff]
        %v265 = vld [vmem:[%s228 + $0xb0] sm:$0xff]
        %v266 = vld [vmem:[%s228 + $0xb8] sm:$0xff]
        %v267 = vld [vmem:[%s228 + $0xc0] sm:$0xff]
        %v268 = vld [vmem:[%s228 + $0xc8] sm:$0xff]
        %v269 = vld [vmem:[%s228 + $0xd0] sm:$0xff]
        %v270 = vld [vmem:[%s228 + $0xd8] sm:$0xff]
        %v271 = vld [vmem:[%s228 + $0xe0] sm:$0xff]
        %v272 = vld [vmem:[%s228 + $0xe8] sm:$0xff]
        %v273 = vld [vmem:[%s228 + $0xf0] sm:$0xff]
        %v274 = vld [vmem:[%s228 + $0xf8] sm:$0xff]
        %v275 = vld [vmem:[%s234] sm:$0xff]
        %v276 = vld [vmem:[%s234 + $0x8] sm:$0xff]
        %v277 = vld [vmem:[%s234 + $0x10] sm:$0xff]
        %v278 = vld [vmem:[%s234 + $0x18] sm:$0xff]
        %v279 = vld [vmem:[%s234 + $0x20] sm:$0xff]
        %v280 = vld [vmem:[%s234 + $0x28] sm:$0xff]
        %v281 = vld [vmem:[%s234 + $0x30] sm:$0xff]
        %v282 = vld [vmem:[%s234 + $0x38] sm:$0xff]
        %v283 = vld [vmem:[%s234 + $0x40] sm:$0xff]
        %v284 = vld [vmem:[%s234 + $0x48] sm:$0xff]
        %v285 = vld [vmem:[%s234 + $0x50] sm:$0xff]
        %v286 = vld [vmem:[%s234 + $0x58] sm:$0xff]
        %v287 = vld [vmem:[%s234 + $0x60] sm:$0xff]
        %v288 = vld [vmem:[%s234 + $0x68] sm:$0xff]
        %v289 = vld [vmem:[%s234 + $0x70] sm:$0xff]
        %v290 = vld [vmem:[%s234 + $0x78] sm:$0xff]
        %v291 = vld [vmem:[%s234 + $0x80] sm:$0xff]
        %v292 = vld [vmem:[%s234 + $0x88] sm:$0xff]
        %v293 = vld [vmem:[%s234 + $0x90] sm:$0xff]
        %v294 = vld [vmem:[%s234 + $0x98] sm:$0xff]
        %v295 = vld [vmem:[%s234 + $0xa0] sm:$0xff]
        %v296 = vld [vmem:[%s234 + $0xa8] sm:$0xff]
        %v297 = vld [vmem:[%s234 + $0xb0] sm:$0xff]
        %v298 = vld [vmem:[%s234 + $0xb8] sm:$0xff]
        %v299 = vld [vmem:[%s234 + $0xc0] sm:$0xff]
        %v300 = vld [vmem:[%s234 + $0xc8] sm:$0xff]
        %v301 = vld [vmem:[%s234 + $0xd0] sm:$0xff]
        %v302 = vld [vmem:[%s234 + $0xd8] sm:$0xff]
        %v303 = vld [vmem:[%s234 + $0xe0] sm:$0xff]
        %v304 = vld [vmem:[%s234 + $0xe8] sm:$0xff]
        %v305 = vld [vmem:[%s234 + $0xf0] sm:$0xff]
        %v306 = vld [vmem:[%s234 + $0xf8] sm:$0xff]
        %v307 = vlaneseq
        %v308 = vand.u32 %v307, 127
        %v309 = vadd.s32 %v308, 128
        %v310 = vadd.s32 %v308, 256
        %v311 = vadd.s32 %v308, 384
        %312 = vset.pattern.permute.xlu0 0
        %313 = vperm.xlu0 %312, %v243
        %v314 = vpop.permute.xlu0 %313
        %315 = vset.pattern.permute.xlu0 0
        %316 = vperm.xlu0 %315, %v244
        %v317 = vpop.permute.xlu0 %316
        %318 = vset.pattern.permute.xlu0 0
        %319 = vperm.xlu0 %318, %v245
        %v320 = vpop.permute.xlu0 %319
        %321 = vset.pattern.permute.xlu0 0
        %322 = vperm.xlu0 %321, %v246
        %v323 = vpop.permute.xlu0 %322
        %324 = vset.pattern.permute.xlu0 0
        %325 = vperm.xlu0 %324, %v247
        %v326 = vpop.permute.xlu0 %325
        %327 = vset.pattern.permute.xlu0 0
        %328 = vperm.xlu0 %327, %v248
        %v329 = vpop.permute.xlu0 %328
        %330 = vset.pattern.permute.xlu0 0
        %331 = vperm.xlu0 %330, %v249
        %v332 = vpop.permute.xlu0 %331
        %333 = vset.pattern.permute.xlu0 0
        %334 = vperm.xlu0 %333, %v250
        %v335 = vpop.permute.xlu0 %334
        %336 = vset.pattern.permute.xlu0 0
        %337 = vperm.xlu0 %336, %v251
        %v338 = vpop.permute.xlu0 %337
        %339 = vset.pattern.permute.xlu0 0
        %340 = vperm.xlu0 %339, %v252
        %v341 = vpop.permute.xlu0 %340
        %342 = vset.pattern.permute.xlu0 0
        %343 = vperm.xlu0 %342, %v253
        %v344 = vpop.permute.xlu0 %343
        %345 = vset.pattern.permute.xlu0 0
        %346 = vperm.xlu0 %345, %v254
        %v347 = vpop.permute.xlu0 %346
        %348 = vset.pattern.permute.xlu0 0
        %349 = vperm.xlu0 %348, %v255
        %v350 = vpop.permute.xlu0 %349
        %351 = vset.pattern.permute.xlu0 0
        %352 = vperm.xlu0 %351, %v256
        %v353 = vpop.permute.xlu0 %352
        %354 = vset.pattern.permute.xlu0 0
        %355 = vperm.xlu0 %354, %v257
        %v356 = vpop.permute.xlu0 %355
        %357 = vset.pattern.permute.xlu0 0
        %358 = vperm.xlu0 %357, %v258
        %v359 = vpop.permute.xlu0 %358
        %360 = vset.pattern.permute.xlu0 0
        %361 = vperm.xlu0 %360, %v259
        %v362 = vpop.permute.xlu0 %361
        %363 = vset.pattern.permute.xlu0 0
        %364 = vperm.xlu0 %363, %v260
        %v365 = vpop.permute.xlu0 %364
        %366 = vset.pattern.permute.xlu0 0
        %367 = vperm.xlu0 %366, %v261
        %v368 = vpop.permute.xlu0 %367
        %369 = vset.pattern.permute.xlu0 0
        %370 = vperm.xlu0 %369, %v262
        %v371 = vpop.permute.xlu0 %370
        %372 = vset.pattern.permute.xlu0 0
        %373 = vperm.xlu0 %372, %v263
        %v374 = vpop.permute.xlu0 %373
        %375 = vset.pattern.permute.xlu0 0
        %376 = vperm.xlu0 %375, %v264
        %v377 = vpop.permute.xlu0 %376
        %378 = vset.pattern.permute.xlu0 0
        %379 = vperm.xlu0 %378, %v265
        %v380 = vpop.permute.xlu0 %379
        %381 = vset.pattern.permute.xlu0 0
        %382 = vperm.xlu0 %381, %v266
        %v383 = vpop.permute.xlu0 %382
        %384 = vset.pattern.permute.xlu0 0
        %385 = vperm.xlu0 %384, %v267
        %v386 = vpop.permute.xlu0 %385
        %387 = vset.pattern.permute.xlu0 0
        %388 = vperm.xlu0 %387, %v268
        %v389 = vpop.permute.xlu0 %388
        %390 = vset.pattern.permute.xlu0 0
        %391 = vperm.xlu0 %390, %v269
        %v392 = vpop.permute.xlu0 %391
        %393 = vset.pattern.permute.xlu0 0
        %394 = vperm.xlu0 %393, %v270
        %v395 = vpop.permute.xlu0 %394
        %396 = vset.pattern.permute.xlu0 0
        %397 = vperm.xlu0 %396, %v271
        %v398 = vpop.permute.xlu0 %397
        %399 = vset.pattern.permute.xlu0 0
        %400 = vperm.xlu0 %399, %v272
        %v401 = vpop.permute.xlu0 %400
        %402 = vset.pattern.permute.xlu0 0
        %403 = vperm.xlu0 %402, %v273
        %v404 = vpop.permute.xlu0 %403
        %405 = vset.pattern.permute.xlu0 0
        %406 = vperm.xlu0 %405, %v274
        %v407 = vpop.permute.xlu0 %406
        %vm408 = vcmp.eq.s32.totalorder %v308, %v314
        %vm409 = vcmp.eq.s32.totalorder %v309, %v314
        %vm410 = vcmp.eq.s32.totalorder %v310, %v314
        %vm411 = vcmp.eq.s32.totalorder %v311, %v314
        %vm412 = vcmp.eq.s32.totalorder %v308, %v317
        %vm413 = vcmp.eq.s32.totalorder %v309, %v317
        %vm414 = vcmp.eq.s32.totalorder %v310, %v317
        %vm415 = vcmp.eq.s32.totalorder %v311, %v317
        %vm416 = vcmp.eq.s32.totalorder %v308, %v320
        %vm417 = vcmp.eq.s32.totalorder %v309, %v320
        %vm418 = vcmp.eq.s32.totalorder %v310, %v320
        %vm419 = vcmp.eq.s32.totalorder %v311, %v320
        %vm420 = vcmp.eq.s32.totalorder %v308, %v323
        %vm421 = vcmp.eq.s32.totalorder %v309, %v323
        %vm422 = vcmp.eq.s32.totalorder %v310, %v323
        %vm423 = vcmp.eq.s32.totalorder %v311, %v323
        %vm424 = vcmp.eq.s32.totalorder %v308, %v326
        %vm425 = vcmp.eq.s32.totalorder %v309, %v326
        %vm426 = vcmp.eq.s32.totalorder %v310, %v326
        %vm427 = vcmp.eq.s32.totalorder %v311, %v326
        %vm428 = vcmp.eq.s32.totalorder %v308, %v329
        %vm429 = vcmp.eq.s32.totalorder %v309, %v329
        %vm430 = vcmp.eq.s32.totalorder %v310, %v329
        %vm431 = vcmp.eq.s32.totalorder %v311, %v329
        %vm432 = vcmp.eq.s32.totalorder %v308, %v332
        %vm433 = vcmp.eq.s32.totalorder %v309, %v332
        %vm434 = vcmp.eq.s32.totalorder %v310, %v332
        %vm435 = vcmp.eq.s32.totalorder %v311, %v332
        %vm436 = vcmp.eq.s32.totalorder %v308, %v335
        %vm437 = vcmp.eq.s32.totalorder %v309, %v335
        %vm438 = vcmp.eq.s32.totalorder %v310, %v335
        %vm439 = vcmp.eq.s32.totalorder %v311, %v335
        %vm440 = vcmp.eq.s32.totalorder %v308, %v338
        %vm441 = vcmp.eq.s32.totalorder %v309, %v338
        %vm442 = vcmp.eq.s32.totalorder %v310, %v338
        %vm443 = vcmp.eq.s32.totalorder %v311, %v338
        %vm444 = vcmp.eq.s32.totalorder %v308, %v341
        %vm445 = vcmp.eq.s32.totalorder %v309, %v341
        %vm446 = vcmp.eq.s32.totalorder %v310, %v341
        %vm447 = vcmp.eq.s32.totalorder %v311, %v341
        %vm448 = vcmp.eq.s32.totalorder %v308, %v344
        %vm449 = vcmp.eq.s32.totalorder %v309, %v344
        %vm450 = vcmp.eq.s32.totalorder %v310, %v344
        %vm451 = vcmp.eq.s32.totalorder %v311, %v344
        %vm452 = vcmp.eq.s32.totalorder %v308, %v347
        %vm453 = vcmp.eq.s32.totalorder %v309, %v347
        %vm454 = vcmp.eq.s32.totalorder %v310, %v347
        %vm455 = vcmp.eq.s32.totalorder %v311, %v347
        %vm456 = vcmp.eq.s32.totalorder %v308, %v350
        %vm457 = vcmp.eq.s32.totalorder %v309, %v350
        %vm458 = vcmp.eq.s32.totalorder %v310, %v350
        %vm459 = vcmp.eq.s32.totalorder %v311, %v350
        %vm460 = vcmp.eq.s32.totalorder %v308, %v353
        %vm461 = vcmp.eq.s32.totalorder %v309, %v353
        %vm462 = vcmp.eq.s32.totalorder %v310, %v353
        %vm463 = vcmp.eq.s32.totalorder %v311, %v353
        %vm464 = vcmp.eq.s32.totalorder %v308, %v356
        %vm465 = vcmp.eq.s32.totalorder %v309, %v356
        %vm466 = vcmp.eq.s32.totalorder %v310, %v356
        %vm467 = vcmp.eq.s32.totalorder %v311, %v356
        %vm468 = vcmp.eq.s32.totalorder %v308, %v359
        %vm469 = vcmp.eq.s32.totalorder %v309, %v359
        %vm470 = vcmp.eq.s32.totalorder %v310, %v359
        %vm471 = vcmp.eq.s32.totalorder %v311, %v359
        %vm472 = vcmp.eq.s32.totalorder %v308, %v362
        %vm473 = vcmp.eq.s32.totalorder %v309, %v362
        %vm474 = vcmp.eq.s32.totalorder %v310, %v362
        %vm475 = vcmp.eq.s32.totalorder %v311, %v362
        %vm476 = vcmp.eq.s32.totalorder %v308, %v365
        %vm477 = vcmp.eq.s32.totalorder %v309, %v365
        %vm478 = vcmp.eq.s32.totalorder %v310, %v365
        %vm479 = vcmp.eq.s32.totalorder %v311, %v365
        %vm480 = vcmp.eq.s32.totalorder %v308, %v368
        %vm481 = vcmp.eq.s32.totalorder %v309, %v368
        %vm482 = vcmp.eq.s32.totalorder %v310, %v368
        %vm483 = vcmp.eq.s32.totalorder %v311, %v368
        %vm484 = vcmp.eq.s32.totalorder %v308, %v371
        %vm485 = vcmp.eq.s32.totalorder %v309, %v371
        %vm486 = vcmp.eq.s32.totalorder %v310, %v371
        %vm487 = vcmp.eq.s32.totalorder %v311, %v371
        %vm488 = vcmp.eq.s32.totalorder %v308, %v374
        %vm489 = vcmp.eq.s32.totalorder %v309, %v374
        %vm490 = vcmp.eq.s32.totalorder %v310, %v374
        %vm491 = vcmp.eq.s32.totalorder %v311, %v374
        %vm492 = vcmp.eq.s32.totalorder %v308, %v377
        %vm493 = vcmp.eq.s32.totalorder %v309, %v377
        %vm494 = vcmp.eq.s32.totalorder %v310, %v377
        %vm495 = vcmp.eq.s32.totalorder %v311, %v377
        %vm496 = vcmp.eq.s32.totalorder %v308, %v380
        %vm497 = vcmp.eq.s32.totalorder %v309, %v380
        %vm498 = vcmp.eq.s32.totalorder %v310, %v380
        %vm499 = vcmp.eq.s32.totalorder %v311, %v380
        %vm500 = vcmp.eq.s32.totalorder %v308, %v383
        %vm501 = vcmp.eq.s32.totalorder %v309, %v383
        %vm502 = vcmp.eq.s32.totalorder %v310, %v383
        %vm503 = vcmp.eq.s32.totalorder %v311, %v383
        %vm504 = vcmp.eq.s32.totalorder %v308, %v386
        %vm505 = vcmp.eq.s32.totalorder %v309, %v386
        %vm506 = vcmp.eq.s32.totalorder %v310, %v386
        %vm507 = vcmp.eq.s32.totalorder %v311, %v386
        %vm508 = vcmp.eq.s32.totalorder %v308, %v389
        %vm509 = vcmp.eq.s32.totalorder %v309, %v389
        %vm510 = vcmp.eq.s32.totalorder %v310, %v389
        %vm511 = vcmp.eq.s32.totalorder %v311, %v389
        %vm512 = vcmp.eq.s32.totalorder %v308, %v392
        %vm513 = vcmp.eq.s32.totalorder %v309, %v392
        %vm514 = vcmp.eq.s32.totalorder %v310, %v392
        %vm515 = vcmp.eq.s32.totalorder %v311, %v392
        %vm516 = vcmp.eq.s32.totalorder %v308, %v395
        %vm517 = vcmp.eq.s32.totalorder %v309, %v395
        %vm518 = vcmp.eq.s32.totalorder %v310, %v395
        %vm519 = vcmp.eq.s32.totalorder %v311, %v395
        %vm520 = vcmp.eq.s32.totalorder %v308, %v398
        %vm521 = vcmp.eq.s32.totalorder %v309, %v398
        %vm522 = vcmp.eq.s32.totalorder %v310, %v398
        %vm523 = vcmp.eq.s32.totalorder %v311, %v398
        %vm524 = vcmp.eq.s32.totalorder %v308, %v401
        %vm525 = vcmp.eq.s32.totalorder %v309, %v401
        %vm526 = vcmp.eq.s32.totalorder %v310, %v401
        %vm527 = vcmp.eq.s32.totalorder %v311, %v401
        %vm528 = vcmp.eq.s32.totalorder %v308, %v404
        %vm529 = vcmp.eq.s32.totalorder %v309, %v404
        %vm530 = vcmp.eq.s32.totalorder %v310, %v404
        %vm531 = vcmp.eq.s32.totalorder %v311, %v404
        %vm532 = vcmp.eq.s32.totalorder %v308, %v407
        %vm533 = vcmp.eq.s32.totalorder %v309, %v407
        %vm534 = vcmp.eq.s32.totalorder %v310, %v407
        %vm535 = vcmp.eq.s32.totalorder %v311, %v407
        %536 = vset.pattern.permute.xlu0 0
        %537 = vperm.xlu0 %536, %v275
        %v538 = vpop.permute.xlu0 %537
        %539 = vset.pattern.permute.xlu0 0
        %540 = vperm.xlu0 %539, %v276
        %v541 = vpop.permute.xlu0 %540
        %542 = vset.pattern.permute.xlu0 0
        %543 = vperm.xlu0 %542, %v277
        %v544 = vpop.permute.xlu0 %543
        %545 = vset.pattern.permute.xlu0 0
        %546 = vperm.xlu0 %545, %v278
        %v547 = vpop.permute.xlu0 %546
        %548 = vset.pattern.permute.xlu0 0
        %549 = vperm.xlu0 %548, %v279
        %v550 = vpop.permute.xlu0 %549
        %551 = vset.pattern.permute.xlu0 0
        %552 = vperm.xlu0 %551, %v280
        %v553 = vpop.permute.xlu0 %552
        %554 = vset.pattern.permute.xlu0 0
        %555 = vperm.xlu0 %554, %v281
        %v556 = vpop.permute.xlu0 %555
        %557 = vset.pattern.permute.xlu0 0
        %558 = vperm.xlu0 %557, %v282
        %v559 = vpop.permute.xlu0 %558
        %560 = vset.pattern.permute.xlu0 0
        %561 = vperm.xlu0 %560, %v283
        %v562 = vpop.permute.xlu0 %561
        %563 = vset.pattern.permute.xlu0 0
        %564 = vperm.xlu0 %563, %v284
        %v565 = vpop.permute.xlu0 %564
        %566 = vset.pattern.permute.xlu0 0
        %567 = vperm.xlu0 %566, %v285
        %v568 = vpop.permute.xlu0 %567
        %569 = vset.pattern.permute.xlu0 0
        %570 = vperm.xlu0 %569, %v286
        %v571 = vpop.permute.xlu0 %570
        %572 = vset.pattern.permute.xlu0 0
        %573 = vperm.xlu0 %572, %v287
        %v574 = vpop.permute.xlu0 %573
        %575 = vset.pattern.permute.xlu0 0
        %576 = vperm.xlu0 %575, %v288
        %v577 = vpop.permute.xlu0 %576
        %578 = vset.pattern.permute.xlu0 0
        %579 = vperm.xlu0 %578, %v289
        %v580 = vpop.permute.xlu0 %579
        %581 = vset.pattern.permute.xlu0 0
        %582 = vperm.xlu0 %581, %v290
        %v583 = vpop.permute.xlu0 %582
        %584 = vset.pattern.permute.xlu0 0
        %585 = vperm.xlu0 %584, %v291
        %v586 = vpop.permute.xlu0 %585
        %587 = vset.pattern.permute.xlu0 0
        %588 = vperm.xlu0 %587, %v292
        %v589 = vpop.permute.xlu0 %588
        %590 = vset.pattern.permute.xlu0 0
        %591 = vperm.xlu0 %590, %v293
        %v592 = vpop.permute.xlu0 %591
        %593 = vset.pattern.permute.xlu0 0
        %594 = vperm.xlu0 %593, %v294
        %v595 = vpop.permute.xlu0 %594
        %596 = vset.pattern.permute.xlu0 0
        %597 = vperm.xlu0 %596, %v295
        %v598 = vpop.permute.xlu0 %597
        %599 = vset.pattern.permute.xlu0 0
        %600 = vperm.xlu0 %599, %v296
        %v601 = vpop.permute.xlu0 %600
        %602 = vset.pattern.permute.xlu0 0
        %603 = vperm.xlu0 %602, %v297
        %v604 = vpop.permute.xlu0 %603
        %605 = vset.pattern.permute.xlu0 0
        %606 = vperm.xlu0 %605, %v298
        %v607 = vpop.permute.xlu0 %606
        %608 = vset.pattern.permute.xlu0 0
        %609 = vperm.xlu0 %608, %v299
        %v610 = vpop.permute.xlu0 %609
        %611 = vset.pattern.permute.xlu0 0
        %612 = vperm.xlu0 %611, %v300
        %v613 = vpop.permute.xlu0 %612
        %614 = vset.pattern.permute.xlu0 0
        %615 = vperm.xlu0 %614, %v301
        %v616 = vpop.permute.xlu0 %615
        %617 = vset.pattern.permute.xlu0 0
        %618 = vperm.xlu0 %617, %v302
        %v619 = vpop.permute.xlu0 %618
        %620 = vset.pattern.permute.xlu0 0
        %621 = vperm.xlu0 %620, %v303
        %v622 = vpop.permute.xlu0 %621
        %623 = vset.pattern.permute.xlu0 0
        %624 = vperm.xlu0 %623, %v304
        %v625 = vpop.permute.xlu0 %624
        %626 = vset.pattern.permute.xlu0 0
        %627 = vperm.xlu0 %626, %v305
        %v628 = vpop.permute.xlu0 %627
        %629 = vset.pattern.permute.xlu0 0
        %630 = vperm.xlu0 %629, %v306
        %v631 = vpop.permute.xlu0 %630
        %vm632 = vcmp.eq.s32.totalorder %v308, %v538
        %vm633 = vcmp.eq.s32.totalorder %v309, %v538
        %vm634 = vcmp.eq.s32.totalorder %v310, %v538
        %vm635 = vcmp.eq.s32.totalorder %v311, %v538
        %vm636 = vcmp.eq.s32.totalorder %v308, %v541
        %vm637 = vcmp.eq.s32.totalorder %v309, %v541
        %vm638 = vcmp.eq.s32.totalorder %v310, %v541
        %vm639 = vcmp.eq.s32.totalorder %v311, %v541
        %vm640 = vcmp.eq.s32.totalorder %v308, %v544
        %vm641 = vcmp.eq.s32.totalorder %v309, %v544
        %vm642 = vcmp.eq.s32.totalorder %v310, %v544
        %vm643 = vcmp.eq.s32.totalorder %v311, %v544
        %vm644 = vcmp.eq.s32.totalorder %v308, %v547
        %vm645 = vcmp.eq.s32.totalorder %v309, %v547
        %vm646 = vcmp.eq.s32.totalorder %v310, %v547
        %vm647 = vcmp.eq.s32.totalorder %v311, %v547
        %vm648 = vcmp.eq.s32.totalorder %v308, %v550
        %vm649 = vcmp.eq.s32.totalorder %v309, %v550
        %vm650 = vcmp.eq.s32.totalorder %v310, %v550
        %vm651 = vcmp.eq.s32.totalorder %v311, %v550
        %vm652 = vcmp.eq.s32.totalorder %v308, %v553
        %vm653 = vcmp.eq.s32.totalorder %v309, %v553
        %vm654 = vcmp.eq.s32.totalorder %v310, %v553
        %vm655 = vcmp.eq.s32.totalorder %v311, %v553
        %vm656 = vcmp.eq.s32.totalorder %v308, %v556
        %vm657 = vcmp.eq.s32.totalorder %v309, %v556
        %vm658 = vcmp.eq.s32.totalorder %v310, %v556
        %vm659 = vcmp.eq.s32.totalorder %v311, %v556
        %vm660 = vcmp.eq.s32.totalorder %v308, %v559
        %vm661 = vcmp.eq.s32.totalorder %v309, %v559
        %vm662 = vcmp.eq.s32.totalorder %v310, %v559
        %vm663 = vcmp.eq.s32.totalorder %v311, %v559
        %vm664 = vcmp.eq.s32.totalorder %v308, %v562
        %vm665 = vcmp.eq.s32.totalorder %v309, %v562
        %vm666 = vcmp.eq.s32.totalorder %v310, %v562
        %vm667 = vcmp.eq.s32.totalorder %v311, %v562
        %vm668 = vcmp.eq.s32.totalorder %v308, %v565
        %vm669 = vcmp.eq.s32.totalorder %v309, %v565
        %vm670 = vcmp.eq.s32.totalorder %v310, %v565
        %vm671 = vcmp.eq.s32.totalorder %v311, %v565
        %vm672 = vcmp.eq.s32.totalorder %v308, %v568
        %vm673 = vcmp.eq.s32.totalorder %v309, %v568
        %vm674 = vcmp.eq.s32.totalorder %v310, %v568
        %vm675 = vcmp.eq.s32.totalorder %v311, %v568
        %vm676 = vcmp.eq.s32.totalorder %v308, %v571
        %vm677 = vcmp.eq.s32.totalorder %v309, %v571
        %vm678 = vcmp.eq.s32.totalorder %v310, %v571
        %vm679 = vcmp.eq.s32.totalorder %v311, %v571
        %vm680 = vcmp.eq.s32.totalorder %v308, %v574
        %vm681 = vcmp.eq.s32.totalorder %v309, %v574
        %vm682 = vcmp.eq.s32.totalorder %v310, %v574
        %vm683 = vcmp.eq.s32.totalorder %v311, %v574
        %vm684 = vcmp.eq.s32.totalorder %v308, %v577
        %vm685 = vcmp.eq.s32.totalorder %v309, %v577
        %vm686 = vcmp.eq.s32.totalorder %v310, %v577
        %vm687 = vcmp.eq.s32.totalorder %v311, %v577
        %vm688 = vcmp.eq.s32.totalorder %v308, %v580
        %vm689 = vcmp.eq.s32.totalorder %v309, %v580
        %vm690 = vcmp.eq.s32.totalorder %v310, %v580
        %vm691 = vcmp.eq.s32.totalorder %v311, %v580
        %vm692 = vcmp.eq.s32.totalorder %v308, %v583
        %vm693 = vcmp.eq.s32.totalorder %v309, %v583
        %vm694 = vcmp.eq.s32.totalorder %v310, %v583
        %vm695 = vcmp.eq.s32.totalorder %v311, %v583
        %vm696 = vcmp.eq.s32.totalorder %v308, %v586
        %vm697 = vcmp.eq.s32.totalorder %v309, %v586
        %vm698 = vcmp.eq.s32.totalorder %v310, %v586
        %vm699 = vcmp.eq.s32.totalorder %v311, %v586
        %vm700 = vcmp.eq.s32.totalorder %v308, %v589
        %vm701 = vcmp.eq.s32.totalorder %v309, %v589
        %vm702 = vcmp.eq.s32.totalorder %v310, %v589
        %vm703 = vcmp.eq.s32.totalorder %v311, %v589
        %vm704 = vcmp.eq.s32.totalorder %v308, %v592
        %vm705 = vcmp.eq.s32.totalorder %v309, %v592
        %vm706 = vcmp.eq.s32.totalorder %v310, %v592
        %vm707 = vcmp.eq.s32.totalorder %v311, %v592
        %vm708 = vcmp.eq.s32.totalorder %v308, %v595
        %vm709 = vcmp.eq.s32.totalorder %v309, %v595
        %vm710 = vcmp.eq.s32.totalorder %v310, %v595
        %vm711 = vcmp.eq.s32.totalorder %v311, %v595
        %vm712 = vcmp.eq.s32.totalorder %v308, %v598
        %vm713 = vcmp.eq.s32.totalorder %v309, %v598
        %vm714 = vcmp.eq.s32.totalorder %v310, %v598
        %vm715 = vcmp.eq.s32.totalorder %v311, %v598
        %vm716 = vcmp.eq.s32.totalorder %v308, %v601
        %vm717 = vcmp.eq.s32.totalorder %v309, %v601
        %vm718 = vcmp.eq.s32.totalorder %v310, %v601
        %vm719 = vcmp.eq.s32.totalorder %v311, %v601
        %vm720 = vcmp.eq.s32.totalorder %v308, %v604
        %vm721 = vcmp.eq.s32.totalorder %v309, %v604
        %vm722 = vcmp.eq.s32.totalorder %v310, %v604
        %vm723 = vcmp.eq.s32.totalorder %v311, %v604
        %vm724 = vcmp.eq.s32.totalorder %v308, %v607
        %vm725 = vcmp.eq.s32.totalorder %v309, %v607
        %vm726 = vcmp.eq.s32.totalorder %v310, %v607
        %vm727 = vcmp.eq.s32.totalorder %v311, %v607
        %vm728 = vcmp.eq.s32.totalorder %v308, %v610
        %vm729 = vcmp.eq.s32.totalorder %v309, %v610
        %vm730 = vcmp.eq.s32.totalorder %v310, %v610
        %vm731 = vcmp.eq.s32.totalorder %v311, %v610
        %vm732 = vcmp.eq.s32.totalorder %v308, %v613
        %vm733 = vcmp.eq.s32.totalorder %v309, %v613
        %vm734 = vcmp.eq.s32.totalorder %v310, %v613
        %vm735 = vcmp.eq.s32.totalorder %v311, %v613
        %vm736 = vcmp.eq.s32.totalorder %v308, %v616
        %vm737 = vcmp.eq.s32.totalorder %v309, %v616
        %vm738 = vcmp.eq.s32.totalorder %v310, %v616
        %vm739 = vcmp.eq.s32.totalorder %v311, %v616
        %vm740 = vcmp.eq.s32.totalorder %v308, %v619
        %vm741 = vcmp.eq.s32.totalorder %v309, %v619
        %vm742 = vcmp.eq.s32.totalorder %v310, %v619
        %vm743 = vcmp.eq.s32.totalorder %v311, %v619
        %vm744 = vcmp.eq.s32.totalorder %v308, %v622
        %vm745 = vcmp.eq.s32.totalorder %v309, %v622
        %vm746 = vcmp.eq.s32.totalorder %v310, %v622
        %vm747 = vcmp.eq.s32.totalorder %v311, %v622
        %vm748 = vcmp.eq.s32.totalorder %v308, %v625
        %vm749 = vcmp.eq.s32.totalorder %v309, %v625
        %vm750 = vcmp.eq.s32.totalorder %v310, %v625
        %vm751 = vcmp.eq.s32.totalorder %v311, %v625
        %vm752 = vcmp.eq.s32.totalorder %v308, %v628
        %vm753 = vcmp.eq.s32.totalorder %v309, %v628
        %vm754 = vcmp.eq.s32.totalorder %v310, %v628
        %vm755 = vcmp.eq.s32.totalorder %v311, %v628
        %vm756 = vcmp.eq.s32.totalorder %v308, %v631
        %vm757 = vcmp.eq.s32.totalorder %v309, %v631
        %vm758 = vcmp.eq.s32.totalorder %v310, %v631
        %vm759 = vcmp.eq.s32.totalorder %v311, %v631
        %vm760 = vmor %vm408, %vm632
        %vm761 = vmor %vm409, %vm633
        %vm762 = vmor %vm410, %vm634
        %vm763 = vmor %vm411, %vm635
        %vm764 = vmor %vm412, %vm636
        %vm765 = vmor %vm413, %vm637
        %vm766 = vmor %vm414, %vm638
        %vm767 = vmor %vm415, %vm639
        %vm768 = vmor %vm416, %vm640
        %vm769 = vmor %vm417, %vm641
        %vm770 = vmor %vm418, %vm642
        %vm771 = vmor %vm419, %vm643
        %vm772 = vmor %vm420, %vm644
        %vm773 = vmor %vm421, %vm645
        %vm774 = vmor %vm422, %vm646
        %vm775 = vmor %vm423, %vm647
        %vm776 = vmor %vm424, %vm648
        %vm777 = vmor %vm425, %vm649
        %vm778 = vmor %vm426, %vm650
        %vm779 = vmor %vm427, %vm651
        %vm780 = vmor %vm428, %vm652
        %vm781 = vmor %vm429, %vm653
        %vm782 = vmor %vm430, %vm654
        %vm783 = vmor %vm431, %vm655
        %vm784 = vmor %vm432, %vm656
        %vm785 = vmor %vm433, %vm657
        %vm786 = vmor %vm434, %vm658
        %vm787 = vmor %vm435, %vm659
        %vm788 = vmor %vm436, %vm660
        %vm789 = vmor %vm437, %vm661
        %vm790 = vmor %vm438, %vm662
        %vm791 = vmor %vm439, %vm663
        %vm792 = vmor %vm440, %vm664
        %vm793 = vmor %vm441, %vm665
        %vm794 = vmor %vm442, %vm666
        %vm795 = vmor %vm443, %vm667
        %vm796 = vmor %vm444, %vm668
        %vm797 = vmor %vm445, %vm669
        %vm798 = vmor %vm446, %vm670
        %vm799 = vmor %vm447, %vm671
        %vm800 = vmor %vm448, %vm672
        %vm801 = vmor %vm449, %vm673
        %vm802 = vmor %vm450, %vm674
        %vm803 = vmor %vm451, %vm675
        %vm804 = vmor %vm452, %vm676
        %vm805 = vmor %vm453, %vm677
        %vm806 = vmor %vm454, %vm678
        %vm807 = vmor %vm455, %vm679
        %vm808 = vmor %vm456, %vm680
        %vm809 = vmor %vm457, %vm681
        %vm810 = vmor %vm458, %vm682
        %vm811 = vmor %vm459, %vm683
        %vm812 = vmor %vm460, %vm684
        %vm813 = vmor %vm461, %vm685
        %vm814 = vmor %vm462, %vm686
        %vm815 = vmor %vm463, %vm687
        %vm816 = vmor %vm464, %vm688
        %vm817 = vmor %vm465, %vm689
        %vm818 = vmor %vm466, %vm690
        %vm819 = vmor %vm467, %vm691
        %vm820 = vmor %vm468, %vm692
        %vm821 = vmor %vm469, %vm693
        %vm822 = vmor %vm470, %vm694
        %vm823 = vmor %vm471, %vm695
        %vm824 = vmor %vm472, %vm696
        %vm825 = vmor %vm473, %vm697
        %vm826 = vmor %vm474, %vm698
        %vm827 = vmor %vm475, %vm699
        %vm828 = vmor %vm476, %vm700
        %vm829 = vmor %vm477, %vm701
        %vm830 = vmor %vm478, %vm702
        %vm831 = vmor %vm479, %vm703
        %vm832 = vmor %vm480, %vm704
        %vm833 = vmor %vm481, %vm705
        %vm834 = vmor %vm482, %vm706
        %vm835 = vmor %vm483, %vm707
        %vm836 = vmor %vm484, %vm708
        %vm837 = vmor %vm485, %vm709
        %vm838 = vmor %vm486, %vm710
        %vm839 = vmor %vm487, %vm711
        %vm840 = vmor %vm488, %vm712
        %vm841 = vmor %vm489, %vm713
        %vm842 = vmor %vm490, %vm714
        %vm843 = vmor %vm491, %vm715
        %vm844 = vmor %vm492, %vm716
        %vm845 = vmor %vm493, %vm717
        %vm846 = vmor %vm494, %vm718
        %vm847 = vmor %vm495, %vm719
        %vm848 = vmor %vm496, %vm720
        %vm849 = vmor %vm497, %vm721
        %vm850 = vmor %vm498, %vm722
        %vm851 = vmor %vm499, %vm723
        %vm852 = vmor %vm500, %vm724
        %vm853 = vmor %vm501, %vm725
        %vm854 = vmor %vm502, %vm726
        %vm855 = vmor %vm503, %vm727
        %vm856 = vmor %vm504, %vm728
        %vm857 = vmor %vm505, %vm729
        %vm858 = vmor %vm506, %vm730
        %vm859 = vmor %vm507, %vm731
        %vm860 = vmor %vm508, %vm732
        %vm861 = vmor %vm509, %vm733
        %vm862 = vmor %vm510, %vm734
        %vm863 = vmor %vm511, %vm735
        %vm864 = vmor %vm512, %vm736
        %vm865 = vmor %vm513, %vm737
        %vm866 = vmor %vm514, %vm738
        %vm867 = vmor %vm515, %vm739
        %vm868 = vmor %vm516, %vm740
        %vm869 = vmor %vm517, %vm741
        %vm870 = vmor %vm518, %vm742
        %vm871 = vmor %vm519, %vm743
        %vm872 = vmor %vm520, %vm744
        %vm873 = vmor %vm521, %vm745
        %vm874 = vmor %vm522, %vm746
        %vm875 = vmor %vm523, %vm747
        %vm876 = vmor %vm524, %vm748
        %vm877 = vmor %vm525, %vm749
        %vm878 = vmor %vm526, %vm750
        %vm879 = vmor %vm527, %vm751
        %vm880 = vmor %vm528, %vm752
        %vm881 = vmor %vm529, %vm753
        %vm882 = vmor %vm530, %vm754
        %vm883 = vmor %vm531, %vm755
        %vm884 = vmor %vm532, %vm756
        %vm885 = vmor %vm533, %vm757
        %vm886 = vmor %vm534, %vm758
        %vm887 = vmor %vm535, %vm759
        %v888 = vsel %vm760, 1, 0
        %v889 = vsel %vm761, 1, 0
        %v890 = vsel %vm762, 1, 0
        %v891 = vsel %vm763, 1, 0
        %v892 = vsel %vm764, 1, 0
        %v893 = vsel %vm765, 1, 0
        %v894 = vsel %vm766, 1, 0
        %v895 = vsel %vm767, 1, 0
        %v896 = vsel %vm768, 1, 0
        %v897 = vsel %vm769, 1, 0
        %v898 = vsel %vm770, 1, 0
        %v899 = vsel %vm771, 1, 0
        %v900 = vsel %vm772, 1, 0
        %v901 = vsel %vm773, 1, 0
        %v902 = vsel %vm774, 1, 0
        %v903 = vsel %vm775, 1, 0
        %v904 = vsel %vm776, 1, 0
        %v905 = vsel %vm777, 1, 0
        %v906 = vsel %vm778, 1, 0
        %v907 = vsel %vm779, 1, 0
        %v908 = vsel %vm780, 1, 0
        %v909 = vsel %vm781, 1, 0
        %v910 = vsel %vm782, 1, 0
        %v911 = vsel %vm783, 1, 0
        %v912 = vsel %vm784, 1, 0
        %v913 = vsel %vm785, 1, 0
        %v914 = vsel %vm786, 1, 0
        %v915 = vsel %vm787, 1, 0
        %v916 = vsel %vm788, 1, 0
        %v917 = vsel %vm789, 1, 0
        %v918 = vsel %vm790, 1, 0
        %v919 = vsel %vm791, 1, 0
        %v920 = vsel %vm792, 1, 0
        %v921 = vsel %vm793, 1, 0
        %v922 = vsel %vm794, 1, 0
        %v923 = vsel %vm795, 1, 0
        %v924 = vsel %vm796, 1, 0
        %v925 = vsel %vm797, 1, 0
        %v926 = vsel %vm798, 1, 0
        %v927 = vsel %vm799, 1, 0
        %v928 = vsel %vm800, 1, 0
        %v929 = vsel %vm801, 1, 0
        %v930 = vsel %vm802, 1, 0
        %v931 = vsel %vm803, 1, 0
        %v932 = vsel %vm804, 1, 0
        %v933 = vsel %vm805, 1, 0
        %v934 = vsel %vm806, 1, 0
        %v935 = vsel %vm807, 1, 0
        %v936 = vsel %vm808, 1, 0
        %v937 = vsel %vm809, 1, 0
        %v938 = vsel %vm810, 1, 0
        %v939 = vsel %vm811, 1, 0
        %v940 = vsel %vm812, 1, 0
        %v941 = vsel %vm813, 1, 0
        %v942 = vsel %vm814, 1, 0
        %v943 = vsel %vm815, 1, 0
        %v944 = vsel %vm816, 1, 0
        %v945 = vsel %vm817, 1, 0
        %v946 = vsel %vm818, 1, 0
        %v947 = vsel %vm819, 1, 0
        %v948 = vsel %vm820, 1, 0
        %v949 = vsel %vm821, 1, 0
        %v950 = vsel %vm822, 1, 0
        %v951 = vsel %vm823, 1, 0
        %v952 = vsel %vm824, 1, 0
        %v953 = vsel %vm825, 1, 0
        %v954 = vsel %vm826, 1, 0
        %v955 = vsel %vm827, 1, 0
        %v956 = vsel %vm828, 1, 0
        %v957 = vsel %vm829, 1, 0
        %v958 = vsel %vm830, 1, 0
        %v959 = vsel %vm831, 1, 0
        %v960 = vsel %vm832, 1, 0
        %v961 = vsel %vm833, 1, 0
        %v962 = vsel %vm834, 1, 0
        %v963 = vsel %vm835, 1, 0
        %v964 = vsel %vm836, 1, 0
        %v965 = vsel %vm837, 1, 0
        %v966 = vsel %vm838, 1, 0
        %v967 = vsel %vm839, 1, 0
        %v968 = vsel %vm840, 1, 0
        %v969 = vsel %vm841, 1, 0
        %v970 = vsel %vm842, 1, 0
        %v971 = vsel %vm843, 1, 0
        %v972 = vsel %vm844, 1, 0
        %v973 = vsel %vm845, 1, 0
        %v974 = vsel %vm846, 1, 0
        %v975 = vsel %vm847, 1, 0
        %v976 = vsel %vm848, 1, 0
        %v977 = vsel %vm849, 1, 0
        %v978 = vsel %vm850, 1, 0
        %v979 = vsel %vm851, 1, 0
        %v980 = vsel %vm852, 1, 0
        %v981 = vsel %vm853, 1, 0
        %v982 = vsel %vm854, 1, 0
        %v983 = vsel %vm855, 1, 0
        %v984 = vsel %vm856, 1, 0
        %v985 = vsel %vm857, 1, 0
        %v986 = vsel %vm858, 1, 0
        %v987 = vsel %vm859, 1, 0
        %v988 = vsel %vm860, 1, 0
        %v989 = vsel %vm861, 1, 0
        %v990 = vsel %vm862, 1, 0
        %v991 = vsel %vm863, 1, 0
        %v992 = vsel %vm864, 1, 0
        %v993 = vsel %vm865, 1, 0
        %v994 = vsel %vm866, 1, 0
        %v995 = vsel %vm867, 1, 0
        %v996 = vsel %vm868, 1, 0
        %v997 = vsel %vm869, 1, 0
        %v998 = vsel %vm870, 1, 0
        %v999 = vsel %vm871, 1, 0
        %v1000 = vsel %vm872, 1, 0
        %v1001 = vsel %vm873, 1, 0
        %v1002 = vsel %vm874, 1, 0
        %v1003 = vsel %vm875, 1, 0
        %v1004 = vsel %vm876, 1, 0
        %v1005 = vsel %vm877, 1, 0
        %v1006 = vsel %vm878, 1, 0
        %v1007 = vsel %vm879, 1, 0
        %v1008 = vsel %vm880, 1, 0
        %v1009 = vsel %vm881, 1, 0
        %v1010 = vsel %vm882, 1, 0
        %v1011 = vsel %vm883, 1, 0
        %v1012 = vsel %vm884, 1, 0
        %v1013 = vsel %vm885, 1, 0
        %v1014 = vsel %vm886, 1, 0
        %v1015 = vsel %vm887, 1, 0
        %v1016 = vcvt.s32.f32 %v888
        %v1017 = vcvt.s32.f32 %v889
        %v1018 = vcvt.s32.f32 %v890
        %v1019 = vcvt.s32.f32 %v891
        %v1020 = vcvt.s32.f32 %v892
        %v1021 = vcvt.s32.f32 %v893
        %v1022 = vcvt.s32.f32 %v894
        %v1023 = vcvt.s32.f32 %v895
        %v1024 = vcvt.s32.f32 %v896
        %v1025 = vcvt.s32.f32 %v897
        %v1026 = vcvt.s32.f32 %v898
        %v1027 = vcvt.s32.f32 %v899
        %v1028 = vcvt.s32.f32 %v900
        %v1029 = vcvt.s32.f32 %v901
        %v1030 = vcvt.s32.f32 %v902
        %v1031 = vcvt.s32.f32 %v903
        %v1032 = vcvt.s32.f32 %v904
        %v1033 = vcvt.s32.f32 %v905
        %v1034 = vcvt.s32.f32 %v906
        %v1035 = vcvt.s32.f32 %v907
        %v1036 = vcvt.s32.f32 %v908
        %v1037 = vcvt.s32.f32 %v909
        %v1038 = vcvt.s32.f32 %v910
        %v1039 = vcvt.s32.f32 %v911
        %v1040 = vcvt.s32.f32 %v912
        %v1041 = vcvt.s32.f32 %v913
        %v1042 = vcvt.s32.f32 %v914
        %v1043 = vcvt.s32.f32 %v915
        %v1044 = vcvt.s32.f32 %v916
        %v1045 = vcvt.s32.f32 %v917
        %v1046 = vcvt.s32.f32 %v918
        %v1047 = vcvt.s32.f32 %v919
        %v1048 = vcvt.s32.f32 %v920
        %v1049 = vcvt.s32.f32 %v921
        %v1050 = vcvt.s32.f32 %v922
        %v1051 = vcvt.s32.f32 %v923
        %v1052 = vcvt.s32.f32 %v924
        %v1053 = vcvt.s32.f32 %v925
        %v1054 = vcvt.s32.f32 %v926
        %v1055 = vcvt.s32.f32 %v927
        %v1056 = vcvt.s32.f32 %v928
        %v1057 = vcvt.s32.f32 %v929
        %v1058 = vcvt.s32.f32 %v930
        %v1059 = vcvt.s32.f32 %v931
        %v1060 = vcvt.s32.f32 %v932
        %v1061 = vcvt.s32.f32 %v933
        %v1062 = vcvt.s32.f32 %v934
        %v1063 = vcvt.s32.f32 %v935
        %v1064 = vcvt.s32.f32 %v936
        %v1065 = vcvt.s32.f32 %v937
        %v1066 = vcvt.s32.f32 %v938
        %v1067 = vcvt.s32.f32 %v939
        %v1068 = vcvt.s32.f32 %v940
        %v1069 = vcvt.s32.f32 %v941
        %v1070 = vcvt.s32.f32 %v942
        %v1071 = vcvt.s32.f32 %v943
        %v1072 = vcvt.s32.f32 %v944
        %v1073 = vcvt.s32.f32 %v945
        %v1074 = vcvt.s32.f32 %v946
        %v1075 = vcvt.s32.f32 %v947
        %v1076 = vcvt.s32.f32 %v948
        %v1077 = vcvt.s32.f32 %v949
        %v1078 = vcvt.s32.f32 %v950
        %v1079 = vcvt.s32.f32 %v951
        %v1080 = vcvt.s32.f32 %v952
        %v1081 = vcvt.s32.f32 %v953
        %v1082 = vcvt.s32.f32 %v954
        %v1083 = vcvt.s32.f32 %v955
        %v1084 = vcvt.s32.f32 %v956
        %v1085 = vcvt.s32.f32 %v957
        %v1086 = vcvt.s32.f32 %v958
        %v1087 = vcvt.s32.f32 %v959
        %v1088 = vcvt.s32.f32 %v960
        %v1089 = vcvt.s32.f32 %v961
        %v1090 = vcvt.s32.f32 %v962
        %v1091 = vcvt.s32.f32 %v963
        %v1092 = vcvt.s32.f32 %v964
        %v1093 = vcvt.s32.f32 %v965
        %v1094 = vcvt.s32.f32 %v966
        %v1095 = vcvt.s32.f32 %v967
        %v1096 = vcvt.s32.f32 %v968
        %v1097 = vcvt.s32.f32 %v969
        %v1098 = vcvt.s32.f32 %v970
        %v1099 = vcvt.s32.f32 %v971
        %v1100 = vcvt.s32.f32 %v972
        %v1101 = vcvt.s32.f32 %v973
        %v1102 = vcvt.s32.f32 %v974
        %v1103 = vcvt.s32.f32 %v975
        %v1104 = vcvt.s32.f32 %v976
        %v1105 = vcvt.s32.f32 %v977
        %v1106 = vcvt.s32.f32 %v978
        %v1107 = vcvt.s32.f32 %v979
        %v1108 = vcvt.s32.f32 %v980
        %v1109 = vcvt.s32.f32 %v981
        %v1110 = vcvt.s32.f32 %v982
        %v1111 = vcvt.s32.f32 %v983
        %v1112 = vcvt.s32.f32 %v984
        %v1113 = vcvt.s32.f32 %v985
        %v1114 = vcvt.s32.f32 %v986
        %v1115 = vcvt.s32.f32 %v987
        %v1116 = vcvt.s32.f32 %v988
        %v1117 = vcvt.s32.f32 %v989
        %v1118 = vcvt.s32.f32 %v990
        %v1119 = vcvt.s32.f32 %v991
        %v1120 = vcvt.s32.f32 %v992
        %v1121 = vcvt.s32.f32 %v993
        %v1122 = vcvt.s32.f32 %v994
        %v1123 = vcvt.s32.f32 %v995
        %v1124 = vcvt.s32.f32 %v996
        %v1125 = vcvt.s32.f32 %v997
        %v1126 = vcvt.s32.f32 %v998
        %v1127 = vcvt.s32.f32 %v999
        %v1128 = vcvt.s32.f32 %v1000
        %v1129 = vcvt.s32.f32 %v1001
        %v1130 = vcvt.s32.f32 %v1002
        %v1131 = vcvt.s32.f32 %v1003
        %v1132 = vcvt.s32.f32 %v1004
        %v1133 = vcvt.s32.f32 %v1005
        %v1134 = vcvt.s32.f32 %v1006
        %v1135 = vcvt.s32.f32 %v1007
        %v1136 = vcvt.s32.f32 %v1008
        %v1137 = vcvt.s32.f32 %v1009
        %v1138 = vcvt.s32.f32 %v1010
        %v1139 = vcvt.s32.f32 %v1011
        %v1140 = vcvt.s32.f32 %v1012
        %v1141 = vcvt.s32.f32 %v1013
        %v1142 = vcvt.s32.f32 %v1014
        %v1143 = vcvt.s32.f32 %v1015
        %v1144 = vld [vmem:[%s240] sm:$0xff]
        %v1145 = vld [vmem:[%s240 + $0x8] sm:$0xff]
        %v1146 = vld [vmem:[%s240 + $0x10] sm:$0xff]
        %v1147 = vld [vmem:[%s240 + $0x18] sm:$0xff]
        %v1148 = vld [vmem:[%s240 + $0x20] sm:$0xff]
        %v1149 = vld [vmem:[%s240 + $0x28] sm:$0xff]
        %v1150 = vld [vmem:[%s240 + $0x30] sm:$0xff]
        %v1151 = vld [vmem:[%s240 + $0x38] sm:$0xff]
        %v1152 = vld [vmem:[%s240 + $0x40] sm:$0xff]
        %v1153 = vld [vmem:[%s240 + $0x48] sm:$0xff]
        %v1154 = vld [vmem:[%s240 + $0x50] sm:$0xff]
        %v1155 = vld [vmem:[%s240 + $0x58] sm:$0xff]
        %v1156 = vld [vmem:[%s240 + $0x60] sm:$0xff]
        %v1157 = vld [vmem:[%s240 + $0x68] sm:$0xff]
        %v1158 = vld [vmem:[%s240 + $0x70] sm:$0xff]
        %v1159 = vld [vmem:[%s240 + $0x78] sm:$0xff]
        %v1160 = vld [vmem:[%s240 + $0x80] sm:$0xff]
        %v1161 = vld [vmem:[%s240 + $0x88] sm:$0xff]
        %v1162 = vld [vmem:[%s240 + $0x90] sm:$0xff]
        %v1163 = vld [vmem:[%s240 + $0x98] sm:$0xff]
        %v1164 = vld [vmem:[%s240 + $0xa0] sm:$0xff]
        %v1165 = vld [vmem:[%s240 + $0xa8] sm:$0xff]
        %v1166 = vld [vmem:[%s240 + $0xb0] sm:$0xff]
        %v1167 = vld [vmem:[%s240 + $0xb8] sm:$0xff]
        %v1168 = vld [vmem:[%s240 + $0xc0] sm:$0xff]
        %v1169 = vld [vmem:[%s240 + $0xc8] sm:$0xff]
        %v1170 = vld [vmem:[%s240 + $0xd0] sm:$0xff]
        %v1171 = vld [vmem:[%s240 + $0xd8] sm:$0xff]
        %v1172 = vld [vmem:[%s240 + $0xe0] sm:$0xff]
        %v1173 = vld [vmem:[%s240 + $0xe8] sm:$0xff]
        %v1174 = vld [vmem:[%s240 + $0xf0] sm:$0xff]
        %v1175 = vld [vmem:[%s240 + $0xf8] sm:$0xff]
        %1177 = vset.pattern.permute.xlu0 0
        %1178 = vperm.xlu0 %1177, %v1144
        %v1179 = vpop.permute.xlu0 %1178
        %1182 = vset.pattern.permute.xlu0 0
        %1183 = vperm.xlu0 %1182, %v1145
        %v1184 = vpop.permute.xlu0 %1183
        %1187 = vset.pattern.permute.xlu0 0
        %1188 = vperm.xlu0 %1187, %v1146
        %v1189 = vpop.permute.xlu0 %1188
        %1192 = vset.pattern.permute.xlu0 0
        %1193 = vperm.xlu0 %1192, %v1147
        %v1194 = vpop.permute.xlu0 %1193
        %1197 = vset.pattern.permute.xlu0 0
        %1198 = vperm.xlu0 %1197, %v1148
        %v1199 = vpop.permute.xlu0 %1198
        %1202 = vset.pattern.permute.xlu0 0
        %1203 = vperm.xlu0 %1202, %v1149
        %v1204 = vpop.permute.xlu0 %1203
        %1207 = vset.pattern.permute.xlu0 0
        %1208 = vperm.xlu0 %1207, %v1150
        %v1209 = vpop.permute.xlu0 %1208
        %1212 = vset.pattern.permute.xlu0 0
        %1213 = vperm.xlu0 %1212, %v1151
        %v1214 = vpop.permute.xlu0 %1213
        %1217 = vset.pattern.permute.xlu0 0
        %1218 = vperm.xlu0 %1217, %v1152
        %v1219 = vpop.permute.xlu0 %1218
        %1222 = vset.pattern.permute.xlu0 0
        %1223 = vperm.xlu0 %1222, %v1153
        %v1224 = vpop.permute.xlu0 %1223
        %1227 = vset.pattern.permute.xlu0 0
        %1228 = vperm.xlu0 %1227, %v1154
        %v1229 = vpop.permute.xlu0 %1228
        %1232 = vset.pattern.permute.xlu0 0
        %1233 = vperm.xlu0 %1232, %v1155
        %v1234 = vpop.permute.xlu0 %1233
        %1237 = vset.pattern.permute.xlu0 0
        %1238 = vperm.xlu0 %1237, %v1156
        %v1239 = vpop.permute.xlu0 %1238
        %1242 = vset.pattern.permute.xlu0 0
        %1243 = vperm.xlu0 %1242, %v1157
        %v1244 = vpop.permute.xlu0 %1243
        %1247 = vset.pattern.permute.xlu0 0
        %1248 = vperm.xlu0 %1247, %v1158
        %v1249 = vpop.permute.xlu0 %1248
        %1252 = vset.pattern.permute.xlu0 0
        %1253 = vperm.xlu0 %1252, %v1159
        %v1254 = vpop.permute.xlu0 %1253
        %1257 = vset.pattern.permute.xlu0 0
        %1258 = vperm.xlu0 %1257, %v1160
        %v1259 = vpop.permute.xlu0 %1258
        %1262 = vset.pattern.permute.xlu0 0
        %1263 = vperm.xlu0 %1262, %v1161
        %v1264 = vpop.permute.xlu0 %1263
        %1267 = vset.pattern.permute.xlu0 0
        %1268 = vperm.xlu0 %1267, %v1162
        %v1269 = vpop.permute.xlu0 %1268
        %1272 = vset.pattern.permute.xlu0 0
        %1273 = vperm.xlu0 %1272, %v1163
        %v1274 = vpop.permute.xlu0 %1273
        %1277 = vset.pattern.permute.xlu0 0
        %1278 = vperm.xlu0 %1277, %v1164
        %v1279 = vpop.permute.xlu0 %1278
        %1282 = vset.pattern.permute.xlu0 0
        %1283 = vperm.xlu0 %1282, %v1165
        %v1284 = vpop.permute.xlu0 %1283
        %1287 = vset.pattern.permute.xlu0 0
        %1288 = vperm.xlu0 %1287, %v1166
        %v1289 = vpop.permute.xlu0 %1288
        %1292 = vset.pattern.permute.xlu0 0
        %1293 = vperm.xlu0 %1292, %v1167
        %v1294 = vpop.permute.xlu0 %1293
        %1297 = vset.pattern.permute.xlu0 0
        %1298 = vperm.xlu0 %1297, %v1168
        %v1299 = vpop.permute.xlu0 %1298
        %1302 = vset.pattern.permute.xlu0 0
        %1303 = vperm.xlu0 %1302, %v1169
        %v1304 = vpop.permute.xlu0 %1303
        %1307 = vset.pattern.permute.xlu0 0
        %1308 = vperm.xlu0 %1307, %v1170
        %v1309 = vpop.permute.xlu0 %1308
        %1312 = vset.pattern.permute.xlu0 0
        %1313 = vperm.xlu0 %1312, %v1171
        %v1314 = vpop.permute.xlu0 %1313
        %1317 = vset.pattern.permute.xlu0 0
        %1318 = vperm.xlu0 %1317, %v1172
        %v1319 = vpop.permute.xlu0 %1318
        %1322 = vset.pattern.permute.xlu0 0
        %1323 = vperm.xlu0 %1322, %v1173
        %v1324 = vpop.permute.xlu0 %1323
        %1327 = vset.pattern.permute.xlu0 0
        %1328 = vperm.xlu0 %1327, %v1174
        %v1329 = vpop.permute.xlu0 %1328
        %1332 = vset.pattern.permute.xlu0 0
        %1333 = vperm.xlu0 %1332, %v1175
        %v1334 = vpop.permute.xlu0 %1333
        %v1336 = vmul.f32 %v1016, %v1179
        %v1337 = vmul.f32 %v1017, %v1179
        %v1338 = vmul.f32 %v1018, %v1179
        %v1339 = vmul.f32 %v1019, %v1179
        %v1340 = vmul.f32 %v1020, %v1184
        %v1341 = vmul.f32 %v1021, %v1184
        %v1342 = vmul.f32 %v1022, %v1184
        %v1343 = vmul.f32 %v1023, %v1184
        %v1344 = vmul.f32 %v1024, %v1189
        %v1345 = vmul.f32 %v1025, %v1189
        %v1346 = vmul.f32 %v1026, %v1189
        %v1347 = vmul.f32 %v1027, %v1189
        %v1348 = vmul.f32 %v1028, %v1194
        %v1349 = vmul.f32 %v1029, %v1194
        %v1350 = vmul.f32 %v1030, %v1194
        %v1351 = vmul.f32 %v1031, %v1194
        %v1352 = vmul.f32 %v1032, %v1199
        %v1353 = vmul.f32 %v1033, %v1199
        %v1354 = vmul.f32 %v1034, %v1199
        %v1355 = vmul.f32 %v1035, %v1199
        %v1356 = vmul.f32 %v1036, %v1204
        %v1357 = vmul.f32 %v1037, %v1204
        %v1358 = vmul.f32 %v1038, %v1204
        %v1359 = vmul.f32 %v1039, %v1204
        %v1360 = vmul.f32 %v1040, %v1209
        %v1361 = vmul.f32 %v1041, %v1209
        %v1362 = vmul.f32 %v1042, %v1209
        %v1363 = vmul.f32 %v1043, %v1209
        %v1364 = vmul.f32 %v1044, %v1214
        %v1365 = vmul.f32 %v1045, %v1214
        %v1366 = vmul.f32 %v1046, %v1214
        %v1367 = vmul.f32 %v1047, %v1214
        %v1368 = vmul.f32 %v1048, %v1219
        %v1369 = vmul.f32 %v1049, %v1219
        %v1370 = vmul.f32 %v1050, %v1219
        %v1371 = vmul.f32 %v1051, %v1219
        %v1372 = vmul.f32 %v1052, %v1224
        %v1373 = vmul.f32 %v1053, %v1224
        %v1374 = vmul.f32 %v1054, %v1224
        %v1375 = vmul.f32 %v1055, %v1224
        %v1376 = vmul.f32 %v1056, %v1229
        %v1377 = vmul.f32 %v1057, %v1229
        %v1378 = vmul.f32 %v1058, %v1229
        %v1379 = vmul.f32 %v1059, %v1229
        %v1380 = vmul.f32 %v1060, %v1234
        %v1381 = vmul.f32 %v1061, %v1234
        %v1382 = vmul.f32 %v1062, %v1234
        %v1383 = vmul.f32 %v1063, %v1234
        %v1384 = vmul.f32 %v1064, %v1239
        %v1385 = vmul.f32 %v1065, %v1239
        %v1386 = vmul.f32 %v1066, %v1239
        %v1387 = vmul.f32 %v1067, %v1239
        %v1388 = vmul.f32 %v1068, %v1244
        %v1389 = vmul.f32 %v1069, %v1244
        %v1390 = vmul.f32 %v1070, %v1244
        %v1391 = vmul.f32 %v1071, %v1244
        %v1392 = vmul.f32 %v1072, %v1249
        %v1393 = vmul.f32 %v1073, %v1249
        %v1394 = vmul.f32 %v1074, %v1249
        %v1395 = vmul.f32 %v1075, %v1249
        %v1396 = vmul.f32 %v1076, %v1254
        %v1397 = vmul.f32 %v1077, %v1254
        %v1398 = vmul.f32 %v1078, %v1254
        %v1399 = vmul.f32 %v1079, %v1254
        %v1400 = vmul.f32 %v1080, %v1259
        %v1401 = vmul.f32 %v1081, %v1259
        %v1402 = vmul.f32 %v1082, %v1259
        %v1403 = vmul.f32 %v1083, %v1259
        %v1404 = vmul.f32 %v1084, %v1264
        %v1405 = vmul.f32 %v1085, %v1264
        %v1406 = vmul.f32 %v1086, %v1264
        %v1407 = vmul.f32 %v1087, %v1264
        %v1408 = vmul.f32 %v1088, %v1269
        %v1409 = vmul.f32 %v1089, %v1269
        %v1410 = vmul.f32 %v1090, %v1269
        %v1411 = vmul.f32 %v1091, %v1269
        %v1412 = vmul.f32 %v1092, %v1274
        %v1413 = vmul.f32 %v1093, %v1274
        %v1414 = vmul.f32 %v1094, %v1274
        %v1415 = vmul.f32 %v1095, %v1274
        %v1416 = vmul.f32 %v1096, %v1279
        %v1417 = vmul.f32 %v1097, %v1279
        %v1418 = vmul.f32 %v1098, %v1279
        %v1419 = vmul.f32 %v1099, %v1279
        %v1420 = vmul.f32 %v1100, %v1284
        %v1421 = vmul.f32 %v1101, %v1284
        %v1422 = vmul.f32 %v1102, %v1284
        %v1423 = vmul.f32 %v1103, %v1284
        %v1424 = vmul.f32 %v1104, %v1289
        %v1425 = vmul.f32 %v1105, %v1289
        %v1426 = vmul.f32 %v1106, %v1289
        %v1427 = vmul.f32 %v1107, %v1289
        %v1428 = vmul.f32 %v1108, %v1294
        %v1429 = vmul.f32 %v1109, %v1294
        %v1430 = vmul.f32 %v1110, %v1294
        %v1431 = vmul.f32 %v1111, %v1294
        %v1432 = vmul.f32 %v1112, %v1299
        %v1433 = vmul.f32 %v1113, %v1299
        %v1434 = vmul.f32 %v1114, %v1299
        %v1435 = vmul.f32 %v1115, %v1299
        %v1436 = vmul.f32 %v1116, %v1304
        %v1437 = vmul.f32 %v1117, %v1304
        %v1438 = vmul.f32 %v1118, %v1304
        %v1439 = vmul.f32 %v1119, %v1304
        %v1440 = vmul.f32 %v1120, %v1309
        %v1441 = vmul.f32 %v1121, %v1309
        %v1442 = vmul.f32 %v1122, %v1309
        %v1443 = vmul.f32 %v1123, %v1309
        %v1444 = vmul.f32 %v1124, %v1314
        %v1445 = vmul.f32 %v1125, %v1314
        %v1446 = vmul.f32 %v1126, %v1314
        %v1447 = vmul.f32 %v1127, %v1314
        %v1448 = vmul.f32 %v1128, %v1319
        %v1449 = vmul.f32 %v1129, %v1319
        %v1450 = vmul.f32 %v1130, %v1319
        %v1451 = vmul.f32 %v1131, %v1319
        %v1452 = vmul.f32 %v1132, %v1324
        %v1453 = vmul.f32 %v1133, %v1324
        %v1454 = vmul.f32 %v1134, %v1324
        %v1455 = vmul.f32 %v1135, %v1324
        %v1456 = vmul.f32 %v1136, %v1329
        %v1457 = vmul.f32 %v1137, %v1329
        %v1458 = vmul.f32 %v1138, %v1329
        %v1459 = vmul.f32 %v1139, %v1329
        %v1460 = vmul.f32 %v1140, %v1334
        %v1461 = vmul.f32 %v1141, %v1334
        %v1462 = vmul.f32 %v1142, %v1334
        %v1463 = vmul.f32 %v1143, %v1334
        %v1464 = vld [vmem:[%s3] sm:$0xff]
        %v1465 = vld [vmem:[%s3 + $0x8] sm:$0xff]
        %v1466 = vld [vmem:[%s3 + $0x10] sm:$0xff]
        %v1467 = vld [vmem:[%s3 + $0x18] sm:$0xff]
        %v1468 = vld [vmem:[%s3 + $0x20] sm:$0xff]
        %v1469 = vld [vmem:[%s3 + $0x28] sm:$0xff]
        %v1470 = vld [vmem:[%s3 + $0x30] sm:$0xff]
        %v1471 = vld [vmem:[%s3 + $0x38] sm:$0xff]
        %v1472 = vld [vmem:[%s3 + $0x40] sm:$0xff]
        %v1473 = vld [vmem:[%s3 + $0x48] sm:$0xff]
        %v1474 = vld [vmem:[%s3 + $0x50] sm:$0xff]
        %v1475 = vld [vmem:[%s3 + $0x58] sm:$0xff]
        %v1476 = vld [vmem:[%s3 + $0x60] sm:$0xff]
        %v1477 = vld [vmem:[%s3 + $0x68] sm:$0xff]
        %v1478 = vld [vmem:[%s3 + $0x70] sm:$0xff]
        %v1479 = vld [vmem:[%s3 + $0x78] sm:$0xff]
        %v1480 = vld [vmem:[%s3 + $0x80] sm:$0xff]
        %v1481 = vld [vmem:[%s3 + $0x88] sm:$0xff]
        %v1482 = vld [vmem:[%s3 + $0x90] sm:$0xff]
        %v1483 = vld [vmem:[%s3 + $0x98] sm:$0xff]
        %v1484 = vld [vmem:[%s3 + $0xa0] sm:$0xff]
        %v1485 = vld [vmem:[%s3 + $0xa8] sm:$0xff]
        %v1486 = vld [vmem:[%s3 + $0xb0] sm:$0xff]
        %v1487 = vld [vmem:[%s3 + $0xb8] sm:$0xff]
        %v1488 = vld [vmem:[%s3 + $0xc0] sm:$0xff]
        %v1489 = vld [vmem:[%s3 + $0xc8] sm:$0xff]
        %v1490 = vld [vmem:[%s3 + $0xd0] sm:$0xff]
        %v1491 = vld [vmem:[%s3 + $0xd8] sm:$0xff]
        %v1492 = vld [vmem:[%s3 + $0xe0] sm:$0xff]
        %v1493 = vld [vmem:[%s3 + $0xe8] sm:$0xff]
        %v1494 = vld [vmem:[%s3 + $0xf0] sm:$0xff]
        %v1495 = vld [vmem:[%s3 + $0xf8] sm:$0xff]
        %v1496 = vld [vmem:[%s3 + $0x100] sm:$0xff]
        %v1497 = vld [vmem:[%s3 + $0x108] sm:$0xff]
        %v1498 = vld [vmem:[%s3 + $0x110] sm:$0xff]
        %v1499 = vld [vmem:[%s3 + $0x118] sm:$0xff]
        %v1500 = vld [vmem:[%s3 + $0x120] sm:$0xff]
        %v1501 = vld [vmem:[%s3 + $0x128] sm:$0xff]
        %v1502 = vld [vmem:[%s3 + $0x130] sm:$0xff]
        %v1503 = vld [vmem:[%s3 + $0x138] sm:$0xff]
        %v1504 = vld [vmem:[%s3 + $0x140] sm:$0xff]
        %v1505 = vld [vmem:[%s3 + $0x148] sm:$0xff]
        %v1506 = vld [vmem:[%s3 + $0x150] sm:$0xff]
        %v1507 = vld [vmem:[%s3 + $0x158] sm:$0xff]
        %v1508 = vld [vmem:[%s3 + $0x160] sm:$0xff]
        %v1509 = vld [vmem:[%s3 + $0x168] sm:$0xff]
        %v1510 = vld [vmem:[%s3 + $0x170] sm:$0xff]
        %v1511 = vld [vmem:[%s3 + $0x178] sm:$0xff]
        %v1512 = vld [vmem:[%s3 + $0x180] sm:$0xff]
        %v1513 = vld [vmem:[%s3 + $0x188] sm:$0xff]
        %v1514 = vld [vmem:[%s3 + $0x190] sm:$0xff]
        %v1515 = vld [vmem:[%s3 + $0x198] sm:$0xff]
        %v1516 = vld [vmem:[%s3 + $0x1a0] sm:$0xff]
        %v1517 = vld [vmem:[%s3 + $0x1a8] sm:$0xff]
        %v1518 = vld [vmem:[%s3 + $0x1b0] sm:$0xff]
        %v1519 = vld [vmem:[%s3 + $0x1b8] sm:$0xff]
        %v1520 = vld [vmem:[%s3 + $0x1c0] sm:$0xff]
        %v1521 = vld [vmem:[%s3 + $0x1c8] sm:$0xff]
        %v1522 = vld [vmem:[%s3 + $0x1d0] sm:$0xff]
        %v1523 = vld [vmem:[%s3 + $0x1d8] sm:$0xff]
        %v1524 = vld [vmem:[%s3 + $0x1e0] sm:$0xff]
        %v1525 = vld [vmem:[%s3 + $0x1e8] sm:$0xff]
        %v1526 = vld [vmem:[%s3 + $0x1f0] sm:$0xff]
        %v1527 = vld [vmem:[%s3 + $0x1f8] sm:$0xff]
        %1528 = vmatprep.subr.mxu0 0.0
        %1529 = vmatpush1.msra.mxu0 %v1464
        %1530 = vmatprep.subr.mxu0 0.0
        %1531 = vmatpush1.msra.mxu0 %v1465
        %1532 = vmatprep.subr.mxu0 0.0
        %1533 = vmatpush1.msra.mxu0 %v1466
        %1534 = vmatprep.subr.mxu0 0.0
        %1535 = vmatpush1.msra.mxu0 %v1467
        %1536 = vmatprep.subr.mxu0 0.0
        %1537 = vmatpush1.msra.mxu0 %v1468
        %1538 = vmatprep.subr.mxu0 0.0
        %1539 = vmatpush1.msra.mxu0 %v1469
        %1540 = vmatprep.subr.mxu0 0.0
        %1541 = vmatpush1.msra.mxu0 %v1470
        %1542 = vmatprep.subr.mxu0 0.0
        %1543 = vmatpush1.msra.mxu0 %v1471
        %1544 = vmatprep.subr.mxu0 0.0
        %1545 = vmatpush1.msra.mxu0 %v1472
        %1546 = vmatprep.subr.mxu0 0.0
        %1547 = vmatpush1.msra.mxu0 %v1473
        %1548 = vmatprep.subr.mxu0 0.0
        %1549 = vmatpush1.msra.mxu0 %v1474
        %1550 = vmatprep.subr.mxu0 0.0
        %1551 = vmatpush1.msra.mxu0 %v1475
        %1552 = vmatprep.subr.mxu0 0.0
        %1553 = vmatpush1.msra.mxu0 %v1476
        %1554 = vmatprep.subr.mxu0 0.0
        %1555 = vmatpush1.msra.mxu0 %v1477
        %1556 = vmatprep.subr.mxu0 0.0
        %1557 = vmatpush1.msra.mxu0 %v1478
        %1558 = vmatprep.subr.mxu0 0.0
        %1559 = vmatpush1.msra.mxu0 %v1479
        %1560 = vmatprep.subr.mxu0 0.0
        %1561 = vmatpush1.msra.mxu0 %v1480
        %1562 = vmatprep.subr.mxu0 0.0
        %1563 = vmatpush1.msra.mxu0 %v1481
        %1564 = vmatprep.subr.mxu0 0.0
        %1565 = vmatpush1.msra.mxu0 %v1482
        %1566 = vmatprep.subr.mxu0 0.0
        %1567 = vmatpush1.msra.mxu0 %v1483
        %1568 = vmatprep.subr.mxu0 0.0
        %1569 = vmatpush1.msra.mxu0 %v1484
        %1570 = vmatprep.subr.mxu0 0.0
        %1571 = vmatpush1.msra.mxu0 %v1485
        %1572 = vmatprep.subr.mxu0 0.0
        %1573 = vmatpush1.msra.mxu0 %v1486
        %1574 = vmatprep.subr.mxu0 0.0
        %1575 = vmatpush1.msra.mxu0 %v1487
        %1576 = vmatprep.subr.mxu0 0.0
        %1577 = vmatpush1.msra.mxu0 %v1488
        %1578 = vmatprep.subr.mxu0 0.0
        %1579 = vmatpush1.msra.mxu0 %v1489
        %1580 = vmatprep.subr.mxu0 0.0
        %1581 = vmatpush1.msra.mxu0 %v1490
        %1582 = vmatprep.subr.mxu0 0.0
        %1583 = vmatpush1.msra.mxu0 %v1491
        %1584 = vmatprep.subr.mxu0 0.0
        %1585 = vmatpush1.msra.mxu0 %v1492
        %1586 = vmatprep.subr.mxu0 0.0
        %1587 = vmatpush1.msra.mxu0 %v1493
        %1588 = vmatprep.subr.mxu0 0.0
        %1589 = vmatpush1.msra.mxu0 %v1494
        %1590 = vmatprep.subr.mxu0 0.0
        %1591 = vmatpush1.msra.mxu0 %v1495
        %1592 = vmatprep.mubr.f32.mxu0 %v1337
        %1593 = vmatmul.mubr.f32.gmra.mrb[0].mxu0 %v1336
        %v1594 = vpop.f32.mrb[0].mxu0
        %v1595 = vadd.f32 0.0, %v1594
        %v1596 = vpop.f32.mrb[0].mxu0
        %1597 = vmatprep.mubr.f32.mxu0 %v1341
        %1598 = vmatmul.mubr.f32.gmra.mrb[0].mxu0 %v1340
        %v1599 = vpop.f32.mrb[0].mxu0
        %v1600 = vadd.f32 0.0, %v1599
        %v1601 = vpop.f32.mrb[0].mxu0
        %1602 = vmatprep.mubr.f32.mxu0 %v1345
        %1603 = vmatmul.mubr.f32.gmra.mrb[0].mxu0 %v1344
        %v1604 = vpop.f32.mrb[0].mxu0
        %v1605 = vadd.f32 0.0, %v1604
        %v1606 = vpop.f32.mrb[0].mxu0
        %1607 = vmatprep.mubr.f32.mxu0 %v1349
        %1608 = vmatmul.mubr.f32.gmra.mrb[0].mxu0 %v1348
        %v1609 = vpop.f32.mrb[0].mxu0
        %v1610 = vadd.f32 0.0, %v1609
        %v1611 = vpop.f32.mrb[0].mxu0
        %1612 = vmatprep.mubr.f32.mxu0 %v1353
        %1613 = vmatmul.mubr.f32.gmra.mrb[0].mxu0 %v1352
        %v1614 = vpop.f32.mrb[0].mxu0
        %v1615 = vadd.f32 0.0, %v1614
        %v1616 = vpop.f32.mrb[0].mxu0
        %1617 = vmatprep.mubr.f32.mxu0 %v1357
        %1618 = vmatmul.mubr.f32.gmra.mrb[0].mxu0 %v1356
        %v1619 = vpop.f32.mrb[0].mxu0
        %v1620 = vadd.f32 0.0, %v1619
        %v1621 = vpop.f32.mrb[0].mxu0
        %1622 = vmatprep.mubr.f32.mxu0 %v1361
        %1623 = vmatmul.mubr.f32.gmra.mrb[0].mxu0 %v1360
        %v1624 = vpop.f32.mrb[0].mxu0
        %v1625 = vadd.f32 0.0, %v1624
        %v1626 = vpop.f32.mrb[0].mxu0
        %1627 = vmatprep.mubr.f32.mxu0 %v1365
        %1628 = vmatmul.mubr.f32.gmra.mrb[0].mxu0 %v1364
        %v1629 = vpop.f32.mrb[0].mxu0
        %v1630 = vadd.f32 0.0, %v1629
        %v1631 = vpop.f32.mrb[0].mxu0
        %1632 = vmatprep.mubr.f32.mxu0 %v1369
        %1633 = vmatmul.mubr.f32.gmra.mrb[0].mxu0 %v1368
        %v1634 = vpop.f32.mrb[0].mxu0
        %v1635 = vadd.f32 0.0, %v1634
        %v1636 = vpop.f32.mrb[0].mxu0
        %1637 = vmatprep.mubr.f32.mxu0 %v1373
        %1638 = vmatmul.mubr.f32.gmra.mrb[0].mxu0 %v1372
        %v1639 = vpop.f32.mrb[0].mxu0
        %v1640 = vadd.f32 0.0, %v1639
        %v1641 = vpop.f32.mrb[0].mxu0
        %1642 = vmatprep.mubr.f32.mxu0 %v1377
        %1643 = vmatmul.mubr.f32.gmra.mrb[0].mxu0 %v1376
        %v1644 = vpop.f32.mrb[0].mxu0
        %v1645 = vadd.f32 0.0, %v1644
        %v1646 = vpop.f32.mrb[0].mxu0
        %1647 = vmatprep.mubr.f32.mxu0 %v1381
        %1648 = vmatmul.mubr.f32.gmra.mrb[0].mxu0 %v1380
        %v1649 = vpop.f32.mrb[0].mxu0
        %v1650 = vadd.f32 0.0, %v1649
        %v1651 = vpop.f32.mrb[0].mxu0
        %1652 = vmatprep.mubr.f32.mxu0 %v1385
        %1653 = vmatmul.mubr.f32.gmra.mrb[0].mxu0 %v1384
        %v1654 = vpop.f32.mrb[0].mxu0
        %v1655 = vadd.f32 0.0, %v1654
        %v1656 = vpop.f32.mrb[0].mxu0
        %1657 = vmatprep.mubr.f32.mxu0 %v1389
        %1658 = vmatmul.mubr.f32.gmra.mrb[0].mxu0 %v1388
        %v1659 = vpop.f32.mrb[0].mxu0
        %v1660 = vadd.f32 0.0, %v1659
        %v1661 = vpop.f32.mrb[0].mxu0
        %1662 = vmatprep.mubr.f32.mxu0 %v1393
        %1663 = vmatmul.mubr.f32.gmra.mrb[0].mxu0 %v1392
        %v1664 = vpop.f32.mrb[0].mxu0
        %v1665 = vadd.f32 0.0, %v1664
        %v1666 = vpop.f32.mrb[0].mxu0
        %1667 = vmatprep.mubr.f32.mxu0 %v1397
        %1668 = vmatmul.mubr.f32.gmra.mrb[0].mxu0 %v1396
        %v1669 = vpop.f32.mrb[0].mxu0
        %v1670 = vadd.f32 0.0, %v1669
        %v1671 = vpop.f32.mrb[0].mxu0
        %1672 = vmatprep.mubr.f32.mxu0 %v1401
        %1673 = vmatmul.mubr.f32.gmra.mrb[0].mxu0 %v1400
        %v1674 = vpop.f32.mrb[0].mxu0
        %v1675 = vadd.f32 0.0, %v1674
        %v1676 = vpop.f32.mrb[0].mxu0
        %1677 = vmatprep.mubr.f32.mxu0 %v1405
        %1678 = vmatmul.mubr.f32.gmra.mrb[0].mxu0 %v1404
        %v1679 = vpop.f32.mrb[0].mxu0
        %v1680 = vadd.f32 0.0, %v1679
        %v1681 = vpop.f32.mrb[0].mxu0
        %1682 = vmatprep.mubr.f32.mxu0 %v1409
        %1683 = vmatmul.mubr.f32.gmra.mrb[0].mxu0 %v1408
        %v1684 = vpop.f32.mrb[0].mxu0
        %v1685 = vadd.f32 0.0, %v1684
        %v1686 = vpop.f32.mrb[0].mxu0
        %1687 = vmatprep.mubr.f32.mxu0 %v1413
        %1688 = vmatmul.mubr.f32.gmra.mrb[0].mxu0 %v1412
        %v1689 = vpop.f32.mrb[0].mxu0
        %v1690 = vadd.f32 0.0, %v1689
        %v1691 = vpop.f32.mrb[0].mxu0
        %1692 = vmatprep.mubr.f32.mxu0 %v1417
        %1693 = vmatmul.mubr.f32.gmra.mrb[0].mxu0 %v1416
        %v1694 = vpop.f32.mrb[0].mxu0
        %v1695 = vadd.f32 0.0, %v1694
        %v1696 = vpop.f32.mrb[0].mxu0
        %1697 = vmatprep.mubr.f32.mxu0 %v1421
        %1698 = vmatmul.mubr.f32.gmra.mrb[0].mxu0 %v1420
        %v1699 = vpop.f32.mrb[0].mxu0
        %v1700 = vadd.f32 0.0, %v1699
        %v1701 = vpop.f32.mrb[0].mxu0
        %1702 = vmatprep.mubr.f32.mxu0 %v1425
        %1703 = vmatmul.mubr.f32.gmra.mrb[0].mxu0 %v1424
        %v1704 = vpop.f32.mrb[0].mxu0
        %v1705 = vadd.f32 0.0, %v1704
        %v1706 = vpop.f32.mrb[0].mxu0
        %1707 = vmatprep.mubr.f32.mxu0 %v1429
        %1708 = vmatmul.mubr.f32.gmra.mrb[0].mxu0 %v1428
        %v1709 = vpop.f32.mrb[0].mxu0
        %v1710 = vadd.f32 0.0, %v1709
        %v1711 = vpop.f32.mrb[0].mxu0
        %1712 = vmatprep.mubr.f32.mxu0 %v1433
        %1713 = vmatmul.mubr.f32.gmra.mrb[0].mxu0 %v1432
        %v1714 = vpop.f32.mrb[0].mxu0
        %v1715 = vadd.f32 0.0, %v1714
        %v1716 = vpop.f32.mrb[0].mxu0
        %1717 = vmatprep.mubr.f32.mxu0 %v1437
        %1718 = vmatmul.mubr.f32.gmra.mrb[0].mxu0 %v1436
        %v1719 = vpop.f32.mrb[0].mxu0
        %v1720 = vadd.f32 0.0, %v1719
        %v1721 = vpop.f32.mrb[0].mxu0
        %1722 = vmatprep.mubr.f32.mxu0 %v1441
        %1723 = vmatmul.mubr.f32.gmra.mrb[0].mxu0 %v1440
        %v1724 = vpop.f32.mrb[0].mxu0
        %v1725 = vadd.f32 0.0, %v1724
        %v1726 = vpop.f32.mrb[0].mxu0
        %1727 = vmatprep.mubr.f32.mxu0 %v1445
        %1728 = vmatmul.mubr.f32.gmra.mrb[0].mxu0 %v1444
        %v1729 = vpop.f32.mrb[0].mxu0
        %v1730 = vadd.f32 0.0, %v1729
        %v1731 = vpop.f32.mrb[0].mxu0
        %1732 = vmatprep.mubr.f32.mxu0 %v1449
        %1733 = vmatmul.mubr.f32.gmra.mrb[0].mxu0 %v1448
        %v1734 = vpop.f32.mrb[0].mxu0
        %v1735 = vadd.f32 0.0, %v1734
        %v1736 = vpop.f32.mrb[0].mxu0
        %1737 = vmatprep.mubr.f32.mxu0 %v1453
        %1738 = vmatmul.mubr.f32.gmra.mrb[0].mxu0 %v1452
        %v1739 = vpop.f32.mrb[0].mxu0
        %v1740 = vadd.f32 0.0, %v1739
        %v1741 = vpop.f32.mrb[0].mxu0
        %1742 = vmatprep.mubr.f32.mxu0 %v1457
        %1743 = vmatmul.mubr.f32.gmra.mrb[0].mxu0 %v1456
        %v1744 = vpop.f32.mrb[0].mxu0
        %v1745 = vadd.f32 0.0, %v1744
        %v1746 = vpop.f32.mrb[0].mxu0
        %1747 = vmatprep.mubr.f32.mxu0 %v1461
        %1748 = vmatmul.mubr.f32.gmra.mrb[0].mxu0 %v1460
        %v1749 = vpop.f32.mrb[0].mxu0
        %v1750 = vadd.f32 0.0, %v1749
        %v1751 = vpop.f32.mrb[0].mxu0
        %1752 = vdwg.mxu0
        %1753 = vmatprep.subr.mxu0 0.0
        %1754 = vmatpush1.msra.mxu0 %v1496
        %1755 = vmatprep.subr.mxu0 0.0
        %1756 = vmatpush1.msra.mxu0 %v1497
        %1757 = vmatprep.subr.mxu0 0.0
        %1758 = vmatpush1.msra.mxu0 %v1498
        %1759 = vmatprep.subr.mxu0 0.0
        %1760 = vmatpush1.msra.mxu0 %v1499
        %1761 = vmatprep.subr.mxu0 0.0
        %1762 = vmatpush1.msra.mxu0 %v1500
        %1763 = vmatprep.subr.mxu0 0.0
        %1764 = vmatpush1.msra.mxu0 %v1501
        %1765 = vmatprep.subr.mxu0 0.0
        %1766 = vmatpush1.msra.mxu0 %v1502
        %1767 = vmatprep.subr.mxu0 0.0
        %1768 = vmatpush1.msra.mxu0 %v1503
        %1769 = vmatprep.subr.mxu0 0.0
        %1770 = vmatpush1.msra.mxu0 %v1504
        %1771 = vmatprep.subr.mxu0 0.0
        %1772 = vmatpush1.msra.mxu0 %v1505
        %1773 = vmatprep.subr.mxu0 0.0
        %1774 = vmatpush1.msra.mxu0 %v1506
        %1775 = vmatprep.subr.mxu0 0.0
        %1776 = vmatpush1.msra.mxu0 %v1507
        %1777 = vmatprep.subr.mxu0 0.0
        %1778 = vmatpush1.msra.mxu0 %v1508
        %1779 = vmatprep.subr.mxu0 0.0
        %1780 = vmatpush1.msra.mxu0 %v1509
        %1781 = vmatprep.subr.mxu0 0.0
        %1782 = vmatpush1.msra.mxu0 %v1510
        %1783 = vmatprep.subr.mxu0 0.0
        %1784 = vmatpush1.msra.mxu0 %v1511
        %1785 = vmatprep.subr.mxu0 0.0
        %1786 = vmatpush1.msra.mxu0 %v1512
        %1787 = vmatprep.subr.mxu0 0.0
        %1788 = vmatpush1.msra.mxu0 %v1513
        %1789 = vmatprep.subr.mxu0 0.0
        %1790 = vmatpush1.msra.mxu0 %v1514
        %1791 = vmatprep.subr.mxu0 0.0
        %1792 = vmatpush1.msra.mxu0 %v1515
        %1793 = vmatprep.subr.mxu0 0.0
        %1794 = vmatpush1.msra.mxu0 %v1516
        %1795 = vmatprep.subr.mxu0 0.0
        %1796 = vmatpush1.msra.mxu0 %v1517
        %1797 = vmatprep.subr.mxu0 0.0
        %1798 = vmatpush1.msra.mxu0 %v1518
        %1799 = vmatprep.subr.mxu0 0.0
        %1800 = vmatpush1.msra.mxu0 %v1519
        %1801 = vmatprep.subr.mxu0 0.0
        %1802 = vmatpush1.msra.mxu0 %v1520
        %1803 = vmatprep.subr.mxu0 0.0
        %1804 = vmatpush1.msra.mxu0 %v1521
        %1805 = vmatprep.subr.mxu0 0.0
        %1806 = vmatpush1.msra.mxu0 %v1522
        %1807 = vmatprep.subr.mxu0 0.0
        %1808 = vmatpush1.msra.mxu0 %v1523
        %1809 = vmatprep.subr.mxu0 0.0
        %1810 = vmatpush1.msra.mxu0 %v1524
        %1811 = vmatprep.subr.mxu0 0.0
        %1812 = vmatpush1.msra.mxu0 %v1525
        %1813 = vmatprep.subr.mxu0 0.0
        %1814 = vmatpush1.msra.mxu0 %v1526
        %1815 = vmatprep.subr.mxu0 0.0
        %1816 = vmatpush1.msra.mxu0 %v1527
        %1817 = vmatprep.mubr.f32.mxu0 %v1339
        %1818 = vmatmul.mubr.f32.gmra.mrb[0].mxu0 %v1338
        %v1819 = vpop.f32.mrb[0].mxu0
        %v1820 = vadd.f32 %v1595, %v1819
        %v1821 = vpop.f32.mrb[0].mxu0
        %1822 = vmatprep.mubr.f32.mxu0 %v1343
        %1823 = vmatmul.mubr.f32.gmra.mrb[0].mxu0 %v1342
        %v1824 = vpop.f32.mrb[0].mxu0
        %v1825 = vadd.f32 %v1600, %v1824
        %v1826 = vpop.f32.mrb[0].mxu0
        %1827 = vmatprep.mubr.f32.mxu0 %v1347
        %1828 = vmatmul.mubr.f32.gmra.mrb[0].mxu0 %v1346
        %v1829 = vpop.f32.mrb[0].mxu0
        %v1830 = vadd.f32 %v1605, %v1829
        %v1831 = vpop.f32.mrb[0].mxu0
        %1832 = vmatprep.mubr.f32.mxu0 %v1351
        %1833 = vmatmul.mubr.f32.gmra.mrb[0].mxu0 %v1350
        %v1834 = vpop.f32.mrb[0].mxu0
        %v1835 = vadd.f32 %v1610, %v1834
        %v1836 = vpop.f32.mrb[0].mxu0
        %1837 = vmatprep.mubr.f32.mxu0 %v1355
        %1838 = vmatmul.mubr.f32.gmra.mrb[0].mxu0 %v1354
        %v1839 = vpop.f32.mrb[0].mxu0
        %v1840 = vadd.f32 %v1615, %v1839
        %v1841 = vpop.f32.mrb[0].mxu0
        %1842 = vmatprep.mubr.f32.mxu0 %v1359
        %1843 = vmatmul.mubr.f32.gmra.mrb[0].mxu0 %v1358
        %v1844 = vpop.f32.mrb[0].mxu0
        %v1845 = vadd.f32 %v1620, %v1844
        %v1846 = vpop.f32.mrb[0].mxu0
        %1847 = vmatprep.mubr.f32.mxu0 %v1363
        %1848 = vmatmul.mubr.f32.gmra.mrb[0].mxu0 %v1362
        %v1849 = vpop.f32.mrb[0].mxu0
        %v1850 = vadd.f32 %v1625, %v1849
        %v1851 = vpop.f32.mrb[0].mxu0
        %1852 = vmatprep.mubr.f32.mxu0 %v1367
        %1853 = vmatmul.mubr.f32.gmra.mrb[0].mxu0 %v1366
        %v1854 = vpop.f32.mrb[0].mxu0
        %v1855 = vadd.f32 %v1630, %v1854
        %v1856 = vpop.f32.mrb[0].mxu0
        %1857 = vmatprep.mubr.f32.mxu0 %v1371
        %1858 = vmatmul.mubr.f32.gmra.mrb[0].mxu0 %v1370
        %v1859 = vpop.f32.mrb[0].mxu0
        %v1860 = vadd.f32 %v1635, %v1859
        %v1861 = vpop.f32.mrb[0].mxu0
        %1862 = vmatprep.mubr.f32.mxu0 %v1375
        %1863 = vmatmul.mubr.f32.gmra.mrb[0].mxu0 %v1374
        %v1864 = vpop.f32.mrb[0].mxu0
        %v1865 = vadd.f32 %v1640, %v1864
        %v1866 = vpop.f32.mrb[0].mxu0
        %1867 = vmatprep.mubr.f32.mxu0 %v1379
        %1868 = vmatmul.mubr.f32.gmra.mrb[0].mxu0 %v1378
        %v1869 = vpop.f32.mrb[0].mxu0
        %v1870 = vadd.f32 %v1645, %v1869
        %v1871 = vpop.f32.mrb[0].mxu0
        %1872 = vmatprep.mubr.f32.mxu0 %v1383
        %1873 = vmatmul.mubr.f32.gmra.mrb[0].mxu0 %v1382
        %v1874 = vpop.f32.mrb[0].mxu0
        %v1875 = vadd.f32 %v1650, %v1874
        %v1876 = vpop.f32.mrb[0].mxu0
        %1877 = vmatprep.mubr.f32.mxu0 %v1387
        %1878 = vmatmul.mubr.f32.gmra.mrb[0].mxu0 %v1386
        %v1879 = vpop.f32.mrb[0].mxu0
        %v1880 = vadd.f32 %v1655, %v1879
        %v1881 = vpop.f32.mrb[0].mxu0
        %1882 = vmatprep.mubr.f32.mxu0 %v1391
        %1883 = vmatmul.mubr.f32.gmra.mrb[0].mxu0 %v1390
        %v1884 = vpop.f32.mrb[0].mxu0
        %v1885 = vadd.f32 %v1660, %v1884
        %v1886 = vpop.f32.mrb[0].mxu0
        %1887 = vmatprep.mubr.f32.mxu0 %v1395
        %1888 = vmatmul.mubr.f32.gmra.mrb[0].mxu0 %v1394
        %v1889 = vpop.f32.mrb[0].mxu0
        %v1890 = vadd.f32 %v1665, %v1889
        %v1891 = vpop.f32.mrb[0].mxu0
        %1892 = vmatprep.mubr.f32.mxu0 %v1399
        %1893 = vmatmul.mubr.f32.gmra.mrb[0].mxu0 %v1398
        %v1894 = vpop.f32.mrb[0].mxu0
        %v1895 = vadd.f32 %v1670, %v1894
        %v1896 = vpop.f32.mrb[0].mxu0
        %1897 = vmatprep.mubr.f32.mxu0 %v1403
        %1898 = vmatmul.mubr.f32.gmra.mrb[0].mxu0 %v1402
        %v1899 = vpop.f32.mrb[0].mxu0
        %v1900 = vadd.f32 %v1675, %v1899
        %v1901 = vpop.f32.mrb[0].mxu0
        %1902 = vmatprep.mubr.f32.mxu0 %v1407
        %1903 = vmatmul.mubr.f32.gmra.mrb[0].mxu0 %v1406
        %v1904 = vpop.f32.mrb[0].mxu0
        %v1905 = vadd.f32 %v1680, %v1904
        %v1906 = vpop.f32.mrb[0].mxu0
        %1907 = vmatprep.mubr.f32.mxu0 %v1411
        %1908 = vmatmul.mubr.f32.gmra.mrb[0].mxu0 %v1410
        %v1909 = vpop.f32.mrb[0].mxu0
        %v1910 = vadd.f32 %v1685, %v1909
        %v1911 = vpop.f32.mrb[0].mxu0
        %1912 = vmatprep.mubr.f32.mxu0 %v1415
        %1913 = vmatmul.mubr.f32.gmra.mrb[0].mxu0 %v1414
        %v1914 = vpop.f32.mrb[0].mxu0
        %v1915 = vadd.f32 %v1690, %v1914
        %v1916 = vpop.f32.mrb[0].mxu0
        %1917 = vmatprep.mubr.f32.mxu0 %v1419
        %1918 = vmatmul.mubr.f32.gmra.mrb[0].mxu0 %v1418
        %v1919 = vpop.f32.mrb[0].mxu0
        %v1920 = vadd.f32 %v1695, %v1919
        %v1921 = vpop.f32.mrb[0].mxu0
        %1922 = vmatprep.mubr.f32.mxu0 %v1423
        %1923 = vmatmul.mubr.f32.gmra.mrb[0].mxu0 %v1422
        %v1924 = vpop.f32.mrb[0].mxu0
        %v1925 = vadd.f32 %v1700, %v1924
        %v1926 = vpop.f32.mrb[0].mxu0
        %1927 = vmatprep.mubr.f32.mxu0 %v1427
        %1928 = vmatmul.mubr.f32.gmra.mrb[0].mxu0 %v1426
        %v1929 = vpop.f32.mrb[0].mxu0
        %v1930 = vadd.f32 %v1705, %v1929
        %v1931 = vpop.f32.mrb[0].mxu0
        %1932 = vmatprep.mubr.f32.mxu0 %v1431
        %1933 = vmatmul.mubr.f32.gmra.mrb[0].mxu0 %v1430
        %v1934 = vpop.f32.mrb[0].mxu0
        %v1935 = vadd.f32 %v1710, %v1934
        %v1936 = vpop.f32.mrb[0].mxu0
        %1937 = vmatprep.mubr.f32.mxu0 %v1435
        %1938 = vmatmul.mubr.f32.gmra.mrb[0].mxu0 %v1434
        %v1939 = vpop.f32.mrb[0].mxu0
        %v1940 = vadd.f32 %v1715, %v1939
        %v1941 = vpop.f32.mrb[0].mxu0
        %1942 = vmatprep.mubr.f32.mxu0 %v1439
        %1943 = vmatmul.mubr.f32.gmra.mrb[0].mxu0 %v1438
        %v1944 = vpop.f32.mrb[0].mxu0
        %v1945 = vadd.f32 %v1720, %v1944
        %v1946 = vpop.f32.mrb[0].mxu0
        %1947 = vmatprep.mubr.f32.mxu0 %v1443
        %1948 = vmatmul.mubr.f32.gmra.mrb[0].mxu0 %v1442
        %v1949 = vpop.f32.mrb[0].mxu0
        %v1950 = vadd.f32 %v1725, %v1949
        %v1951 = vpop.f32.mrb[0].mxu0
        %1952 = vmatprep.mubr.f32.mxu0 %v1447
        %1953 = vmatmul.mubr.f32.gmra.mrb[0].mxu0 %v1446
        %v1954 = vpop.f32.mrb[0].mxu0
        %v1955 = vadd.f32 %v1730, %v1954
        %v1956 = vpop.f32.mrb[0].mxu0
        %1957 = vmatprep.mubr.f32.mxu0 %v1451
        %1958 = vmatmul.mubr.f32.gmra.mrb[0].mxu0 %v1450
        %v1959 = vpop.f32.mrb[0].mxu0
        %v1960 = vadd.f32 %v1735, %v1959
        %v1961 = vpop.f32.mrb[0].mxu0
        %1962 = vmatprep.mubr.f32.mxu0 %v1455
        %1963 = vmatmul.mubr.f32.gmra.mrb[0].mxu0 %v1454
        %v1964 = vpop.f32.mrb[0].mxu0
        %v1965 = vadd.f32 %v1740, %v1964
        %v1966 = vpop.f32.mrb[0].mxu0
        %1967 = vmatprep.mubr.f32.mxu0 %v1459
        %1968 = vmatmul.mubr.f32.gmra.mrb[0].mxu0 %v1458
        %v1969 = vpop.f32.mrb[0].mxu0
        %v1970 = vadd.f32 %v1745, %v1969
        %v1971 = vpop.f32.mrb[0].mxu0
        %1972 = vmatprep.mubr.f32.mxu0 %v1463
        %1973 = vmatmul.mubr.f32.gmra.mrb[0].mxu0 %v1462
        %v1974 = vpop.f32.mrb[0].mxu0
        %v1975 = vadd.f32 %v1750, %v1974
        %v1976 = vpop.f32.mrb[0].mxu0
        %1977 = vdwg.mxu0
        %1978 = vst [vmem:[%s223] sm:$0xff] %v1820
        %1979 = vst [vmem:[%s223 + $0x8] sm:$0xff] %v1825
        %1980 = vst [vmem:[%s223 + $0x10] sm:$0xff] %v1830
        %1981 = vst [vmem:[%s223 + $0x18] sm:$0xff] %v1835
        %1982 = vst [vmem:[%s223 + $0x20] sm:$0xff] %v1840
        %1983 = vst [vmem:[%s223 + $0x28] sm:$0xff] %v1845
        %1984 = vst [vmem:[%s223 + $0x30] sm:$0xff] %v1850
        %1985 = vst [vmem:[%s223 + $0x38] sm:$0xff] %v1855
        %1986 = vst [vmem:[%s223 + $0x40] sm:$0xff] %v1860
        %1987 = vst [vmem:[%s223 + $0x48] sm:$0xff] %v1865
        %1988 = vst [vmem:[%s223 + $0x50] sm:$0xff] %v1870
        %1989 = vst [vmem:[%s223 + $0x58] sm:$0xff] %v1875
        %1990 = vst [vmem:[%s223 + $0x60] sm:$0xff] %v1880
        %1991 = vst [vmem:[%s223 + $0x68] sm:$0xff] %v1885
        %1992 = vst [vmem:[%s223 + $0x70] sm:$0xff] %v1890
        %1993 = vst [vmem:[%s223 + $0x78] sm:$0xff] %v1895
        %1994 = vst [vmem:[%s223 + $0x80] sm:$0xff] %v1900
        %1995 = vst [vmem:[%s223 + $0x88] sm:$0xff] %v1905
        %1996 = vst [vmem:[%s223 + $0x90] sm:$0xff] %v1910
        %1997 = vst [vmem:[%s223 + $0x98] sm:$0xff] %v1915
        %1998 = vst [vmem:[%s223 + $0xa0] sm:$0xff] %v1920
        %1999 = vst [vmem:[%s223 + $0xa8] sm:$0xff] %v1925
        %2000 = vst [vmem:[%s223 + $0xb0] sm:$0xff] %v1930
        %2001 = vst [vmem:[%s223 + $0xb8] sm:$0xff] %v1935
        %2002 = vst [vmem:[%s223 + $0xc0] sm:$0xff] %v1940
        %2003 = vst [vmem:[%s223 + $0xc8] sm:$0xff] %v1945
        %2004 = vst [vmem:[%s223 + $0xd0] sm:$0xff] %v1950
        %2005 = vst [vmem:[%s223 + $0xd8] sm:$0xff] %v1955
        %2006 = vst [vmem:[%s223 + $0xe0] sm:$0xff] %v1960
        %2007 = vst [vmem:[%s223 + $0xe8] sm:$0xff] %v1965
        %2008 = vst [vmem:[%s223 + $0xf0] sm:$0xff] %v1970
        %2009 = vst [vmem:[%s223 + $0xf8] sm:$0xff] %v1975
        %s2010 = sand.u32 %s125, 1
        %s2011 = scalar_lea.sflag [#allocation3], %s2010
        %s2012 = sand.u32 %s125, 1
        %s2013 = smul.addr %s2012, 256
        %s2014 = scalar_lea.vmem [#allocation2], %s2013
        // Predicated region
        $region37: #{tpu_custom_call.1} parent=35 // pred_check
          %p2015 = pneg %p135
        $region38: #{tpu_custom_call.1} parent=35 // pred_check_branch
          %2017 = sbr.rel (%p2015) target = $region40
        $region39: #{tpu_custom_call.1} parent=35 // pred_region
          %s2018 = smul.u32 32, %s18
          %s2020 = ssub.s32 4096, 4096
          %2021 = vsyncadd %s2011, %s2020
          %s2022 = smul.addr %s2018, 128
          %s2023 = scalar_lea.hbm %s4, %s2022
          %s2024 = sshll.u32 %s2014, 4
          %s2025 = int_to_ptr.vmem [resolvable:$true] %s2024
          %2030 = dma.vmem_to_hbm [thread:$0]  %s2025, 4096, %s2023, %s2011, 128, 128, 8
        $region40: #{tpu_custom_call.1} parent=35 // pred_fallthru
          _
      $region36: #{tpu_custom_call.1} parent=5 // pred_fallthru
        _
      %p2031 = scmp.le.s32.totalorder 2, %s13
      // Predicated region
      $region41: #{tpu_custom_call.1} parent=5 // pred_check
        %p2032 = pneg %p2031
      $region42: #{tpu_custom_call.1} parent=5 // pred_check_branch
        %2034 = sbr.rel (%p2032) target = $region44
      $region43: #{tpu_custom_call.1} parent=5 // pred_region
        %s2035 = ssub.s32 %s13, 2
        // Predicated region
        $region45: #{tpu_custom_call.1} parent=43 // pred_check
          %p2036 = pneg %p141
        $region46: #{tpu_custom_call.1} parent=43 // pred_check_branch
          %2038 = sbr.rel (%p2036) target = $region48
        $region47: #{tpu_custom_call.1} parent=43 // pred_region
          %s2039 = sand.u32 %s126, 1
          %s2040 = scalar_lea.sflag [#allocation3], %s2039
          %s2041 = sand.u32 %s126, 1
          %s2042 = smul.addr %s2041, 256
          %s2043 = scalar_lea.vmem [#allocation2], %s2042
          %2044 = dma.done %s2040, 4096
        $region48: #{tpu_custom_call.1} parent=43 // pred_fallthru
          _
      $region44: #{tpu_custom_call.1} parent=5 // pred_fallthru
        _
    $region6: #{tpu_custom_call.1} parent=1 // loop_footer
      %s17 = sadd.s32 1, %s13
    $region7: #{tpu_custom_call.1} parent=1 // loop_footer_branch
      %12 = sbr.rel target = $region3
    $region8: #{tpu_custom_call.1} parent=1 // loop_exit
      _
    %2045 = vsyncpa [#allocation3], 1
    %s2046 = scalar_lea.sflag [#allocation3], 1
    %2047 = vsyncpa %s2046, 1

</llo_original>
